<compile_context>
chip_gen: v5e
topology: v5e:2x2
jax: 0.10.0
libtpu: 0.0.40
codegen_flags: <defaults>
</compile_context>

<pallas_src>
import math

import numpy as np
import jax
import jax.numpy as jnp
from jax.experimental import pallas as pl
from jax.experimental.pallas import tpu as pltpu

# --- model config (matches the module's __init__ defaults used here) ---
INPUT_DIM = 4      # number of features == number of attention tokens (D)
HIDDEN_DIM = 32    # subnet hidden dim (H)
SUBNET_OUT = 8     # subnet output_dim (O) != ATTN_EMBED -> self.proj is a real Linear
ATTN_EMBED = 16    # attention embed dim (E)
N_HEADS = 1
BATCH = 8
# activation='sin'; Dropout is identity at inference (TODO(synk): train-mode dropout not modeled)

# --- derived packed-slab geometry ---
_D, _H, _O, _E = INPUT_DIM, HIDDEN_DIM, SUBNET_OUT, ATTN_EMBED
_DH, _DO = _D * _H, _D * _O                  # 128, 32
_DDE = _D * _D * _E                          # 256
_WMAT_ROWS = _DH + _DO + 8 * _D              # 192  (w1T/w0T rows | w2T rows | padded sum_eT rows)
_WMAT_COLS = _DDE                            # 256
_QKV_ROWS = 2 * _DDE + 16                    # 528  (q_rep | k_rep | vdot | pad | b_final row)
_QKV_COLS = _DO + 8                          # 40   (cols 0..31 weights, col 32 bias column)
_BFIN_ROW = 2 * _DDE + 8                     # 520  (8-aligned row holding b_final in bias column)


def spinn_attn_kernel(x_ref, wmat_ref, wqkv_ref, out_ref):
    f32 = jnp.float32

    # ---- hoist the (few) ref reads once ----
    x = x_ref[...]            # (D, bt)      batch on lanes
    wmat = wmat_ref[...]      # (192, 256)
    wqkv = wqkv_ref[...]      # (528, 40)

    # ---- static carves out of the two packed slabs (zero runtime cost) ----
    w1T = wmat[0:_DH, 0:_DH]                        # (128, 128) block-diag subnet layer 1
    w0T = wmat[0:_DH, _DH:_DH + _D]                 # (128, 4)   subnet layer 0 (selector)
    b0 = wmat[0:_DH, _DH + _D:_DH + _D + 1]         # (128, 1)
    b1 = wmat[0:_DH, _DH + _D + 1:_DH + _D + 2]     # (128, 1)
    w2T = wmat[_DH:_DH + _DO, 0:_DH]                # (32, 128)  block-diag subnet layer 2
    b2 = wmat[_DH:_DH + _DO, _DH:_DH + 1]           # (32, 1)
    sum_eT = wmat[_DH + _DO:_WMAT_ROWS, 0:_DDE]     # (32, 256)  block-sum (scale folded, 8-row groups)
    wqkvT = wqkv[:, 0:_DO]                          # (528, 32)  fused proj->q/k + v.(out_proj@fc)
    bqkv = wqkv[:, _DO:_DO + 1]                     # (528, 1)

    # ---- all D subnets as 3 lane-dense block-diagonal MXU dots ----
    h0 = jnp.sin(jnp.dot(w0T, x, preferred_element_type=f32) + b0)     # (128, bt)
    h1 = jnp.sin(jnp.dot(w1T, h0, preferred_element_type=f32) + b1)    # (128, bt)
    t2 = jnp.dot(w2T, h1, preferred_element_type=f32) + b2             # (32, bt)

    # ---- ONE fused projection dot: q (replicated), k (replicated), v.(out_proj@fc) ----
    qkv = jnp.dot(wqkvT, t2, preferred_element_type=f32) + bqkv        # (528, bt)
    q_rep = qkv[0:_DDE, :]                                             # (256, bt) row (s*D+t)*E+e = q_s[e]
    k_rep = qkv[_DDE:2 * _DDE, :]                                      # (256, bt) row (s*D+t)*E+e = k_t[e]
    vdot = qkv[2 * _DDE:2 * _DDE + _D, :]                              # (4, bt)   v_t . (W_out @ W_fc)
    fbias = qkv[_BFIN_ROW:_BFIN_ROW + 1, :]                            # (1, bt)   fused final bias (weights zero)

    # ---- attention logits: elementwise product + block-sum MXU dot (softmax scale folded in) ----
    logits = jnp.dot(sum_eT, q_rep * k_rep, preferred_element_type=f32)  # (32, bt); query s at rows 8s..8s+3

    # ---- per-query-group softmax (robust per-group max, exact division), fused with
    #      attention-weighted value + mean-pool contraction ----
    acc = jnp.zeros_like(fbias)                                        # (1, bt)
    for s in range(_D):                                                # unrolled, D=4
        g = logits[8 * s:8 * s + _D, :]                                # (4, bt) keys for query s
        m = jnp.max(g, axis=0, keepdims=True)                          # (1, bt)
        e = jnp.exp(g - m)                                             # (4, bt)
        den = jnp.sum(e, axis=0, keepdims=True)                        # (1, bt)
        num = jnp.sum(e * vdot, axis=0, keepdims=True)                 # (1, bt)
        acc = acc + num / den                                          # sum_t softmax_s[t] * vdot[t]
    pre = acc * (1.0 / _D) + fbias                                     # mean-pool + fused out_proj/fc bias
    out_ref[...] = jnp.where(pre >= 0.0, pre, 0.01 * pre)              # LeakyReLU(0.01), lane-dense store


def _round_up(n, m):
    return ((n + m - 1) // m) * m


def spinn_attn_forward(x, packed, *, block_b=512):
    """x: (B, INPUT_DIM) float32 -> (B, 1) float32."""
    B = x.shape[0]
    bt = min(_round_up(block_b, 128), _round_up(max(B, 1), 128))   # lane-dense batch tile
    b_pad = _round_up(B, bt)
    xT = jnp.transpose(x.astype(jnp.float32))                      # (D, B) batch on lanes
    if b_pad != B:
        xT = jnp.pad(xT, ((0, 0), (0, b_pad - B)))
    wmat, wqkv = packed["wmat"], packed["wqkv"]

    out = pl.pallas_call(
        spinn_attn_kernel,
        out_shape=jax.ShapeDtypeStruct((1, b_pad), jnp.float32),
        grid=(b_pad // bt,),
        in_specs=[
            pl.BlockSpec((INPUT_DIM, bt), lambda i: (0, i)),
            pl.BlockSpec(wmat.shape, lambda i: (0, 0)),     # weights resident across grid steps
            pl.BlockSpec(wqkv.shape, lambda i: (0, 0)),
        ],
        out_specs=pl.BlockSpec((1, bt), lambda i: (0, i)),
        compiler_params=pltpu.CompilerParams(
            dimension_semantics=("parallel",)),             # engages both TCs on v7x
    )(xT, wmat, wqkv)
    return out[0, :B][:, None]


def init_raw_params(key):
    """Deterministic xavier-normal weights, zero biases (matches Subnet._init_weights style).
    Weights in (in_features, out_features) layout; per-feature subnet params stacked on a
    leading D axis."""
    D, H, O, E = INPUT_DIM, HIDDEN_DIM, SUBNET_OUT, ATTN_EMBED

    def xavier(k, fan_in, fan_out, shape):
        std = math.sqrt(2.0 / (fan_in + fan_out))
        return (std * jax.random.normal(k, shape)).astype(jnp.float32)

    ks = jax.random.split(key, 10)
    return {
        "w0": xavier(ks[0], 1, H, (D, H)),
        "b0": jnp.zeros((D, H), jnp.float32),
        "w1": xavier(ks[1], H, H, (D, H, H)),
        "b1": jnp.zeros((D, H), jnp.float32),
        "w2": xavier(ks[2], H, O, (D, H, O)),
        "b2": jnp.zeros((D, O), jnp.float32),
        "proj_w": xavier(ks[3], O, E, (O, E)),
        "proj_b": jnp.zeros((1, E), jnp.float32),
        "wq": xavier(ks[4], E, E, (E, E)),
        "bq": jnp.zeros((1, E), jnp.float32),
        "wk": xavier(ks[5], E, E, (E, E)),
        "bk": jnp.zeros((1, E), jnp.float32),
        "wv": xavier(ks[6], E, E, (E, E)),
        "bv": jnp.zeros((1, E), jnp.float32),
        "out_w": xavier(ks[7], E, E, (E, E)),
        "out_b": jnp.zeros((1, E), jnp.float32),
        "fc_w": xavier(ks[8], E, 1, (E, 1)),
        "fc_b": jnp.zeros((1, 1), jnp.float32),
    }


def pack_params(raw):
    """Host-side packing into TWO slabs (transposed, batch-on-lanes layout):
      wmat (192,256): block-diag subnet layers (transposed), their biases as extra columns,
                      and the scale-folded block-sum matrix for the attention logits.
      wqkv (528,40):  proj fused into q/k replicated layouts, v pre-contracted with the fused
                      out_proj@final_fc vector, bias column at col 32, fused final bias row."""
    D, H, O, E = INPUT_DIM, HIDDEN_DIM, SUBNET_OUT, ATTN_EMBED
    r = {k: np.asarray(v, dtype=np.float32) for k, v in raw.items()}

    # --- fuse proj Linear(O,E) into q/k/v (exact linear composition) ---
    wq_eff = r["proj_w"] @ r["wq"]; bq_eff = (r["proj_b"] @ r["wq"] + r["bq"])[0]
    wk_eff = r["proj_w"] @ r["wk"]; bk_eff = (r["proj_b"] @ r["wk"] + r["bk"])[0]
    wv_eff = r["proj_w"] @ r["wv"]; bv_eff = (r["proj_b"] @ r["wv"] + r["bv"])[0]

    # --- fuse attention out_proj and final_fc (both linear), pre-contract v with it ---
    w_final = r["out_w"] @ r["fc_w"]                              # (E, 1)
    b_final = float((r["out_b"] @ r["fc_w"] + r["fc_b"])[0, 0])
    wvd = (wv_eff @ w_final)[:, 0]                                # (O,)
    bvd = float(bv_eff @ w_final[:, 0])

    # --- slab 1: subnet block-diagonals (transposed) + biases + block-sum matrix ---
    wmat = np.zeros((_WMAT_ROWS, _WMAT_COLS), np.float32)
    for i in range(D):
        wmat[i * H:(i + 1) * H, i * H:(i + 1) * H] = r["w1"][i].T
        wmat[i * H:(i + 1) * H, _DH + i] = r["w0"][i]
        wmat[_DH + i * O:_DH + (i + 1) * O, i * H:(i + 1) * H] = r["w2"][i].T
    wmat[0:_DH, _DH + D] = r["b0"].reshape(-1)
    wmat[0:_DH, _DH + D + 1] = r["b1"].reshape(-1)
    wmat[_DH:_DH + _DO, _DH] = r["b2"].reshape(-1)
    scale = 1.0 / math.sqrt(E // N_HEADS)
    base = _DH + _DO
    for s in range(D):
        for t in range(D):
            c = (s * D + t) * E
            wmat[base + 8 * s + t, c:c + E] = scale   # query s in an 8-aligned row group

    # --- slab 2: fused q/k (replicated) + v.(out_proj@fc) weights, bias column, final bias ---
    wqkv = np.zeros((_QKV_ROWS, _QKV_COLS), np.float32)
    for s in range(D):
        for t in range(D):
            rr = (s * D + t) * E
            wqkv[rr:rr + E, s * O:(s + 1) * O] = wq_eff.T
            wqkv[rr:rr + E, _DO] = bq_eff
            wqkv[_DDE + rr:_DDE + rr + E, t * O:(t + 1) * O] = wk_eff.T
            wqkv[_DDE + rr:_DDE + rr + E, _DO] = bk_eff
    for t in range(D):
        wqkv[2 * _DDE + t, t * O:(t + 1) * O] = wvd
        wqkv[2 * _DDE + t, _DO] = bvd
    wqkv[_BFIN_ROW, _DO] = b_final        # weight row is zero -> kernel reads b_final broadcast

    return {"wmat": jnp.asarray(wmat), "wqkv": jnp.asarray(wqkv)}


def reference_forward(x, raw):
    """Pure-JAX reference with the original (unfused) structure, for a correctness check."""
    D, E = INPUT_DIM, ATTN_EMBED
    tokens = []
    for i in range(D):
        xi = x[:, i:i + 1]
        h = jnp.sin(xi @ raw["w0"][i:i + 1, :] + raw["b0"][i:i + 1, :])
        h = jnp.sin(h @ raw["w1"][i] + raw["b1"][i:i + 1, :])
        t = h @ raw["w2"][i] + raw["b2"][i:i + 1, :]
        t = t @ raw["proj_w"] + raw["proj_b"]
        tokens.append(t)
    tok = jnp.stack(tokens, axis=1)                               # (B, D, E)
    q = tok @ raw["wq"] + raw["bq"]
    k = tok @ raw["wk"] + raw["bk"]
    v = tok @ raw["wv"] + raw["bv"]
    scale = 1.0 / math.sqrt(E // N_HEADS)
    logits = jnp.einsum("bse,bte->bst", q, k) * scale
    w = jax.nn.softmax(logits, axis=-1)
    ctx = jnp.einsum("bst,bte->bse", w, v)
    attn_out = ctx @ raw["out_w"] + raw["out_b"]
    pooled = attn_out.mean(axis=1)
    out = pooled @ raw["fc_w"] + raw["fc_b"]
    return jnp.where(out >= 0, out, 0.01 * out)


if __name__ == "__main__":
    key = jax.random.PRNGKey(0)
    k_param, k_x = jax.random.split(key)
    raw = init_raw_params(k_param)
    packed = pack_params(raw)
    x = jax.random.normal(k_x, (BATCH, INPUT_DIM), dtype=jnp.float32)

    out = jax.block_until_ready(spinn_attn_forward(x, packed))
    assert out.shape == (BATCH, 1) and out.dtype == jnp.float32
    assert bool(jnp.all(jnp.isfinite(out)))

    # sanity-check all algebraic fusions / slab packing against the unfused reference
    ref = jax.block_until_ready(reference_forward(x, raw))
    max_err = float(jnp.max(jnp.abs(out - ref)))
    assert max_err < 5e-3, f"kernel/reference mismatch: {max_err}"

    print("KERNEL_OK")
</pallas_src>

<mosaic_0001>
module attributes {stable_mosaic.version = 11 : i64} {
  func.func @spinn_attn_kernel(%arg0: i32, %arg1: memref<4x128xf32, #tpu.memory_space<vmem>>, %arg2: memref<192x256xf32, #tpu.memory_space<vmem>>, %arg3: memref<528x40xf32, #tpu.memory_space<vmem>>, %arg4: memref<1x128xf32, #tpu.memory_space<vmem>>) attributes {dimension_semantics = [#tpu.dimension_semantics<parallel>], iteration_bounds = array<i64: 1>, scalar_prefetch = 0 : i64, scratch_operands = 0 : i64, tpu.core_type = #tpu.core_type<tc>, window_params = [{transform_indices = @transform_0, window_bounds = array<i64: 4, 128>}, {pipeline_mode = #tpu.pipeline_mode<synchronous>, transform_indices = @transform_1, window_bounds = array<i64: 192, 256>}, {pipeline_mode = #tpu.pipeline_mode<synchronous>, transform_indices = @transform_2, window_bounds = array<i64: 528, 40>}, {transform_indices = @transform_3, window_bounds = array<i64: 1, 128>}]} {
    %c0 = arith.constant 0 : index
    %c0_0 = arith.constant 0 : index
    %0 = vector.load %arg1[%c0, %c0_0] : memref<4x128xf32, #tpu.memory_space<vmem>>, vector<4x128xf32>
    %c0_1 = arith.constant 0 : index
    %c0_2 = arith.constant 0 : index
    %1 = vector.load %arg2[%c0_1, %c0_2] : memref<192x256xf32, #tpu.memory_space<vmem>>, vector<192x256xf32>
    %c0_3 = arith.constant 0 : index
    %c0_4 = arith.constant 0 : index
    %2 = vector.load %arg3[%c0_3, %c0_4] : memref<528x40xf32, #tpu.memory_space<vmem>>, vector<528x40xf32>
    %3 = vector.extract_strided_slice %1 {offsets = [0, 0], sizes = [128, 128], strides = [1, 1]} : vector<192x256xf32> to vector<128x128xf32>
    %4 = vector.extract_strided_slice %1 {offsets = [0, 128], sizes = [128, 4], strides = [1, 1]} : vector<192x256xf32> to vector<128x4xf32>
    %5 = vector.extract_strided_slice %1 {offsets = [0, 132], sizes = [128, 1], strides = [1, 1]} : vector<192x256xf32> to vector<128x1xf32>
    %6 = vector.extract_strided_slice %1 {offsets = [0, 133], sizes = [128, 1], strides = [1, 1]} : vector<192x256xf32> to vector<128x1xf32>
    %7 = vector.extract_strided_slice %1 {offsets = [128, 0], sizes = [32, 128], strides = [1, 1]} : vector<192x256xf32> to vector<32x128xf32>
    %8 = vector.extract_strided_slice %1 {offsets = [128, 128], sizes = [32, 1], strides = [1, 1]} : vector<192x256xf32> to vector<32x1xf32>
    %9 = vector.extract_strided_slice %1 {offsets = [160, 0], sizes = [32, 256], strides = [1, 1]} : vector<192x256xf32> to vector<32x256xf32>
    %10 = vector.extract_strided_slice %2 {offsets = [0, 0], sizes = [528, 32], strides = [1, 1]} : vector<528x40xf32> to vector<528x32xf32>
    %11 = vector.extract_strided_slice %2 {offsets = [0, 32], sizes = [528, 1], strides = [1, 1]} : vector<528x40xf32> to vector<528x1xf32>
    %cst = arith.constant dense<0.000000e+00> : vector<128x128xf32>
    %12 = tpu.matmul %4, %0, %cst {dimension_numbers = #tpu.dot_dimension_numbers<[1], [0], [0], [1], [0, 0, 1, 1], [], []>} : vector<128x4xf32>, vector<4x128xf32>, vector<128x128xf32> -> vector<128x128xf32>
    %13 = vector.broadcast %5 : vector<128x1xf32> to vector<128x128xf32>
    %14 = arith.addf %12, %13 : vector<128x128xf32>
    %15 = math.sin %14 : vector<128x128xf32>
    %cst_5 = arith.constant dense<0.000000e+00> : vector<128x128xf32>
    %16 = tpu.matmul %3, %15, %cst_5 {dimension_numbers = #tpu.dot_dimension_numbers<[1], [0], [0], [1], [0, 0, 1, 1], [], []>} : vector<128x128xf32>, vector<128x128xf32>, vector<128x128xf32> -> vector<128x128xf32>
    %17 = vector.broadcast %6 : vector<128x1xf32> to vector<128x128xf32>
    %18 = arith.addf %16, %17 : vector<128x128xf32>
    %19 = math.sin %18 : vector<128x128xf32>
    %cst_6 = arith.constant dense<0.000000e+00> : vector<32x128xf32>
    %20 = tpu.matmul %7, %19, %cst_6 {dimension_numbers = #tpu.dot_dimension_numbers<[1], [0], [0], [1], [0, 0, 1, 1], [], []>} : vector<32x128xf32>, vector<128x128xf32>, vector<32x128xf32> -> vector<32x128xf32>
    %21 = vector.broadcast %8 : vector<32x1xf32> to vector<32x128xf32>
    %22 = arith.addf %20, %21 : vector<32x128xf32>
    %cst_7 = arith.constant dense<0.000000e+00> : vector<528x128xf32>
    %23 = tpu.matmul %10, %22, %cst_7 {dimension_numbers = #tpu.dot_dimension_numbers<[1], [0], [0], [1], [0, 0, 1, 1], [], []>} : vector<528x32xf32>, vector<32x128xf32>, vector<528x128xf32> -> vector<528x128xf32>
    %24 = vector.broadcast %11 : vector<528x1xf32> to vector<528x128xf32>
    %25 = arith.addf %23, %24 : vector<528x128xf32>
    %26 = vector.extract_strided_slice %25 {offsets = [0, 0], sizes = [256, 128], strides = [1, 1]} : vector<528x128xf32> to vector<256x128xf32>
    %27 = vector.extract_strided_slice %25 {offsets = [256, 0], sizes = [256, 128], strides = [1, 1]} : vector<528x128xf32> to vector<256x128xf32>
    %28 = vector.extract_strided_slice %25 {offsets = [512, 0], sizes = [4, 128], strides = [1, 1]} : vector<528x128xf32> to vector<4x128xf32>
    %29 = vector.extract_strided_slice %25 {offsets = [520, 0], sizes = [1, 128], strides = [1, 1]} : vector<528x128xf32> to vector<1x128xf32>
    %30 = arith.mulf %26, %27 : vector<256x128xf32>
    %cst_8 = arith.constant dense<0.000000e+00> : vector<32x128xf32>
    %31 = tpu.matmul %9, %30, %cst_8 {dimension_numbers = #tpu.dot_dimension_numbers<[1], [0], [0], [1], [0, 0, 1, 1], [], []>} : vector<32x256xf32>, vector<256x128xf32>, vector<32x128xf32> -> vector<32x128xf32>
    %cst_9 = arith.constant 0.000000e+00 : f32
    %32 = vector.broadcast %cst_9 : f32 to vector<1x128xf32>
    %33 = vector.extract_strided_slice %31 {offsets = [0, 0], sizes = [4, 128], strides = [1, 1]} : vector<32x128xf32> to vector<4x128xf32>
    %cst_10 = arith.constant dense<0xFF800000> : vector<128xf32>
    %34 = vector.multi_reduction <maximumf>, %33, %cst_10 [0] : vector<4x128xf32> to vector<128xf32>
    %35 = vector.shape_cast %34 : vector<128xf32> to vector<1x128xf32>
    %36 = vector.broadcast %35 : vector<1x128xf32> to vector<4x128xf32>
    %37 = arith.subf %33, %36 : vector<4x128xf32>
    %38 = math.exp %37 : vector<4x128xf32>
    %cst_11 = arith.constant dense<0.000000e+00> : vector<128xf32>
    %39 = vector.multi_reduction <add>, %38, %cst_11 [0] : vector<4x128xf32> to vector<128xf32>
    %40 = vector.shape_cast %39 : vector<128xf32> to vector<1x128xf32>
    %41 = arith.mulf %38, %28 : vector<4x128xf32>
    %cst_12 = arith.constant dense<0.000000e+00> : vector<128xf32>
    %42 = vector.multi_reduction <add>, %41, %cst_12 [0] : vector<4x128xf32> to vector<128xf32>
    %43 = vector.shape_cast %42 : vector<128xf32> to vector<1x128xf32>
    %44 = arith.divf %43, %40 : vector<1x128xf32>
    %45 = arith.addf %32, %44 : vector<1x128xf32>
    %46 = vector.extract_strided_slice %31 {offsets = [8, 0], sizes = [4, 128], strides = [1, 1]} : vector<32x128xf32> to vector<4x128xf32>
    %cst_13 = arith.constant dense<0xFF800000> : vector<128xf32>
    %47 = vector.multi_reduction <maximumf>, %46, %cst_13 [0] : vector<4x128xf32> to vector<128xf32>
    %48 = vector.shape_cast %47 : vector<128xf32> to vector<1x128xf32>
    %49 = vector.broadcast %48 : vector<1x128xf32> to vector<4x128xf32>
    %50 = arith.subf %46, %49 : vector<4x128xf32>
    %51 = math.exp %50 : vector<4x128xf32>
    %cst_14 = arith.constant dense<0.000000e+00> : vector<128xf32>
    %52 = vector.multi_reduction <add>, %51, %cst_14 [0] : vector<4x128xf32> to vector<128xf32>
    %53 = vector.shape_cast %52 : vector<128xf32> to vector<1x128xf32>
    %54 = arith.mulf %51, %28 : vector<4x128xf32>
    %cst_15 = arith.constant dense<0.000000e+00> : vector<128xf32>
    %55 = vector.multi_reduction <add>, %54, %cst_15 [0] : vector<4x128xf32> to vector<128xf32>
    %56 = vector.shape_cast %55 : vector<128xf32> to vector<1x128xf32>
    %57 = arith.divf %56, %53 : vector<1x128xf32>
    %58 = arith.addf %45, %57 : vector<1x128xf32>
    %59 = vector.extract_strided_slice %31 {offsets = [16, 0], sizes = [4, 128], strides = [1, 1]} : vector<32x128xf32> to vector<4x128xf32>
    %cst_16 = arith.constant dense<0xFF800000> : vector<128xf32>
    %60 = vector.multi_reduction <maximumf>, %59, %cst_16 [0] : vector<4x128xf32> to vector<128xf32>
    %61 = vector.shape_cast %60 : vector<128xf32> to vector<1x128xf32>
    %62 = vector.broadcast %61 : vector<1x128xf32> to vector<4x128xf32>
    %63 = arith.subf %59, %62 : vector<4x128xf32>
    %64 = math.exp %63 : vector<4x128xf32>
    %cst_17 = arith.constant dense<0.000000e+00> : vector<128xf32>
    %65 = vector.multi_reduction <add>, %64, %cst_17 [0] : vector<4x128xf32> to vector<128xf32>
    %66 = vector.shape_cast %65 : vector<128xf32> to vector<1x128xf32>
    %67 = arith.mulf %64, %28 : vector<4x128xf32>
    %cst_18 = arith.constant dense<0.000000e+00> : vector<128xf32>
    %68 = vector.multi_reduction <add>, %67, %cst_18 [0] : vector<4x128xf32> to vector<128xf32>
    %69 = vector.shape_cast %68 : vector<128xf32> to vector<1x128xf32>
    %70 = arith.divf %69, %66 : vector<1x128xf32>
    %71 = arith.addf %58, %70 : vector<1x128xf32>
    %72 = vector.extract_strided_slice %31 {offsets = [24, 0], sizes = [4, 128], strides = [1, 1]} : vector<32x128xf32> to vector<4x128xf32>
    %cst_19 = arith.constant dense<0xFF800000> : vector<128xf32>
    %73 = vector.multi_reduction <maximumf>, %72, %cst_19 [0] : vector<4x128xf32> to vector<128xf32>
    %74 = vector.shape_cast %73 : vector<128xf32> to vector<1x128xf32>
    %75 = vector.broadcast %74 : vector<1x128xf32> to vector<4x128xf32>
    %76 = arith.subf %72, %75 : vector<4x128xf32>
    %77 = math.exp %76 : vector<4x128xf32>
    %cst_20 = arith.constant dense<0.000000e+00> : vector<128xf32>
    %78 = vector.multi_reduction <add>, %77, %cst_20 [0] : vector<4x128xf32> to vector<128xf32>
    %79 = vector.shape_cast %78 : vector<128xf32> to vector<1x128xf32>
    %80 = arith.mulf %77, %28 : vector<4x128xf32>
    %cst_21 = arith.constant dense<0.000000e+00> : vector<128xf32>
    %81 = vector.multi_reduction <add>, %80, %cst_21 [0] : vector<4x128xf32> to vector<128xf32>
    %82 = vector.shape_cast %81 : vector<128xf32> to vector<1x128xf32>
    %83 = arith.divf %82, %79 : vector<1x128xf32>
    %84 = arith.addf %71, %83 : vector<1x128xf32>
    %cst_22 = arith.constant 2.500000e-01 : f32
    %85 = vector.broadcast %cst_22 : f32 to vector<1x128xf32>
    %86 = arith.mulf %84, %85 : vector<1x128xf32>
    %87 = arith.addf %86, %29 : vector<1x128xf32>
    %cst_23 = arith.constant 0.000000e+00 : f32
    %88 = vector.broadcast %cst_23 : f32 to vector<1x128xf32>
    %89 = arith.cmpf oge, %87, %88 : vector<1x128xf32>
    %cst_24 = arith.constant 0.00999999977 : f32
    %90 = vector.broadcast %cst_24 : f32 to vector<1x128xf32>
    %91 = arith.mulf %90, %87 : vector<1x128xf32>
    %92 = arith.select %89, %87, %91 : vector<1x128xi1>, vector<1x128xf32>
    %c0_25 = arith.constant 0 : index
    %c0_26 = arith.constant 0 : index
    %93 = vector.load %arg4[%c0_25, %c0_26] : memref<1x128xf32, #tpu.memory_space<vmem>>, vector<1x128xf32>
    tpu.vector_store %arg4[%c0_25, %c0_26], %92 {strides = array<i32>} : memref<1x128xf32, #tpu.memory_space<vmem>>, vector<1x128xf32>,
    return
  }
  func.func @transform_0(%arg0: i32) -> (i32, i32) {
    %c0_i32 = arith.constant 0 : i32
    %c0_i32_0 = arith.constant 0 : i32
    return %c0_i32, %arg0 : i32, i32
  }
  func.func @transform_1(%arg0: i32) -> (i32, i32) {
    %c0_i32 = arith.constant 0 : i32
    %c0_i32_0 = arith.constant 0 : i32
    %c0_i32_1 = arith.constant 0 : i32
    return %c0_i32, %c0_i32_0 : i32, i32
  }
  func.func @transform_2(%arg0: i32) -> (i32, i32) {
    %c0_i32 = arith.constant 0 : i32
    %c0_i32_0 = arith.constant 0 : i32
    %c0_i32_1 = arith.constant 0 : i32
    return %c0_i32, %c0_i32_0 : i32, i32
  }
  func.func @transform_3(%arg0: i32) -> (i32, i32) {
    %c0_i32 = arith.constant 0 : i32
    %c0_i32_0 = arith.constant 0 : i32
    return %c0_i32, %arg0 : i32, i32
  }
}

</mosaic_0001>

<llo_original>
// kernel: tpu_custom_call.1
$region0: #{tpu_custom_call.1}
  #allocation0 [shape = 'u32[]', space=smem, size = 0x4, offset = 0x4, fixed_abs, tag = 'smem constant byte address 0x4 - core index']
  #allocation1 [shape = 'u32[72,128]{1,0:T(1,128)}', space=vmem, size = 0x9000, scoped, tag = 'internal scratch']
  %s0 = inlined_call_operand.vmem [shape: f32[4,128], index: 0, kind: input, shape index: {}]
  %s1 = inlined_call_operand.vmem [shape: f32[192,256], index: 1, kind: input, shape index: {}]
  %s2 = inlined_call_operand.vmem [shape: f32[528,40], index: 2, kind: input, shape index: {}]
  %s3 = inlined_call_operand.hbm [shape: f32[1,128], index: 3, kind: output, shape index: {}]
  %s4 = sld [smem:[#allocation0]]
  $region22: #{tpu_custom_call.1} parent=0
    _
  %s6 = ssub.s32 1, %s4
  %s7 = scalar_select 0, %s6, %s4
  $region1: #{tpu_custom_call.1} parent=0
    #allocation2 [shape = 'u8[512]{0}', space=vmem, size = 0x400, scoped, tag = 'output window, operand 0, single buffered']
    #allocation3 [shape = 's32[1]{0}', space=sflag, size = 0x4, scoped, tag = 'scoped memory for tpu_custom_call.1']
    %8 = vsyncpa [#allocation3], 0
    // Predicated region
    $region2: #{tpu_custom_call.1} parent=1 // pred_check
      _
    $region3: #{tpu_custom_call.1} parent=1 // pred_check_branch
      %10 = sbr.rel (0) target = $region5
    $region4: #{tpu_custom_call.1} parent=1 // pred_region
      _
    $region5: #{tpu_custom_call.1} parent=1 // pred_fallthru
      _
    // Predicated region
    $region6: #{tpu_custom_call.1} parent=1 // pred_check
      _
    $region7: #{tpu_custom_call.1} parent=1 // pred_check_branch
      %12 = sbr.rel (0) target = $region9
    $region8: #{tpu_custom_call.1} parent=1 // pred_region
      _
    $region9: #{tpu_custom_call.1} parent=1 // pred_fallthru
      _
    // Predicated region
    $region10: #{tpu_custom_call.1} parent=1 // pred_check
      _
    $region11: #{tpu_custom_call.1} parent=1 // pred_check_branch
      %14 = sbr.rel (0) target = $region13
    $region12: #{tpu_custom_call.1} parent=1 // pred_region
      _
    $region13: #{tpu_custom_call.1} parent=1 // pred_fallthru
      _
    %v15 = vld [vmem:[%s0] sm:$0xf]
    %v16 = vld [vmem:[%s1] sm:$0xff]
    %v17 = vld [vmem:[%s1 + $0x8] sm:$0xff]
    %v18 = vld [vmem:[%s1 + $0x10] sm:$0xff]
    %v19 = vld [vmem:[%s1 + $0x18] sm:$0xff]
    %v20 = vld [vmem:[%s1 + $0x20] sm:$0xff]
    %v21 = vld [vmem:[%s1 + $0x28] sm:$0xff]
    %v22 = vld [vmem:[%s1 + $0x30] sm:$0xff]
    %v23 = vld [vmem:[%s1 + $0x38] sm:$0xff]
    %v24 = vld [vmem:[%s1 + $0x40] sm:$0xff]
    %v25 = vld [vmem:[%s1 + $0x48] sm:$0xff]
    %v26 = vld [vmem:[%s1 + $0x50] sm:$0xff]
    %v27 = vld [vmem:[%s1 + $0x58] sm:$0xff]
    %v28 = vld [vmem:[%s1 + $0x60] sm:$0xff]
    %v29 = vld [vmem:[%s1 + $0x68] sm:$0xff]
    %v30 = vld [vmem:[%s1 + $0x70] sm:$0xff]
    %v31 = vld [vmem:[%s1 + $0x78] sm:$0xff]
    %v32 = vld [vmem:[%s1 + $0x80] sm:$0xff]
    %v33 = vld [vmem:[%s1 + $0x88] sm:$0xff]
    %v34 = vld [vmem:[%s1 + $0x90] sm:$0xff]
    %v35 = vld [vmem:[%s1 + $0x98] sm:$0xff]
    %v36 = vld [vmem:[%s1 + $0xa0] sm:$0xff]
    %v37 = vld [vmem:[%s1 + $0xa8] sm:$0xff]
    %v38 = vld [vmem:[%s1 + $0xb0] sm:$0xff]
    %v39 = vld [vmem:[%s1 + $0xb8] sm:$0xff]
    %v40 = vld [vmem:[%s1 + $0xc0] sm:$0xff]
    %v41 = vld [vmem:[%s1 + $0xc8] sm:$0xff]
    %v42 = vld [vmem:[%s1 + $0xd0] sm:$0xff]
    %v43 = vld [vmem:[%s1 + $0xd8] sm:$0xff]
    %v44 = vld [vmem:[%s1 + $0xe0] sm:$0xff]
    %v45 = vld [vmem:[%s1 + $0xe8] sm:$0xff]
    %v46 = vld [vmem:[%s1 + $0xf0] sm:$0xff]
    %v47 = vld [vmem:[%s1 + $0xf8] sm:$0xff]
    %v48 = vld [vmem:[%s1 + $0x100] sm:$0xff]
    %v49 = vld [vmem:[%s1 + $0x108] sm:$0xff]
    %v50 = vld [vmem:[%s1 + $0x110] sm:$0xff]
    %v51 = vld [vmem:[%s1 + $0x118] sm:$0xff]
    %v52 = vld [vmem:[%s1 + $0x120] sm:$0xff]
    %v53 = vld [vmem:[%s1 + $0x128] sm:$0xff]
    %v54 = vld [vmem:[%s1 + $0x130] sm:$0xff]
    %v55 = vld [vmem:[%s1 + $0x138] sm:$0xff]
    %v56 = vld [vmem:[%s1 + $0x140] sm:$0xff]
    %v57 = vld [vmem:[%s1 + $0x148] sm:$0xff]
    %v58 = vld [vmem:[%s1 + $0x150] sm:$0xff]
    %v59 = vld [vmem:[%s1 + $0x158] sm:$0xff]
    %v60 = vld [vmem:[%s1 + $0x160] sm:$0xff]
    %v61 = vld [vmem:[%s1 + $0x168] sm:$0xff]
    %v62 = vld [vmem:[%s1 + $0x170] sm:$0xff]
    %v63 = vld [vmem:[%s1 + $0x178] sm:$0xff]
    %v64 = vld [vmem:[%s2] sm:$0xff]
    %v65 = vld [vmem:[%s2 + $0x8] sm:$0xff]
    %v66 = vld [vmem:[%s2 + $0x10] sm:$0xff]
    %v67 = vld [vmem:[%s2 + $0x18] sm:$0xff]
    %v68 = vld [vmem:[%s2 + $0x20] sm:$0xff]
    %v69 = vld [vmem:[%s2 + $0x28] sm:$0xff]
    %v70 = vld [vmem:[%s2 + $0x30] sm:$0xff]
    %v71 = vld [vmem:[%s2 + $0x38] sm:$0xff]
    %v72 = vld [vmem:[%s2 + $0x40] sm:$0xff]
    %v73 = vld [vmem:[%s2 + $0x48] sm:$0xff]
    %v74 = vld [vmem:[%s2 + $0x50] sm:$0xff]
    %v75 = vld [vmem:[%s2 + $0x58] sm:$0xff]
    %v76 = vld [vmem:[%s2 + $0x60] sm:$0xff]
    %v77 = vld [vmem:[%s2 + $0x68] sm:$0xff]
    %v78 = vld [vmem:[%s2 + $0x70] sm:$0xff]
    %v79 = vld [vmem:[%s2 + $0x78] sm:$0xff]
    %v80 = vld [vmem:[%s2 + $0x80] sm:$0xff]
    %v81 = vld [vmem:[%s2 + $0x88] sm:$0xff]
    %v82 = vld [vmem:[%s2 + $0x90] sm:$0xff]
    %v83 = vld [vmem:[%s2 + $0x98] sm:$0xff]
    %v84 = vld [vmem:[%s2 + $0xa0] sm:$0xff]
    %v85 = vld [vmem:[%s2 + $0xa8] sm:$0xff]
    %v86 = vld [vmem:[%s2 + $0xb0] sm:$0xff]
    %v87 = vld [vmem:[%s2 + $0xb8] sm:$0xff]
    %v88 = vld [vmem:[%s2 + $0xc0] sm:$0xff]
    %v89 = vld [vmem:[%s2 + $0xc8] sm:$0xff]
    %v90 = vld [vmem:[%s2 + $0xd0] sm:$0xff]
    %v91 = vld [vmem:[%s2 + $0xd8] sm:$0xff]
    %v92 = vld [vmem:[%s2 + $0xe0] sm:$0xff]
    %v93 = vld [vmem:[%s2 + $0xe8] sm:$0xff]
    %v94 = vld [vmem:[%s2 + $0xf0] sm:$0xff]
    %v95 = vld [vmem:[%s2 + $0xf8] sm:$0xff]
    %v96 = vld [vmem:[%s2 + $0x100] sm:$0xff]
    %v97 = vld [vmem:[%s2 + $0x108] sm:$0xff]
    %v98 = vld [vmem:[%s2 + $0x110] sm:$0xff]
    %v99 = vld [vmem:[%s2 + $0x118] sm:$0xff]
    %v100 = vld [vmem:[%s2 + $0x120] sm:$0xff]
    %v101 = vld [vmem:[%s2 + $0x128] sm:$0xff]
    %v102 = vld [vmem:[%s2 + $0x130] sm:$0xff]
    %v103 = vld [vmem:[%s2 + $0x138] sm:$0xff]
    %v104 = vld [vmem:[%s2 + $0x140] sm:$0xff]
    %v105 = vld [vmem:[%s2 + $0x148] sm:$0xff]
    %v106 = vld [vmem:[%s2 + $0x150] sm:$0xff]
    %v107 = vld [vmem:[%s2 + $0x158] sm:$0xff]
    %v108 = vld [vmem:[%s2 + $0x160] sm:$0xff]
    %v109 = vld [vmem:[%s2 + $0x168] sm:$0xff]
    %v110 = vld [vmem:[%s2 + $0x170] sm:$0xff]
    %v111 = vld [vmem:[%s2 + $0x178] sm:$0xff]
    %v112 = vld [vmem:[%s2 + $0x180] sm:$0xff]
    %v113 = vld [vmem:[%s2 + $0x188] sm:$0xff]
    %v114 = vld [vmem:[%s2 + $0x190] sm:$0xff]
    %v115 = vld [vmem:[%s2 + $0x198] sm:$0xff]
    %v116 = vld [vmem:[%s2 + $0x1a0] sm:$0xff]
    %v117 = vld [vmem:[%s2 + $0x1a8] sm:$0xff]
    %v118 = vld [vmem:[%s2 + $0x1b0] sm:$0xff]
    %v119 = vld [vmem:[%s2 + $0x1b8] sm:$0xff]
    %v120 = vld [vmem:[%s2 + $0x1c0] sm:$0xff]
    %v121 = vld [vmem:[%s2 + $0x1c8] sm:$0xff]
    %v122 = vld [vmem:[%s2 + $0x1d0] sm:$0xff]
    %v123 = vld [vmem:[%s2 + $0x1d8] sm:$0xff]
    %v124 = vld [vmem:[%s2 + $0x1e0] sm:$0xff]
    %v125 = vld [vmem:[%s2 + $0x1e8] sm:$0xff]
    %v126 = vld [vmem:[%s2 + $0x1f0] sm:$0xff]
    %v127 = vld [vmem:[%s2 + $0x1f8] sm:$0xff]
    %v128 = vld [vmem:[%s2 + $0x200] sm:$0xff]
    %v129 = vld [vmem:[%s2 + $0x208] sm:$0xff]
    %131 = vset.pattern.permute.xlu0 4
    %132 = vperm.xlu0 %131, %v17
    %v133 = vpop.permute.xlu0 %132
    %136 = vset.pattern.permute.xlu0 4
    %137 = vperm.xlu0 %136, %v19
    %v138 = vpop.permute.xlu0 %137
    %141 = vset.pattern.permute.xlu0 4
    %142 = vperm.xlu0 %141, %v21
    %v143 = vpop.permute.xlu0 %142
    %146 = vset.pattern.permute.xlu0 4
    %147 = vperm.xlu0 %146, %v23
    %v148 = vpop.permute.xlu0 %147
    %151 = vset.pattern.permute.xlu0 4
    %152 = vperm.xlu0 %151, %v25
    %v153 = vpop.permute.xlu0 %152
    %156 = vset.pattern.permute.xlu0 4
    %157 = vperm.xlu0 %156, %v27
    %v158 = vpop.permute.xlu0 %157
    %161 = vset.pattern.permute.xlu0 4
    %162 = vperm.xlu0 %161, %v29
    %v163 = vpop.permute.xlu0 %162
    %166 = vset.pattern.permute.xlu0 4
    %167 = vperm.xlu0 %166, %v31
    %v168 = vpop.permute.xlu0 %167
    %171 = vset.pattern.permute.xlu0 4
    %172 = vperm.xlu0 %171, %v33
    %v173 = vpop.permute.xlu0 %172
    %176 = vset.pattern.permute.xlu0 4
    %177 = vperm.xlu0 %176, %v35
    %v178 = vpop.permute.xlu0 %177
    %181 = vset.pattern.permute.xlu0 4
    %182 = vperm.xlu0 %181, %v37
    %v183 = vpop.permute.xlu0 %182
    %186 = vset.pattern.permute.xlu0 4
    %187 = vperm.xlu0 %186, %v39
    %v188 = vpop.permute.xlu0 %187
    %191 = vset.pattern.permute.xlu0 4
    %192 = vperm.xlu0 %191, %v41
    %v193 = vpop.permute.xlu0 %192
    %196 = vset.pattern.permute.xlu0 4
    %197 = vperm.xlu0 %196, %v43
    %v198 = vpop.permute.xlu0 %197
    %201 = vset.pattern.permute.xlu0 4
    %202 = vperm.xlu0 %201, %v45
    %v203 = vpop.permute.xlu0 %202
    %206 = vset.pattern.permute.xlu0 4
    %207 = vperm.xlu0 %206, %v47
    %v208 = vpop.permute.xlu0 %207
    %vm210 = vcmask 31744
    %v211 = vsel %vm210, %v17, 0
    %v213 = vsel %vm210, %v19, 0
    %v215 = vsel %vm210, %v21, 0
    %v217 = vsel %vm210, %v23, 0
    %v219 = vsel %vm210, %v25, 0
    %v221 = vsel %vm210, %v27, 0
    %v223 = vsel %vm210, %v29, 0
    %v225 = vsel %vm210, %v31, 0
    %v227 = vsel %vm210, %v33, 0
    %v229 = vsel %vm210, %v35, 0
    %v231 = vsel %vm210, %v37, 0
    %v233 = vsel %vm210, %v39, 0
    %v235 = vsel %vm210, %v41, 0
    %v237 = vsel %vm210, %v43, 0
    %v239 = vsel %vm210, %v45, 0
    %v241 = vsel %vm210, %v47, 0
    %vm243 = vcmask 1043456
    %v245 = vsel %vm243, %v15, 0
    %247 = vmatpush.msra.mxu0 0.0
    %248 = vmatpush.msra.mxu0 0.0
    %249 = vmatpush.msra.mxu0 0.0
    %250 = vmatpush.msra.mxu0 0.0
    %251 = vmatpush.msra.mxu0 0.0
    %252 = vmatpush.msra.mxu0 0.0
    %253 = vmatpush.msra.mxu0 0.0
    %254 = vmatpush.msra.mxu0 0.0
    %255 = vmatpush.msra.mxu0 0.0
    %256 = vmatpush.msra.mxu0 0.0
    %257 = vmatpush.msra.mxu0 0.0
    %258 = vmatpush.msra.mxu0 0.0
    %259 = vmatpush.msra.mxu0 0.0
    %260 = vmatpush.msra.mxu0 0.0
    %261 = vmatpush.msra.mxu0 0.0
    %262 = vmatpush.msra.mxu0 %v245
    %263 = vmatmul.f32.gmra.mxu0 %v211
    %v264 = vpop.f32.mrf.mxu0
    %v265 = vadd.f32 %v133, %v264
    %266 = vmatmul.f32.gmra.mxu0 %v213
    %v267 = vpop.f32.mrf.mxu0
    %v268 = vadd.f32 %v138, %v267
    %269 = vmatmul.f32.gmra.mxu0 %v215
    %v270 = vpop.f32.mrf.mxu0
    %v271 = vadd.f32 %v143, %v270
    %272 = vmatmul.f32.gmra.mxu0 %v217
    %v273 = vpop.f32.mrf.mxu0
    %v274 = vadd.f32 %v148, %v273
    %275 = vmatmul.f32.gmra.mxu0 %v219
    %v276 = vpop.f32.mrf.mxu0
    %v277 = vadd.f32 %v153, %v276
    %278 = vmatmul.f32.gmra.mxu0 %v221
    %v279 = vpop.f32.mrf.mxu0
    %v280 = vadd.f32 %v158, %v279
    %281 = vmatmul.f32.gmra.mxu0 %v223
    %v282 = vpop.f32.mrf.mxu0
    %v283 = vadd.f32 %v163, %v282
    %284 = vmatmul.f32.gmra.mxu0 %v225
    %v285 = vpop.f32.mrf.mxu0
    %v286 = vadd.f32 %v168, %v285
    %287 = vmatmul.f32.gmra.mxu0 %v227
    %v288 = vpop.f32.mrf.mxu0
    %v289 = vadd.f32 %v173, %v288
    %290 = vmatmul.f32.gmra.mxu0 %v229
    %v291 = vpop.f32.mrf.mxu0
    %v292 = vadd.f32 %v178, %v291
    %293 = vmatmul.f32.gmra.mxu0 %v231
    %v294 = vpop.f32.mrf.mxu0
    %v295 = vadd.f32 %v183, %v294
    %296 = vmatmul.f32.gmra.mxu0 %v233
    %v297 = vpop.f32.mrf.mxu0
    %v298 = vadd.f32 %v188, %v297
    %299 = vmatmul.f32.gmra.mxu0 %v235
    %v300 = vpop.f32.mrf.mxu0
    %v301 = vadd.f32 %v193, %v300
    %302 = vmatmul.f32.gmra.mxu0 %v237
    %v303 = vpop.f32.mrf.mxu0
    %v304 = vadd.f32 %v198, %v303
    %305 = vmatmul.f32.gmra.mxu0 %v239
    %v306 = vpop.f32.mrf.mxu0
    %v307 = vadd.f32 %v203, %v306
    %308 = vmatmul.f32.gmra.mxu0 %v241
    %v309 = vpop.f32.mrf.mxu0
    %v310 = vadd.f32 %v208, %v309
    %311 = vdwg.mxu0
    %v312 = vand.u32 2147483647, %v265
    %vm313 = vcmp.le.f32.partialorder %v312, 0.7853982
    %vm314 = vcmp.lt.s32.totalorder %v265, 0
    %v315 = vand.u32 %v265, 2139095040
    %v316 = vshrl.u32 %v315, 23
    %v317 = vsub.s32 %v316, 127
    %v318 = vand.u32 2147483647, %v265
    %v319 = vand.u32 %v318, 8388607
    %v320 = vor.u32 %v319, 8388608
    %v321 = vsub.s32 0, %v320
    %v322 = vadd.s32 %v317, 1
    %vm323 = vcmp.gt.s32.totalorder %v322, 0
    %v324 = vsel %vm323, %v322, 0
    %v325 = vshrl.u32 %v324, 5
    %v326 = vand.u32 %v324, 31
    %v327 = vsub.s32 32, %v326
    %v328 = vshrl.u32 683565275, %v327
    %v329 = vshll.u32 683565275, %v326
    %v330 = vshrl.u32 2475754826, %v327
    %v331 = vor.u32 %v329, %v330
    %v332 = vshll.u32 2475754826, %v326
    %v333 = vshrl.u32 2131351028, %v327
    %v334 = vor.u32 %v332, %v333
    %v335 = vshll.u32 2131351028, %v326
    %v336 = vshrl.u32 2102212464, %v327
    %v337 = vor.u32 %v335, %v336
    %v338 = vshll.u32 2102212464, %v326
    %v339 = vshrl.u32 920167782, %v327
    %v340 = vor.u32 %v338, %v339
    %v341 = vshll.u32 920167782, %v326
    %v342 = vshrl.u32 1326507024, %v327
    %v343 = vor.u32 %v341, %v342
    %vm344 = vcmp.lt.s32.totalorder %v325, 1
    %vm345 = vcmp.lt.s32.totalorder %v325, 2
    %vm346 = vcmp.lt.s32.totalorder %v325, 3
    %vm347 = vcmp.lt.s32.totalorder %v325, 4
    %v348 = vsel %vm344, %v328, %v331
    %v349 = vsel %vm347, %v337, 2102212464
    %v350 = vsel %vm346, %v334, %v349
    %v351 = vsel %vm345, %v348, %v350
    %v352 = vsel %vm344, %v331, %v334
    %v353 = vsel %vm347, %v340, 920167782
    %v354 = vsel %vm346, %v337, %v353
    %v355 = vsel %vm345, %v352, %v354
    %v356 = vsel %vm344, %v334, %v337
    %v357 = vsel %vm347, %v343, 1326507024
    %v358 = vsel %vm346, %v340, %v357
    %v359 = vsel %vm345, %v356, %v358
    %v360 = vshll.u32 %v320, 8
    %v361 = vand.u32 %v360, 65535
    %v362 = vshrl.u32 %v360, 16
    %v363 = vand.u32 %v359, 65535
    %v364 = vshrl.u32 %v359, 16
    %v365 = vmul.u32 %v361, %v363
    %v366 = vmul.u32 %v361, %v364
    %v367 = vmul.u32 %v362, %v363
    %v368 = vmul.u32 %v362, %v364
    %v369 = vshll.u32 %v366, 16
    %v370 = vshrl.u32 %v366, 16
    %v371 = vshll.u32 %v367, 16
    %v372 = vshrl.u32 %v367, 16
    %vm373 = vc.u32 %v365, %v369
    %v374 = vsel %vm373, 1, 0
    %v375 = vadd.s32 %v365, %v369
    %v376 = vadd.s32 %v368, %v374
    %vm377 = vc.u32 %v375, %v371
    %v378 = vsel %vm377, 1, 0
    %v379 = vadd.s32 %v375, %v371
    %v380 = vadd.s32 %v376, %v378
    %v381 = vadd.s32 %v380, %v370
    %v382 = vadd.s32 %v381, %v372
    %v383 = vand.u32 %v360, 65535
    %v384 = vshrl.u32 %v360, 16
    %v385 = vand.u32 %v355, 65535
    %v386 = vshrl.u32 %v355, 16
    %v387 = vmul.u32 %v383, %v385
    %v388 = vmul.u32 %v383, %v386
    %v389 = vmul.u32 %v384, %v385
    %v390 = vmul.u32 %v384, %v386
    %v391 = vshll.u32 %v388, 16
    %v392 = vshrl.u32 %v388, 16
    %v393 = vshll.u32 %v389, 16
    %v394 = vshrl.u32 %v389, 16
    %vm395 = vc.u32 %v387, %v391
    %v396 = vsel %vm395, 1, 0
    %v397 = vadd.s32 %v387, %v391
    %v398 = vadd.s32 %v390, %v396
    %vm399 = vc.u32 %v397, %v393
    %v400 = vsel %vm399, 1, 0
    %v401 = vadd.s32 %v397, %v393
    %v402 = vadd.s32 %v398, %v400
    %v403 = vadd.s32 %v402, %v392
    %v404 = vadd.s32 %v403, %v394
    %v405 = vmul.u32 %v360, %v351
    %v406 = vadd.s32 %v382, %v401
    %vm407 = vc.u32 %v382, %v401
    %v408 = vadd.s32 %v404, 1
    %v409 = vsel %vm407, %v408, %v404
    %v410 = vadd.s32 %v405, %v409
    %v411 = vadd.s32 %v410, 536870912
    %v412 = vshrl.u32 %v411, 30
    %v413 = vshll.u32 %v412, 30
    %v414 = vsub.s32 %v410, %v413
    %vm415 = vcmp.lt.s32.totalorder %v414, 0
    %v416 = vsub.s32 0, %v414
    %v417 = vsel %vm415, %v416, %v414
    %v418 = vclz %v417
    %v419 = vsub.s32 %v418, 2
    %vm420 = vcmp.gt.s32.totalorder 0, %v419
    %v421 = vsel %vm420, 0, %v419
    %v422 = vsub.s32 32, %v421
    %v423 = vshll.u32 %v414, %v421
    %v424 = vshrl.u32 %v406, %v422
    %v425 = vor.u32 %v423, %v424
    %v426 = vsub.s32 4294967266, %v421
    %v427 = vadd.s32 %v426, 127
    %v428 = vshll.u32 %v427, 23
    %v429 = vor.u32 4788187, %v428
    %v430 = vand.u32 2147483647, %v429
    %v432 = vcvt.s32.f32 %v425
    %v433 = vmul.f32 %v432, %v430
    %v434 = vxor.u32 %v433, 2147483648
    %v435 = vsel %vm314, %v434, %v433
    %v436 = vsub.s32 4, %v412
    %v437 = vsel %vm314, %v436, %v412
    %v438 = vsel %vm313, %v265, %v435
    %v439 = vsel %vm313, 0, %v437
    %v440 = vmul.f32 %v438, %v438
    %v441 = vmul.f32 %v440, -0.001358992
    %v442 = vadd.f32 %v441, 0.041655596
    %v443 = vmul.f32 %v440, %v442
    %v444 = vadd.f32 %v443, -0.4999988
    %v445 = vmul.f32 %v440, %v444
    %v446 = vadd.f32 1.0, %v445
    %v447 = vmul.f32 %v438, %v438
    %v448 = vmul.f32 %v447, -0.00019511016
    %v449 = vadd.f32 %v448, 0.008332121
    %v450 = vmul.f32 %v447, %v449
    %v451 = vadd.f32 %v450, -0.16666654
    %v452 = vmul.f32 %v447, %v451
    %v453 = vadd.f32 %v452, 1.0
    %v454 = vmul.f32 %v453, %v438
    %vm455 = vweird.f32 %v265
    %v456 = vadd.s32 %v439, 3
    %v457 = vand.u32 %v456, 3
    %vm458 = vcmp.lt.s32.totalorder %v457, 2
    %vm459 = vcmp.eq.s32.totalorder %v457, 0
    %v460 = vxor.u32 %v454, 2147483648
    %v461 = vsel %vm459, %v446, %v460
    %vm462 = vcmp.eq.s32.totalorder %v457, 2
    %v463 = vxor.u32 %v446, 2147483648
    %v464 = vsel %vm462, %v463, %v454
    %v465 = vsel %vm458, %v461, %v464
    %v466 = vsel %vm455, nan, %v465
    %v467 = vand.u32 2147483647, %v268
    %vm468 = vcmp.le.f32.partialorder %v467, 0.7853982
    %vm469 = vcmp.lt.s32.totalorder %v268, 0
    %v470 = vand.u32 %v268, 2139095040
    %v471 = vshrl.u32 %v470, 23
    %v472 = vsub.s32 %v471, 127
    %v473 = vand.u32 2147483647, %v268
    %v474 = vand.u32 %v473, 8388607
    %v475 = vor.u32 %v474, 8388608
    %v476 = vsub.s32 0, %v475
    %v477 = vadd.s32 %v472, 1
    %vm478 = vcmp.gt.s32.totalorder %v477, 0
    %v479 = vsel %vm478, %v477, 0
    %v480 = vshrl.u32 %v479, 5
    %v481 = vand.u32 %v479, 31
    %v482 = vsub.s32 32, %v481
    %v483 = vshrl.u32 683565275, %v482
    %v484 = vshll.u32 683565275, %v481
    %v485 = vshrl.u32 2475754826, %v482
    %v486 = vor.u32 %v484, %v485
    %v487 = vshll.u32 2475754826, %v481
    %v488 = vshrl.u32 2131351028, %v482
    %v489 = vor.u32 %v487, %v488
    %v490 = vshll.u32 2131351028, %v481
    %v491 = vshrl.u32 2102212464, %v482
    %v492 = vor.u32 %v490, %v491
    %v493 = vshll.u32 2102212464, %v481
    %v494 = vshrl.u32 920167782, %v482
    %v495 = vor.u32 %v493, %v494
    %v496 = vshll.u32 920167782, %v481
    %v497 = vshrl.u32 1326507024, %v482
    %v498 = vor.u32 %v496, %v497
    %vm499 = vcmp.lt.s32.totalorder %v480, 1
    %vm500 = vcmp.lt.s32.totalorder %v480, 2
    %vm501 = vcmp.lt.s32.totalorder %v480, 3
    %vm502 = vcmp.lt.s32.totalorder %v480, 4
    %v503 = vsel %vm499, %v483, %v486
    %v504 = vsel %vm502, %v492, 2102212464
    %v505 = vsel %vm501, %v489, %v504
    %v506 = vsel %vm500, %v503, %v505
    %v507 = vsel %vm499, %v486, %v489
    %v508 = vsel %vm502, %v495, 920167782
    %v509 = vsel %vm501, %v492, %v508
    %v510 = vsel %vm500, %v507, %v509
    %v511 = vsel %vm499, %v489, %v492
    %v512 = vsel %vm502, %v498, 1326507024
    %v513 = vsel %vm501, %v495, %v512
    %v514 = vsel %vm500, %v511, %v513
    %v515 = vshll.u32 %v475, 8
    %v516 = vand.u32 %v515, 65535
    %v517 = vshrl.u32 %v515, 16
    %v518 = vand.u32 %v514, 65535
    %v519 = vshrl.u32 %v514, 16
    %v520 = vmul.u32 %v516, %v518
    %v521 = vmul.u32 %v516, %v519
    %v522 = vmul.u32 %v517, %v518
    %v523 = vmul.u32 %v517, %v519
    %v524 = vshll.u32 %v521, 16
    %v525 = vshrl.u32 %v521, 16
    %v526 = vshll.u32 %v522, 16
    %v527 = vshrl.u32 %v522, 16
    %vm528 = vc.u32 %v520, %v524
    %v529 = vsel %vm528, 1, 0
    %v530 = vadd.s32 %v520, %v524
    %v531 = vadd.s32 %v523, %v529
    %vm532 = vc.u32 %v530, %v526
    %v533 = vsel %vm532, 1, 0
    %v534 = vadd.s32 %v530, %v526
    %v535 = vadd.s32 %v531, %v533
    %v536 = vadd.s32 %v535, %v525
    %v537 = vadd.s32 %v536, %v527
    %v538 = vand.u32 %v515, 65535
    %v539 = vshrl.u32 %v515, 16
    %v540 = vand.u32 %v510, 65535
    %v541 = vshrl.u32 %v510, 16
    %v542 = vmul.u32 %v538, %v540
    %v543 = vmul.u32 %v538, %v541
    %v544 = vmul.u32 %v539, %v540
    %v545 = vmul.u32 %v539, %v541
    %v546 = vshll.u32 %v543, 16
    %v547 = vshrl.u32 %v543, 16
    %v548 = vshll.u32 %v544, 16
    %v549 = vshrl.u32 %v544, 16
    %vm550 = vc.u32 %v542, %v546
    %v551 = vsel %vm550, 1, 0
    %v552 = vadd.s32 %v542, %v546
    %v553 = vadd.s32 %v545, %v551
    %vm554 = vc.u32 %v552, %v548
    %v555 = vsel %vm554, 1, 0
    %v556 = vadd.s32 %v552, %v548
    %v557 = vadd.s32 %v553, %v555
    %v558 = vadd.s32 %v557, %v547
    %v559 = vadd.s32 %v558, %v549
    %v560 = vmul.u32 %v515, %v506
    %v561 = vadd.s32 %v537, %v556
    %vm562 = vc.u32 %v537, %v556
    %v563 = vadd.s32 %v559, 1
    %v564 = vsel %vm562, %v563, %v559
    %v565 = vadd.s32 %v560, %v564
    %v566 = vadd.s32 %v565, 536870912
    %v567 = vshrl.u32 %v566, 30
    %v568 = vshll.u32 %v567, 30
    %v569 = vsub.s32 %v565, %v568
    %vm570 = vcmp.lt.s32.totalorder %v569, 0
    %v571 = vsub.s32 0, %v569
    %v572 = vsel %vm570, %v571, %v569
    %v573 = vclz %v572
    %v574 = vsub.s32 %v573, 2
    %vm575 = vcmp.gt.s32.totalorder 0, %v574
    %v576 = vsel %vm575, 0, %v574
    %v577 = vsub.s32 32, %v576
    %v578 = vshll.u32 %v569, %v576
    %v579 = vshrl.u32 %v561, %v577
    %v580 = vor.u32 %v578, %v579
    %v581 = vsub.s32 4294967266, %v576
    %v582 = vadd.s32 %v581, 127
    %v583 = vshll.u32 %v582, 23
    %v584 = vor.u32 4788187, %v583
    %v585 = vand.u32 2147483647, %v584
    %v587 = vcvt.s32.f32 %v580
    %v588 = vmul.f32 %v587, %v585
    %v589 = vxor.u32 %v588, 2147483648
    %v590 = vsel %vm469, %v589, %v588
    %v591 = vsub.s32 4, %v567
    %v592 = vsel %vm469, %v591, %v567
    %v593 = vsel %vm468, %v268, %v590
    %v594 = vsel %vm468, 0, %v592
    %v595 = vmul.f32 %v593, %v593
    %v596 = vmul.f32 %v595, -0.001358992
    %v597 = vadd.f32 %v596, 0.041655596
    %v598 = vmul.f32 %v595, %v597
    %v599 = vadd.f32 %v598, -0.4999988
    %v600 = vmul.f32 %v595, %v599
    %v601 = vadd.f32 1.0, %v600
    %v602 = vmul.f32 %v593, %v593
    %v603 = vmul.f32 %v602, -0.00019511016
    %v604 = vadd.f32 %v603, 0.008332121
    %v605 = vmul.f32 %v602, %v604
    %v606 = vadd.f32 %v605, -0.16666654
    %v607 = vmul.f32 %v602, %v606
    %v608 = vadd.f32 %v607, 1.0
    %v609 = vmul.f32 %v608, %v593
    %vm610 = vweird.f32 %v268
    %v611 = vadd.s32 %v594, 3
    %v612 = vand.u32 %v611, 3
    %vm613 = vcmp.lt.s32.totalorder %v612, 2
    %vm614 = vcmp.eq.s32.totalorder %v612, 0
    %v615 = vxor.u32 %v609, 2147483648
    %v616 = vsel %vm614, %v601, %v615
    %vm617 = vcmp.eq.s32.totalorder %v612, 2
    %v618 = vxor.u32 %v601, 2147483648
    %v619 = vsel %vm617, %v618, %v609
    %v620 = vsel %vm613, %v616, %v619
    %v621 = vsel %vm610, nan, %v620
    %v622 = vand.u32 2147483647, %v271
    %vm623 = vcmp.le.f32.partialorder %v622, 0.7853982
    %vm624 = vcmp.lt.s32.totalorder %v271, 0
    %v625 = vand.u32 %v271, 2139095040
    %v626 = vshrl.u32 %v625, 23
    %v627 = vsub.s32 %v626, 127
    %v628 = vand.u32 2147483647, %v271
    %v629 = vand.u32 %v628, 8388607
    %v630 = vor.u32 %v629, 8388608
    %v631 = vsub.s32 0, %v630
    %v632 = vadd.s32 %v627, 1
    %vm633 = vcmp.gt.s32.totalorder %v632, 0
    %v634 = vsel %vm633, %v632, 0
    %v635 = vshrl.u32 %v634, 5
    %v636 = vand.u32 %v634, 31
    %v637 = vsub.s32 32, %v636
    %v638 = vshrl.u32 683565275, %v637
    %v639 = vshll.u32 683565275, %v636
    %v640 = vshrl.u32 2475754826, %v637
    %v641 = vor.u32 %v639, %v640
    %v642 = vshll.u32 2475754826, %v636
    %v643 = vshrl.u32 2131351028, %v637
    %v644 = vor.u32 %v642, %v643
    %v645 = vshll.u32 2131351028, %v636
    %v646 = vshrl.u32 2102212464, %v637
    %v647 = vor.u32 %v645, %v646
    %v648 = vshll.u32 2102212464, %v636
    %v649 = vshrl.u32 920167782, %v637
    %v650 = vor.u32 %v648, %v649
    %v651 = vshll.u32 920167782, %v636
    %v652 = vshrl.u32 1326507024, %v637
    %v653 = vor.u32 %v651, %v652
    %vm654 = vcmp.lt.s32.totalorder %v635, 1
    %vm655 = vcmp.lt.s32.totalorder %v635, 2
    %vm656 = vcmp.lt.s32.totalorder %v635, 3
    %vm657 = vcmp.lt.s32.totalorder %v635, 4
    %v658 = vsel %vm654, %v638, %v641
    %v659 = vsel %vm657, %v647, 2102212464
    %v660 = vsel %vm656, %v644, %v659
    %v661 = vsel %vm655, %v658, %v660
    %v662 = vsel %vm654, %v641, %v644
    %v663 = vsel %vm657, %v650, 920167782
    %v664 = vsel %vm656, %v647, %v663
    %v665 = vsel %vm655, %v662, %v664
    %v666 = vsel %vm654, %v644, %v647
    %v667 = vsel %vm657, %v653, 1326507024
    %v668 = vsel %vm656, %v650, %v667
    %v669 = vsel %vm655, %v666, %v668
    %v670 = vshll.u32 %v630, 8
    %v671 = vand.u32 %v670, 65535
    %v672 = vshrl.u32 %v670, 16
    %v673 = vand.u32 %v669, 65535
    %v674 = vshrl.u32 %v669, 16
    %v675 = vmul.u32 %v671, %v673
    %v676 = vmul.u32 %v671, %v674
    %v677 = vmul.u32 %v672, %v673
    %v678 = vmul.u32 %v672, %v674
    %v679 = vshll.u32 %v676, 16
    %v680 = vshrl.u32 %v676, 16
    %v681 = vshll.u32 %v677, 16
    %v682 = vshrl.u32 %v677, 16
    %vm683 = vc.u32 %v675, %v679
    %v684 = vsel %vm683, 1, 0
    %v685 = vadd.s32 %v675, %v679
    %v686 = vadd.s32 %v678, %v684
    %vm687 = vc.u32 %v685, %v681
    %v688 = vsel %vm687, 1, 0
    %v689 = vadd.s32 %v685, %v681
    %v690 = vadd.s32 %v686, %v688
    %v691 = vadd.s32 %v690, %v680
    %v692 = vadd.s32 %v691, %v682
    %v693 = vand.u32 %v670, 65535
    %v694 = vshrl.u32 %v670, 16
    %v695 = vand.u32 %v665, 65535
    %v696 = vshrl.u32 %v665, 16
    %v697 = vmul.u32 %v693, %v695
    %v698 = vmul.u32 %v693, %v696
    %v699 = vmul.u32 %v694, %v695
    %v700 = vmul.u32 %v694, %v696
    %v701 = vshll.u32 %v698, 16
    %v702 = vshrl.u32 %v698, 16
    %v703 = vshll.u32 %v699, 16
    %v704 = vshrl.u32 %v699, 16
    %vm705 = vc.u32 %v697, %v701
    %v706 = vsel %vm705, 1, 0
    %v707 = vadd.s32 %v697, %v701
    %v708 = vadd.s32 %v700, %v706
    %vm709 = vc.u32 %v707, %v703
    %v710 = vsel %vm709, 1, 0
    %v711 = vadd.s32 %v707, %v703
    %v712 = vadd.s32 %v708, %v710
    %v713 = vadd.s32 %v712, %v702
    %v714 = vadd.s32 %v713, %v704
    %v715 = vmul.u32 %v670, %v661
    %v716 = vadd.s32 %v692, %v711
    %vm717 = vc.u32 %v692, %v711
    %v718 = vadd.s32 %v714, 1
    %v719 = vsel %vm717, %v718, %v714
    %v720 = vadd.s32 %v715, %v719
    %v721 = vadd.s32 %v720, 536870912
    %v722 = vshrl.u32 %v721, 30
    %v723 = vshll.u32 %v722, 30
    %v724 = vsub.s32 %v720, %v723
    %vm725 = vcmp.lt.s32.totalorder %v724, 0
    %v726 = vsub.s32 0, %v724
    %v727 = vsel %vm725, %v726, %v724
    %v728 = vclz %v727
    %v729 = vsub.s32 %v728, 2
    %vm730 = vcmp.gt.s32.totalorder 0, %v729
    %v731 = vsel %vm730, 0, %v729
    %v732 = vsub.s32 32, %v731
    %v733 = vshll.u32 %v724, %v731
    %v734 = vshrl.u32 %v716, %v732
    %v735 = vor.u32 %v733, %v734
    %v736 = vsub.s32 4294967266, %v731
    %v737 = vadd.s32 %v736, 127
    %v738 = vshll.u32 %v737, 23
    %v739 = vor.u32 4788187, %v738
    %v740 = vand.u32 2147483647, %v739
    %v742 = vcvt.s32.f32 %v735
    %v743 = vmul.f32 %v742, %v740
    %v744 = vxor.u32 %v743, 2147483648
    %v745 = vsel %vm624, %v744, %v743
    %v746 = vsub.s32 4, %v722
    %v747 = vsel %vm624, %v746, %v722
    %v748 = vsel %vm623, %v271, %v745
    %v749 = vsel %vm623, 0, %v747
    %v750 = vmul.f32 %v748, %v748
    %v751 = vmul.f32 %v750, -0.001358992
    %v752 = vadd.f32 %v751, 0.041655596
    %v753 = vmul.f32 %v750, %v752
    %v754 = vadd.f32 %v753, -0.4999988
    %v755 = vmul.f32 %v750, %v754
    %v756 = vadd.f32 1.0, %v755
    %v757 = vmul.f32 %v748, %v748
    %v758 = vmul.f32 %v757, -0.00019511016
    %v759 = vadd.f32 %v758, 0.008332121
    %v760 = vmul.f32 %v757, %v759
    %v761 = vadd.f32 %v760, -0.16666654
    %v762 = vmul.f32 %v757, %v761
    %v763 = vadd.f32 %v762, 1.0
    %v764 = vmul.f32 %v763, %v748
    %vm765 = vweird.f32 %v271
    %v766 = vadd.s32 %v749, 3
    %v767 = vand.u32 %v766, 3
    %vm768 = vcmp.lt.s32.totalorder %v767, 2
    %vm769 = vcmp.eq.s32.totalorder %v767, 0
    %v770 = vxor.u32 %v764, 2147483648
    %v771 = vsel %vm769, %v756, %v770
    %vm772 = vcmp.eq.s32.totalorder %v767, 2
    %v773 = vxor.u32 %v756, 2147483648
    %v774 = vsel %vm772, %v773, %v764
    %v775 = vsel %vm768, %v771, %v774
    %v776 = vsel %vm765, nan, %v775
    %v777 = vand.u32 2147483647, %v274
    %vm778 = vcmp.le.f32.partialorder %v777, 0.7853982
    %vm779 = vcmp.lt.s32.totalorder %v274, 0
    %v780 = vand.u32 %v274, 2139095040
    %v781 = vshrl.u32 %v780, 23
    %v782 = vsub.s32 %v781, 127
    %v783 = vand.u32 2147483647, %v274
    %v784 = vand.u32 %v783, 8388607
    %v785 = vor.u32 %v784, 8388608
    %v786 = vsub.s32 0, %v785
    %v787 = vadd.s32 %v782, 1
    %vm788 = vcmp.gt.s32.totalorder %v787, 0
    %v789 = vsel %vm788, %v787, 0
    %v790 = vshrl.u32 %v789, 5
    %v791 = vand.u32 %v789, 31
    %v792 = vsub.s32 32, %v791
    %v793 = vshrl.u32 683565275, %v792
    %v794 = vshll.u32 683565275, %v791
    %v795 = vshrl.u32 2475754826, %v792
    %v796 = vor.u32 %v794, %v795
    %v797 = vshll.u32 2475754826, %v791
    %v798 = vshrl.u32 2131351028, %v792
    %v799 = vor.u32 %v797, %v798
    %v800 = vshll.u32 2131351028, %v791
    %v801 = vshrl.u32 2102212464, %v792
    %v802 = vor.u32 %v800, %v801
    %v803 = vshll.u32 2102212464, %v791
    %v804 = vshrl.u32 920167782, %v792
    %v805 = vor.u32 %v803, %v804
    %v806 = vshll.u32 920167782, %v791
    %v807 = vshrl.u32 1326507024, %v792
    %v808 = vor.u32 %v806, %v807
    %vm809 = vcmp.lt.s32.totalorder %v790, 1
    %vm810 = vcmp.lt.s32.totalorder %v790, 2
    %vm811 = vcmp.lt.s32.totalorder %v790, 3
    %vm812 = vcmp.lt.s32.totalorder %v790, 4
    %v813 = vsel %vm809, %v793, %v796
    %v814 = vsel %vm812, %v802, 2102212464
    %v815 = vsel %vm811, %v799, %v814
    %v816 = vsel %vm810, %v813, %v815
    %v817 = vsel %vm809, %v796, %v799
    %v818 = vsel %vm812, %v805, 920167782
    %v819 = vsel %vm811, %v802, %v818
    %v820 = vsel %vm810, %v817, %v819
    %v821 = vsel %vm809, %v799, %v802
    %v822 = vsel %vm812, %v808, 1326507024
    %v823 = vsel %vm811, %v805, %v822
    %v824 = vsel %vm810, %v821, %v823
    %v825 = vshll.u32 %v785, 8
    %v826 = vand.u32 %v825, 65535
    %v827 = vshrl.u32 %v825, 16
    %v828 = vand.u32 %v824, 65535
    %v829 = vshrl.u32 %v824, 16
    %v830 = vmul.u32 %v826, %v828
    %v831 = vmul.u32 %v826, %v829
    %v832 = vmul.u32 %v827, %v828
    %v833 = vmul.u32 %v827, %v829
    %v834 = vshll.u32 %v831, 16
    %v835 = vshrl.u32 %v831, 16
    %v836 = vshll.u32 %v832, 16
    %v837 = vshrl.u32 %v832, 16
    %vm838 = vc.u32 %v830, %v834
    %v839 = vsel %vm838, 1, 0
    %v840 = vadd.s32 %v830, %v834
    %v841 = vadd.s32 %v833, %v839
    %vm842 = vc.u32 %v840, %v836
    %v843 = vsel %vm842, 1, 0
    %v844 = vadd.s32 %v840, %v836
    %v845 = vadd.s32 %v841, %v843
    %v846 = vadd.s32 %v845, %v835
    %v847 = vadd.s32 %v846, %v837
    %v848 = vand.u32 %v825, 65535
    %v849 = vshrl.u32 %v825, 16
    %v850 = vand.u32 %v820, 65535
    %v851 = vshrl.u32 %v820, 16
    %v852 = vmul.u32 %v848, %v850
    %v853 = vmul.u32 %v848, %v851
    %v854 = vmul.u32 %v849, %v850
    %v855 = vmul.u32 %v849, %v851
    %v856 = vshll.u32 %v853, 16
    %v857 = vshrl.u32 %v853, 16
    %v858 = vshll.u32 %v854, 16
    %v859 = vshrl.u32 %v854, 16
    %vm860 = vc.u32 %v852, %v856
    %v861 = vsel %vm860, 1, 0
    %v862 = vadd.s32 %v852, %v856
    %v863 = vadd.s32 %v855, %v861
    %vm864 = vc.u32 %v862, %v858
    %v865 = vsel %vm864, 1, 0
    %v866 = vadd.s32 %v862, %v858
    %v867 = vadd.s32 %v863, %v865
    %v868 = vadd.s32 %v867, %v857
    %v869 = vadd.s32 %v868, %v859
    %v870 = vmul.u32 %v825, %v816
    %v871 = vadd.s32 %v847, %v866
    %vm872 = vc.u32 %v847, %v866
    %v873 = vadd.s32 %v869, 1
    %v874 = vsel %vm872, %v873, %v869
    %v875 = vadd.s32 %v870, %v874
    %v876 = vadd.s32 %v875, 536870912
    %v877 = vshrl.u32 %v876, 30
    %v878 = vshll.u32 %v877, 30
    %v879 = vsub.s32 %v875, %v878
    %vm880 = vcmp.lt.s32.totalorder %v879, 0
    %v881 = vsub.s32 0, %v879
    %v882 = vsel %vm880, %v881, %v879
    %v883 = vclz %v882
    %v884 = vsub.s32 %v883, 2
    %vm885 = vcmp.gt.s32.totalorder 0, %v884
    %v886 = vsel %vm885, 0, %v884
    %v887 = vsub.s32 32, %v886
    %v888 = vshll.u32 %v879, %v886
    %v889 = vshrl.u32 %v871, %v887
    %v890 = vor.u32 %v888, %v889
    %v891 = vsub.s32 4294967266, %v886
    %v892 = vadd.s32 %v891, 127
    %v893 = vshll.u32 %v892, 23
    %v894 = vor.u32 4788187, %v893
    %v895 = vand.u32 2147483647, %v894
    %v897 = vcvt.s32.f32 %v890
    %v898 = vmul.f32 %v897, %v895
    %v899 = vxor.u32 %v898, 2147483648
    %v900 = vsel %vm779, %v899, %v898
    %v901 = vsub.s32 4, %v877
    %v902 = vsel %vm779, %v901, %v877
    %v903 = vsel %vm778, %v274, %v900
    %v904 = vsel %vm778, 0, %v902
    %v905 = vmul.f32 %v903, %v903
    %v906 = vmul.f32 %v905, -0.001358992
    %v907 = vadd.f32 %v906, 0.041655596
    %v908 = vmul.f32 %v905, %v907
    %v909 = vadd.f32 %v908, -0.4999988
    %v910 = vmul.f32 %v905, %v909
    %v911 = vadd.f32 1.0, %v910
    %v912 = vmul.f32 %v903, %v903
    %v913 = vmul.f32 %v912, -0.00019511016
    %v914 = vadd.f32 %v913, 0.008332121
    %v915 = vmul.f32 %v912, %v914
    %v916 = vadd.f32 %v915, -0.16666654
    %v917 = vmul.f32 %v912, %v916
    %v918 = vadd.f32 %v917, 1.0
    %v919 = vmul.f32 %v918, %v903
    %vm920 = vweird.f32 %v274
    %v921 = vadd.s32 %v904, 3
    %v922 = vand.u32 %v921, 3
    %vm923 = vcmp.lt.s32.totalorder %v922, 2
    %vm924 = vcmp.eq.s32.totalorder %v922, 0
    %v925 = vxor.u32 %v919, 2147483648
    %v926 = vsel %vm924, %v911, %v925
    %vm927 = vcmp.eq.s32.totalorder %v922, 2
    %v928 = vxor.u32 %v911, 2147483648
    %v929 = vsel %vm927, %v928, %v919
    %v930 = vsel %vm923, %v926, %v929
    %v931 = vsel %vm920, nan, %v930
    %v932 = vand.u32 2147483647, %v277
    %vm933 = vcmp.le.f32.partialorder %v932, 0.7853982
    %vm934 = vcmp.lt.s32.totalorder %v277, 0
    %v935 = vand.u32 %v277, 2139095040
    %v936 = vshrl.u32 %v935, 23
    %v937 = vsub.s32 %v936, 127
    %v938 = vand.u32 2147483647, %v277
    %v939 = vand.u32 %v938, 8388607
    %v940 = vor.u32 %v939, 8388608
    %v941 = vsub.s32 0, %v940
    %v942 = vadd.s32 %v937, 1
    %vm943 = vcmp.gt.s32.totalorder %v942, 0
    %v944 = vsel %vm943, %v942, 0
    %v945 = vshrl.u32 %v944, 5
    %v946 = vand.u32 %v944, 31
    %v947 = vsub.s32 32, %v946
    %v948 = vshrl.u32 683565275, %v947
    %v949 = vshll.u32 683565275, %v946
    %v950 = vshrl.u32 2475754826, %v947
    %v951 = vor.u32 %v949, %v950
    %v952 = vshll.u32 2475754826, %v946
    %v953 = vshrl.u32 2131351028, %v947
    %v954 = vor.u32 %v952, %v953
    %v955 = vshll.u32 2131351028, %v946
    %v956 = vshrl.u32 2102212464, %v947
    %v957 = vor.u32 %v955, %v956
    %v958 = vshll.u32 2102212464, %v946
    %v959 = vshrl.u32 920167782, %v947
    %v960 = vor.u32 %v958, %v959
    %v961 = vshll.u32 920167782, %v946
    %v962 = vshrl.u32 1326507024, %v947
    %v963 = vor.u32 %v961, %v962
    %vm964 = vcmp.lt.s32.totalorder %v945, 1
    %vm965 = vcmp.lt.s32.totalorder %v945, 2
    %vm966 = vcmp.lt.s32.totalorder %v945, 3
    %vm967 = vcmp.lt.s32.totalorder %v945, 4
    %v968 = vsel %vm964, %v948, %v951
    %v969 = vsel %vm967, %v957, 2102212464
    %v970 = vsel %vm966, %v954, %v969
    %v971 = vsel %vm965, %v968, %v970
    %v972 = vsel %vm964, %v951, %v954
    %v973 = vsel %vm967, %v960, 920167782
    %v974 = vsel %vm966, %v957, %v973
    %v975 = vsel %vm965, %v972, %v974
    %v976 = vsel %vm964, %v954, %v957
    %v977 = vsel %vm967, %v963, 1326507024
    %v978 = vsel %vm966, %v960, %v977
    %v979 = vsel %vm965, %v976, %v978
    %v980 = vshll.u32 %v940, 8
    %v981 = vand.u32 %v980, 65535
    %v982 = vshrl.u32 %v980, 16
    %v983 = vand.u32 %v979, 65535
    %v984 = vshrl.u32 %v979, 16
    %v985 = vmul.u32 %v981, %v983
    %v986 = vmul.u32 %v981, %v984
    %v987 = vmul.u32 %v982, %v983
    %v988 = vmul.u32 %v982, %v984
    %v989 = vshll.u32 %v986, 16
    %v990 = vshrl.u32 %v986, 16
    %v991 = vshll.u32 %v987, 16
    %v992 = vshrl.u32 %v987, 16
    %vm993 = vc.u32 %v985, %v989
    %v994 = vsel %vm993, 1, 0
    %v995 = vadd.s32 %v985, %v989
    %v996 = vadd.s32 %v988, %v994
    %vm997 = vc.u32 %v995, %v991
    %v998 = vsel %vm997, 1, 0
    %v999 = vadd.s32 %v995, %v991
    %v1000 = vadd.s32 %v996, %v998
    %v1001 = vadd.s32 %v1000, %v990
    %v1002 = vadd.s32 %v1001, %v992
    %v1003 = vand.u32 %v980, 65535
    %v1004 = vshrl.u32 %v980, 16
    %v1005 = vand.u32 %v975, 65535
    %v1006 = vshrl.u32 %v975, 16
    %v1007 = vmul.u32 %v1003, %v1005
    %v1008 = vmul.u32 %v1003, %v1006
    %v1009 = vmul.u32 %v1004, %v1005
    %v1010 = vmul.u32 %v1004, %v1006
    %v1011 = vshll.u32 %v1008, 16
    %v1012 = vshrl.u32 %v1008, 16
    %v1013 = vshll.u32 %v1009, 16
    %v1014 = vshrl.u32 %v1009, 16
    %vm1015 = vc.u32 %v1007, %v1011
    %v1016 = vsel %vm1015, 1, 0
    %v1017 = vadd.s32 %v1007, %v1011
    %v1018 = vadd.s32 %v1010, %v1016
    %vm1019 = vc.u32 %v1017, %v1013
    %v1020 = vsel %vm1019, 1, 0
    %v1021 = vadd.s32 %v1017, %v1013
    %v1022 = vadd.s32 %v1018, %v1020
    %v1023 = vadd.s32 %v1022, %v1012
    %v1024 = vadd.s32 %v1023, %v1014
    %v1025 = vmul.u32 %v980, %v971
    %v1026 = vadd.s32 %v1002, %v1021
    %vm1027 = vc.u32 %v1002, %v1021
    %v1028 = vadd.s32 %v1024, 1
    %v1029 = vsel %vm1027, %v1028, %v1024
    %v1030 = vadd.s32 %v1025, %v1029
    %v1031 = vadd.s32 %v1030, 536870912
    %v1032 = vshrl.u32 %v1031, 30
    %v1033 = vshll.u32 %v1032, 30
    %v1034 = vsub.s32 %v1030, %v1033
    %vm1035 = vcmp.lt.s32.totalorder %v1034, 0
    %v1036 = vsub.s32 0, %v1034
    %v1037 = vsel %vm1035, %v1036, %v1034
    %v1038 = vclz %v1037
    %v1039 = vsub.s32 %v1038, 2
    %vm1040 = vcmp.gt.s32.totalorder 0, %v1039
    %v1041 = vsel %vm1040, 0, %v1039
    %v1042 = vsub.s32 32, %v1041
    %v1043 = vshll.u32 %v1034, %v1041
    %v1044 = vshrl.u32 %v1026, %v1042
    %v1045 = vor.u32 %v1043, %v1044
    %v1046 = vsub.s32 4294967266, %v1041
    %v1047 = vadd.s32 %v1046, 127
    %v1048 = vshll.u32 %v1047, 23
    %v1049 = vor.u32 4788187, %v1048
    %v1050 = vand.u32 2147483647, %v1049
    %v1052 = vcvt.s32.f32 %v1045
    %v1053 = vmul.f32 %v1052, %v1050
    %v1054 = vxor.u32 %v1053, 2147483648
    %v1055 = vsel %vm934, %v1054, %v1053
    %v1056 = vsub.s32 4, %v1032
    %v1057 = vsel %vm934, %v1056, %v1032
    %v1058 = vsel %vm933, %v277, %v1055
    %v1059 = vsel %vm933, 0, %v1057
    %v1060 = vmul.f32 %v1058, %v1058
    %v1061 = vmul.f32 %v1060, -0.001358992
    %v1062 = vadd.f32 %v1061, 0.041655596
    %v1063 = vmul.f32 %v1060, %v1062
    %v1064 = vadd.f32 %v1063, -0.4999988
    %v1065 = vmul.f32 %v1060, %v1064
    %v1066 = vadd.f32 1.0, %v1065
    %v1067 = vmul.f32 %v1058, %v1058
    %v1068 = vmul.f32 %v1067, -0.00019511016
    %v1069 = vadd.f32 %v1068, 0.008332121
    %v1070 = vmul.f32 %v1067, %v1069
    %v1071 = vadd.f32 %v1070, -0.16666654
    %v1072 = vmul.f32 %v1067, %v1071
    %v1073 = vadd.f32 %v1072, 1.0
    %v1074 = vmul.f32 %v1073, %v1058
    %vm1075 = vweird.f32 %v277
    %v1076 = vadd.s32 %v1059, 3
    %v1077 = vand.u32 %v1076, 3
    %vm1078 = vcmp.lt.s32.totalorder %v1077, 2
    %vm1079 = vcmp.eq.s32.totalorder %v1077, 0
    %v1080 = vxor.u32 %v1074, 2147483648
    %v1081 = vsel %vm1079, %v1066, %v1080
    %vm1082 = vcmp.eq.s32.totalorder %v1077, 2
    %v1083 = vxor.u32 %v1066, 2147483648
    %v1084 = vsel %vm1082, %v1083, %v1074
    %v1085 = vsel %vm1078, %v1081, %v1084
    %v1086 = vsel %vm1075, nan, %v1085
    %v1087 = vand.u32 2147483647, %v280
    %vm1088 = vcmp.le.f32.partialorder %v1087, 0.7853982
    %vm1089 = vcmp.lt.s32.totalorder %v280, 0
    %v1090 = vand.u32 %v280, 2139095040
    %v1091 = vshrl.u32 %v1090, 23
    %v1092 = vsub.s32 %v1091, 127
    %v1093 = vand.u32 2147483647, %v280
    %v1094 = vand.u32 %v1093, 8388607
    %v1095 = vor.u32 %v1094, 8388608
    %v1096 = vsub.s32 0, %v1095
    %v1097 = vadd.s32 %v1092, 1
    %vm1098 = vcmp.gt.s32.totalorder %v1097, 0
    %v1099 = vsel %vm1098, %v1097, 0
    %v1100 = vshrl.u32 %v1099, 5
    %v1101 = vand.u32 %v1099, 31
    %v1102 = vsub.s32 32, %v1101
    %v1103 = vshrl.u32 683565275, %v1102
    %v1104 = vshll.u32 683565275, %v1101
    %v1105 = vshrl.u32 2475754826, %v1102
    %v1106 = vor.u32 %v1104, %v1105
    %v1107 = vshll.u32 2475754826, %v1101
    %v1108 = vshrl.u32 2131351028, %v1102
    %v1109 = vor.u32 %v1107, %v1108
    %v1110 = vshll.u32 2131351028, %v1101
    %v1111 = vshrl.u32 2102212464, %v1102
    %v1112 = vor.u32 %v1110, %v1111
    %v1113 = vshll.u32 2102212464, %v1101
    %v1114 = vshrl.u32 920167782, %v1102
    %v1115 = vor.u32 %v1113, %v1114
    %v1116 = vshll.u32 920167782, %v1101
    %v1117 = vshrl.u32 1326507024, %v1102
    %v1118 = vor.u32 %v1116, %v1117
    %vm1119 = vcmp.lt.s32.totalorder %v1100, 1
    %vm1120 = vcmp.lt.s32.totalorder %v1100, 2
    %vm1121 = vcmp.lt.s32.totalorder %v1100, 3
    %vm1122 = vcmp.lt.s32.totalorder %v1100, 4
    %v1123 = vsel %vm1119, %v1103, %v1106
    %v1124 = vsel %vm1122, %v1112, 2102212464
    %v1125 = vsel %vm1121, %v1109, %v1124
    %v1126 = vsel %vm1120, %v1123, %v1125
    %v1127 = vsel %vm1119, %v1106, %v1109
    %v1128 = vsel %vm1122, %v1115, 920167782
    %v1129 = vsel %vm1121, %v1112, %v1128
    %v1130 = vsel %vm1120, %v1127, %v1129
    %v1131 = vsel %vm1119, %v1109, %v1112
    %v1132 = vsel %vm1122, %v1118, 1326507024
    %v1133 = vsel %vm1121, %v1115, %v1132
    %v1134 = vsel %vm1120, %v1131, %v1133
    %v1135 = vshll.u32 %v1095, 8
    %v1136 = vand.u32 %v1135, 65535
    %v1137 = vshrl.u32 %v1135, 16
    %v1138 = vand.u32 %v1134, 65535
    %v1139 = vshrl.u32 %v1134, 16
    %v1140 = vmul.u32 %v1136, %v1138
    %v1141 = vmul.u32 %v1136, %v1139
    %v1142 = vmul.u32 %v1137, %v1138
    %v1143 = vmul.u32 %v1137, %v1139
    %v1144 = vshll.u32 %v1141, 16
    %v1145 = vshrl.u32 %v1141, 16
    %v1146 = vshll.u32 %v1142, 16
    %v1147 = vshrl.u32 %v1142, 16
    %vm1148 = vc.u32 %v1140, %v1144
    %v1149 = vsel %vm1148, 1, 0
    %v1150 = vadd.s32 %v1140, %v1144
    %v1151 = vadd.s32 %v1143, %v1149
    %vm1152 = vc.u32 %v1150, %v1146
    %v1153 = vsel %vm1152, 1, 0
    %v1154 = vadd.s32 %v1150, %v1146
    %v1155 = vadd.s32 %v1151, %v1153
    %v1156 = vadd.s32 %v1155, %v1145
    %v1157 = vadd.s32 %v1156, %v1147
    %v1158 = vand.u32 %v1135, 65535
    %v1159 = vshrl.u32 %v1135, 16
    %v1160 = vand.u32 %v1130, 65535
    %v1161 = vshrl.u32 %v1130, 16
    %v1162 = vmul.u32 %v1158, %v1160
    %v1163 = vmul.u32 %v1158, %v1161
    %v1164 = vmul.u32 %v1159, %v1160
    %v1165 = vmul.u32 %v1159, %v1161
    %v1166 = vshll.u32 %v1163, 16
    %v1167 = vshrl.u32 %v1163, 16
    %v1168 = vshll.u32 %v1164, 16
    %v1169 = vshrl.u32 %v1164, 16
    %vm1170 = vc.u32 %v1162, %v1166
    %v1171 = vsel %vm1170, 1, 0
    %v1172 = vadd.s32 %v1162, %v1166
    %v1173 = vadd.s32 %v1165, %v1171
    %vm1174 = vc.u32 %v1172, %v1168
    %v1175 = vsel %vm1174, 1, 0
    %v1176 = vadd.s32 %v1172, %v1168
    %v1177 = vadd.s32 %v1173, %v1175
    %v1178 = vadd.s32 %v1177, %v1167
    %v1179 = vadd.s32 %v1178, %v1169
    %v1180 = vmul.u32 %v1135, %v1126
    %v1181 = vadd.s32 %v1157, %v1176
    %vm1182 = vc.u32 %v1157, %v1176
    %v1183 = vadd.s32 %v1179, 1
    %v1184 = vsel %vm1182, %v1183, %v1179
    %v1185 = vadd.s32 %v1180, %v1184
    %v1186 = vadd.s32 %v1185, 536870912
    %v1187 = vshrl.u32 %v1186, 30
    %v1188 = vshll.u32 %v1187, 30
    %v1189 = vsub.s32 %v1185, %v1188
    %vm1190 = vcmp.lt.s32.totalorder %v1189, 0
    %v1191 = vsub.s32 0, %v1189
    %v1192 = vsel %vm1190, %v1191, %v1189
    %v1193 = vclz %v1192
    %v1194 = vsub.s32 %v1193, 2
    %vm1195 = vcmp.gt.s32.totalorder 0, %v1194
    %v1196 = vsel %vm1195, 0, %v1194
    %v1197 = vsub.s32 32, %v1196
    %v1198 = vshll.u32 %v1189, %v1196
    %v1199 = vshrl.u32 %v1181, %v1197
    %v1200 = vor.u32 %v1198, %v1199
    %v1201 = vsub.s32 4294967266, %v1196
    %v1202 = vadd.s32 %v1201, 127
    %v1203 = vshll.u32 %v1202, 23
    %v1204 = vor.u32 4788187, %v1203
    %v1205 = vand.u32 2147483647, %v1204
    %v1207 = vcvt.s32.f32 %v1200
    %v1208 = vmul.f32 %v1207, %v1205
    %v1209 = vxor.u32 %v1208, 2147483648
    %v1210 = vsel %vm1089, %v1209, %v1208
    %v1211 = vsub.s32 4, %v1187
    %v1212 = vsel %vm1089, %v1211, %v1187
    %v1213 = vsel %vm1088, %v280, %v1210
    %v1214 = vsel %vm1088, 0, %v1212
    %v1215 = vmul.f32 %v1213, %v1213
    %v1216 = vmul.f32 %v1215, -0.001358992
    %v1217 = vadd.f32 %v1216, 0.041655596
    %v1218 = vmul.f32 %v1215, %v1217
    %v1219 = vadd.f32 %v1218, -0.4999988
    %v1220 = vmul.f32 %v1215, %v1219
    %v1221 = vadd.f32 1.0, %v1220
    %v1222 = vmul.f32 %v1213, %v1213
    %v1223 = vmul.f32 %v1222, -0.00019511016
    %v1224 = vadd.f32 %v1223, 0.008332121
    %v1225 = vmul.f32 %v1222, %v1224
    %v1226 = vadd.f32 %v1225, -0.16666654
    %v1227 = vmul.f32 %v1222, %v1226
    %v1228 = vadd.f32 %v1227, 1.0
    %v1229 = vmul.f32 %v1228, %v1213
    %vm1230 = vweird.f32 %v280
    %v1231 = vadd.s32 %v1214, 3
    %v1232 = vand.u32 %v1231, 3
    %vm1233 = vcmp.lt.s32.totalorder %v1232, 2
    %vm1234 = vcmp.eq.s32.totalorder %v1232, 0
    %v1235 = vxor.u32 %v1229, 2147483648
    %v1236 = vsel %vm1234, %v1221, %v1235
    %vm1237 = vcmp.eq.s32.totalorder %v1232, 2
    %v1238 = vxor.u32 %v1221, 2147483648
    %v1239 = vsel %vm1237, %v1238, %v1229
    %v1240 = vsel %vm1233, %v1236, %v1239
    %v1241 = vsel %vm1230, nan, %v1240
    %v1242 = vand.u32 2147483647, %v283
    %vm1243 = vcmp.le.f32.partialorder %v1242, 0.7853982
    %vm1244 = vcmp.lt.s32.totalorder %v283, 0
    %v1245 = vand.u32 %v283, 2139095040
    %v1246 = vshrl.u32 %v1245, 23
    %v1247 = vsub.s32 %v1246, 127
    %v1248 = vand.u32 2147483647, %v283
    %v1249 = vand.u32 %v1248, 8388607
    %v1250 = vor.u32 %v1249, 8388608
    %v1251 = vsub.s32 0, %v1250
    %v1252 = vadd.s32 %v1247, 1
    %vm1253 = vcmp.gt.s32.totalorder %v1252, 0
    %v1254 = vsel %vm1253, %v1252, 0
    %v1255 = vshrl.u32 %v1254, 5
    %v1256 = vand.u32 %v1254, 31
    %v1257 = vsub.s32 32, %v1256
    %v1258 = vshrl.u32 683565275, %v1257
    %v1259 = vshll.u32 683565275, %v1256
    %v1260 = vshrl.u32 2475754826, %v1257
    %v1261 = vor.u32 %v1259, %v1260
    %v1262 = vshll.u32 2475754826, %v1256
    %v1263 = vshrl.u32 2131351028, %v1257
    %v1264 = vor.u32 %v1262, %v1263
    %v1265 = vshll.u32 2131351028, %v1256
    %v1266 = vshrl.u32 2102212464, %v1257
    %v1267 = vor.u32 %v1265, %v1266
    %v1268 = vshll.u32 2102212464, %v1256
    %v1269 = vshrl.u32 920167782, %v1257
    %v1270 = vor.u32 %v1268, %v1269
    %v1271 = vshll.u32 920167782, %v1256
    %v1272 = vshrl.u32 1326507024, %v1257
    %v1273 = vor.u32 %v1271, %v1272
    %vm1274 = vcmp.lt.s32.totalorder %v1255, 1
    %vm1275 = vcmp.lt.s32.totalorder %v1255, 2
    %vm1276 = vcmp.lt.s32.totalorder %v1255, 3
    %vm1277 = vcmp.lt.s32.totalorder %v1255, 4
    %v1278 = vsel %vm1274, %v1258, %v1261
    %v1279 = vsel %vm1277, %v1267, 2102212464
    %v1280 = vsel %vm1276, %v1264, %v1279
    %v1281 = vsel %vm1275, %v1278, %v1280
    %v1282 = vsel %vm1274, %v1261, %v1264
    %v1283 = vsel %vm1277, %v1270, 920167782
    %v1284 = vsel %vm1276, %v1267, %v1283
    %v1285 = vsel %vm1275, %v1282, %v1284
    %v1286 = vsel %vm1274, %v1264, %v1267
    %v1287 = vsel %vm1277, %v1273, 1326507024
    %v1288 = vsel %vm1276, %v1270, %v1287
    %v1289 = vsel %vm1275, %v1286, %v1288
    %v1290 = vshll.u32 %v1250, 8
    %v1291 = vand.u32 %v1290, 65535
    %v1292 = vshrl.u32 %v1290, 16
    %v1293 = vand.u32 %v1289, 65535
    %v1294 = vshrl.u32 %v1289, 16
    %v1295 = vmul.u32 %v1291, %v1293
    %v1296 = vmul.u32 %v1291, %v1294
    %v1297 = vmul.u32 %v1292, %v1293
    %v1298 = vmul.u32 %v1292, %v1294
    %v1299 = vshll.u32 %v1296, 16
    %v1300 = vshrl.u32 %v1296, 16
    %v1301 = vshll.u32 %v1297, 16
    %v1302 = vshrl.u32 %v1297, 16
    %vm1303 = vc.u32 %v1295, %v1299
    %v1304 = vsel %vm1303, 1, 0
    %v1305 = vadd.s32 %v1295, %v1299
    %v1306 = vadd.s32 %v1298, %v1304
    %vm1307 = vc.u32 %v1305, %v1301
    %v1308 = vsel %vm1307, 1, 0
    %v1309 = vadd.s32 %v1305, %v1301
    %v1310 = vadd.s32 %v1306, %v1308
    %v1311 = vadd.s32 %v1310, %v1300
    %v1312 = vadd.s32 %v1311, %v1302
    %v1313 = vand.u32 %v1290, 65535
    %v1314 = vshrl.u32 %v1290, 16
    %v1315 = vand.u32 %v1285, 65535
    %v1316 = vshrl.u32 %v1285, 16
    %v1317 = vmul.u32 %v1313, %v1315
    %v1318 = vmul.u32 %v1313, %v1316
    %v1319 = vmul.u32 %v1314, %v1315
    %v1320 = vmul.u32 %v1314, %v1316
    %v1321 = vshll.u32 %v1318, 16
    %v1322 = vshrl.u32 %v1318, 16
    %v1323 = vshll.u32 %v1319, 16
    %v1324 = vshrl.u32 %v1319, 16
    %vm1325 = vc.u32 %v1317, %v1321
    %v1326 = vsel %vm1325, 1, 0
    %v1327 = vadd.s32 %v1317, %v1321
    %v1328 = vadd.s32 %v1320, %v1326
    %vm1329 = vc.u32 %v1327, %v1323
    %v1330 = vsel %vm1329, 1, 0
    %v1331 = vadd.s32 %v1327, %v1323
    %v1332 = vadd.s32 %v1328, %v1330
    %v1333 = vadd.s32 %v1332, %v1322
    %v1334 = vadd.s32 %v1333, %v1324
    %v1335 = vmul.u32 %v1290, %v1281
    %v1336 = vadd.s32 %v1312, %v1331
    %vm1337 = vc.u32 %v1312, %v1331
    %v1338 = vadd.s32 %v1334, 1
    %v1339 = vsel %vm1337, %v1338, %v1334
    %v1340 = vadd.s32 %v1335, %v1339
    %v1341 = vadd.s32 %v1340, 536870912
    %v1342 = vshrl.u32 %v1341, 30
    %v1343 = vshll.u32 %v1342, 30
    %v1344 = vsub.s32 %v1340, %v1343
    %vm1345 = vcmp.lt.s32.totalorder %v1344, 0
    %v1346 = vsub.s32 0, %v1344
    %v1347 = vsel %vm1345, %v1346, %v1344
    %v1348 = vclz %v1347
    %v1349 = vsub.s32 %v1348, 2
    %vm1350 = vcmp.gt.s32.totalorder 0, %v1349
    %v1351 = vsel %vm1350, 0, %v1349
    %v1352 = vsub.s32 32, %v1351
    %v1353 = vshll.u32 %v1344, %v1351
    %v1354 = vshrl.u32 %v1336, %v1352
    %v1355 = vor.u32 %v1353, %v1354
    %v1356 = vsub.s32 4294967266, %v1351
    %v1357 = vadd.s32 %v1356, 127
    %v1358 = vshll.u32 %v1357, 23
    %v1359 = vor.u32 4788187, %v1358
    %v1360 = vand.u32 2147483647, %v1359
    %v1362 = vcvt.s32.f32 %v1355
    %v1363 = vmul.f32 %v1362, %v1360
    %v1364 = vxor.u32 %v1363, 2147483648
    %v1365 = vsel %vm1244, %v1364, %v1363
    %v1366 = vsub.s32 4, %v1342
    %v1367 = vsel %vm1244, %v1366, %v1342
    %v1368 = vsel %vm1243, %v283, %v1365
    %v1369 = vsel %vm1243, 0, %v1367
    %v1370 = vmul.f32 %v1368, %v1368
    %v1371 = vmul.f32 %v1370, -0.001358992
    %v1372 = vadd.f32 %v1371, 0.041655596
    %v1373 = vmul.f32 %v1370, %v1372
    %v1374 = vadd.f32 %v1373, -0.4999988
    %v1375 = vmul.f32 %v1370, %v1374
    %v1376 = vadd.f32 1.0, %v1375
    %v1377 = vmul.f32 %v1368, %v1368
    %v1378 = vmul.f32 %v1377, -0.00019511016
    %v1379 = vadd.f32 %v1378, 0.008332121
    %v1380 = vmul.f32 %v1377, %v1379
    %v1381 = vadd.f32 %v1380, -0.16666654
    %v1382 = vmul.f32 %v1377, %v1381
    %v1383 = vadd.f32 %v1382, 1.0
    %v1384 = vmul.f32 %v1383, %v1368
    %vm1385 = vweird.f32 %v283
    %v1386 = vadd.s32 %v1369, 3
    %v1387 = vand.u32 %v1386, 3
    %vm1388 = vcmp.lt.s32.totalorder %v1387, 2
    %vm1389 = vcmp.eq.s32.totalorder %v1387, 0
    %v1390 = vxor.u32 %v1384, 2147483648
    %v1391 = vsel %vm1389, %v1376, %v1390
    %vm1392 = vcmp.eq.s32.totalorder %v1387, 2
    %v1393 = vxor.u32 %v1376, 2147483648
    %v1394 = vsel %vm1392, %v1393, %v1384
    %v1395 = vsel %vm1388, %v1391, %v1394
    %v1396 = vsel %vm1385, nan, %v1395
    %v1397 = vand.u32 2147483647, %v286
    %vm1398 = vcmp.le.f32.partialorder %v1397, 0.7853982
    %vm1399 = vcmp.lt.s32.totalorder %v286, 0
    %v1400 = vand.u32 %v286, 2139095040
    %v1401 = vshrl.u32 %v1400, 23
    %v1402 = vsub.s32 %v1401, 127
    %v1403 = vand.u32 2147483647, %v286
    %v1404 = vand.u32 %v1403, 8388607
    %v1405 = vor.u32 %v1404, 8388608
    %v1406 = vsub.s32 0, %v1405
    %v1407 = vadd.s32 %v1402, 1
    %vm1408 = vcmp.gt.s32.totalorder %v1407, 0
    %v1409 = vsel %vm1408, %v1407, 0
    %v1410 = vshrl.u32 %v1409, 5
    %v1411 = vand.u32 %v1409, 31
    %v1412 = vsub.s32 32, %v1411
    %v1413 = vshrl.u32 683565275, %v1412
    %v1414 = vshll.u32 683565275, %v1411
    %v1415 = vshrl.u32 2475754826, %v1412
    %v1416 = vor.u32 %v1414, %v1415
    %v1417 = vshll.u32 2475754826, %v1411
    %v1418 = vshrl.u32 2131351028, %v1412
    %v1419 = vor.u32 %v1417, %v1418
    %v1420 = vshll.u32 2131351028, %v1411
    %v1421 = vshrl.u32 2102212464, %v1412
    %v1422 = vor.u32 %v1420, %v1421
    %v1423 = vshll.u32 2102212464, %v1411
    %v1424 = vshrl.u32 920167782, %v1412
    %v1425 = vor.u32 %v1423, %v1424
    %v1426 = vshll.u32 920167782, %v1411
    %v1427 = vshrl.u32 1326507024, %v1412
    %v1428 = vor.u32 %v1426, %v1427
    %vm1429 = vcmp.lt.s32.totalorder %v1410, 1
    %vm1430 = vcmp.lt.s32.totalorder %v1410, 2
    %vm1431 = vcmp.lt.s32.totalorder %v1410, 3
    %vm1432 = vcmp.lt.s32.totalorder %v1410, 4
    %v1433 = vsel %vm1429, %v1413, %v1416
    %v1434 = vsel %vm1432, %v1422, 2102212464
    %v1435 = vsel %vm1431, %v1419, %v1434
    %v1436 = vsel %vm1430, %v1433, %v1435
    %v1437 = vsel %vm1429, %v1416, %v1419
    %v1438 = vsel %vm1432, %v1425, 920167782
    %v1439 = vsel %vm1431, %v1422, %v1438
    %v1440 = vsel %vm1430, %v1437, %v1439
    %v1441 = vsel %vm1429, %v1419, %v1422
    %v1442 = vsel %vm1432, %v1428, 1326507024
    %v1443 = vsel %vm1431, %v1425, %v1442
    %v1444 = vsel %vm1430, %v1441, %v1443
    %v1445 = vshll.u32 %v1405, 8
    %v1446 = vand.u32 %v1445, 65535
    %v1447 = vshrl.u32 %v1445, 16
    %v1448 = vand.u32 %v1444, 65535
    %v1449 = vshrl.u32 %v1444, 16
    %v1450 = vmul.u32 %v1446, %v1448
    %v1451 = vmul.u32 %v1446, %v1449
    %v1452 = vmul.u32 %v1447, %v1448
    %v1453 = vmul.u32 %v1447, %v1449
    %v1454 = vshll.u32 %v1451, 16
    %v1455 = vshrl.u32 %v1451, 16
    %v1456 = vshll.u32 %v1452, 16
    %v1457 = vshrl.u32 %v1452, 16
    %vm1458 = vc.u32 %v1450, %v1454
    %v1459 = vsel %vm1458, 1, 0
    %v1460 = vadd.s32 %v1450, %v1454
    %v1461 = vadd.s32 %v1453, %v1459
    %vm1462 = vc.u32 %v1460, %v1456
    %v1463 = vsel %vm1462, 1, 0
    %v1464 = vadd.s32 %v1460, %v1456
    %v1465 = vadd.s32 %v1461, %v1463
    %v1466 = vadd.s32 %v1465, %v1455
    %v1467 = vadd.s32 %v1466, %v1457
    %v1468 = vand.u32 %v1445, 65535
    %v1469 = vshrl.u32 %v1445, 16
    %v1470 = vand.u32 %v1440, 65535
    %v1471 = vshrl.u32 %v1440, 16
    %v1472 = vmul.u32 %v1468, %v1470
    %v1473 = vmul.u32 %v1468, %v1471
    %v1474 = vmul.u32 %v1469, %v1470
    %v1475 = vmul.u32 %v1469, %v1471
    %v1476 = vshll.u32 %v1473, 16
    %v1477 = vshrl.u32 %v1473, 16
    %v1478 = vshll.u32 %v1474, 16
    %v1479 = vshrl.u32 %v1474, 16
    %vm1480 = vc.u32 %v1472, %v1476
    %v1481 = vsel %vm1480, 1, 0
    %v1482 = vadd.s32 %v1472, %v1476
    %v1483 = vadd.s32 %v1475, %v1481
    %vm1484 = vc.u32 %v1482, %v1478
    %v1485 = vsel %vm1484, 1, 0
    %v1486 = vadd.s32 %v1482, %v1478
    %v1487 = vadd.s32 %v1483, %v1485
    %v1488 = vadd.s32 %v1487, %v1477
    %v1489 = vadd.s32 %v1488, %v1479
    %v1490 = vmul.u32 %v1445, %v1436
    %v1491 = vadd.s32 %v1467, %v1486
    %vm1492 = vc.u32 %v1467, %v1486
    %v1493 = vadd.s32 %v1489, 1
    %v1494 = vsel %vm1492, %v1493, %v1489
    %v1495 = vadd.s32 %v1490, %v1494
    %v1496 = vadd.s32 %v1495, 536870912
    %v1497 = vshrl.u32 %v1496, 30
    %v1498 = vshll.u32 %v1497, 30
    %v1499 = vsub.s32 %v1495, %v1498
    %vm1500 = vcmp.lt.s32.totalorder %v1499, 0
    %v1501 = vsub.s32 0, %v1499
    %v1502 = vsel %vm1500, %v1501, %v1499
    %v1503 = vclz %v1502
    %v1504 = vsub.s32 %v1503, 2
    %vm1505 = vcmp.gt.s32.totalorder 0, %v1504
    %v1506 = vsel %vm1505, 0, %v1504
    %v1507 = vsub.s32 32, %v1506
    %v1508 = vshll.u32 %v1499, %v1506
    %v1509 = vshrl.u32 %v1491, %v1507
    %v1510 = vor.u32 %v1508, %v1509
    %v1511 = vsub.s32 4294967266, %v1506
    %v1512 = vadd.s32 %v1511, 127
    %v1513 = vshll.u32 %v1512, 23
    %v1514 = vor.u32 4788187, %v1513
    %v1515 = vand.u32 2147483647, %v1514
    %v1517 = vcvt.s32.f32 %v1510
    %v1518 = vmul.f32 %v1517, %v1515
    %v1519 = vxor.u32 %v1518, 2147483648
    %v1520 = vsel %vm1399, %v1519, %v1518
    %v1521 = vsub.s32 4, %v1497
    %v1522 = vsel %vm1399, %v1521, %v1497
    %v1523 = vsel %vm1398, %v286, %v1520
    %v1524 = vsel %vm1398, 0, %v1522
    %v1525 = vmul.f32 %v1523, %v1523
    %v1526 = vmul.f32 %v1525, -0.001358992
    %v1527 = vadd.f32 %v1526, 0.041655596
    %v1528 = vmul.f32 %v1525, %v1527
    %v1529 = vadd.f32 %v1528, -0.4999988
    %v1530 = vmul.f32 %v1525, %v1529
    %v1531 = vadd.f32 1.0, %v1530
    %v1532 = vmul.f32 %v1523, %v1523
    %v1533 = vmul.f32 %v1532, -0.00019511016
    %v1534 = vadd.f32 %v1533, 0.008332121
    %v1535 = vmul.f32 %v1532, %v1534
    %v1536 = vadd.f32 %v1535, -0.16666654
    %v1537 = vmul.f32 %v1532, %v1536
    %v1538 = vadd.f32 %v1537, 1.0
    %v1539 = vmul.f32 %v1538, %v1523
    %vm1540 = vweird.f32 %v286
    %v1541 = vadd.s32 %v1524, 3
    %v1542 = vand.u32 %v1541, 3
    %vm1543 = vcmp.lt.s32.totalorder %v1542, 2
    %vm1544 = vcmp.eq.s32.totalorder %v1542, 0
    %v1545 = vxor.u32 %v1539, 2147483648
    %v1546 = vsel %vm1544, %v1531, %v1545
    %vm1547 = vcmp.eq.s32.totalorder %v1542, 2
    %v1548 = vxor.u32 %v1531, 2147483648
    %v1549 = vsel %vm1547, %v1548, %v1539
    %v1550 = vsel %vm1543, %v1546, %v1549
    %v1551 = vsel %vm1540, nan, %v1550
    %v1552 = vand.u32 2147483647, %v289
    %vm1553 = vcmp.le.f32.partialorder %v1552, 0.7853982
    %vm1554 = vcmp.lt.s32.totalorder %v289, 0
    %v1555 = vand.u32 %v289, 2139095040
    %v1556 = vshrl.u32 %v1555, 23
    %v1557 = vsub.s32 %v1556, 127
    %v1558 = vand.u32 2147483647, %v289
    %v1559 = vand.u32 %v1558, 8388607
    %v1560 = vor.u32 %v1559, 8388608
    %v1561 = vsub.s32 0, %v1560
    %v1562 = vadd.s32 %v1557, 1
    %vm1563 = vcmp.gt.s32.totalorder %v1562, 0
    %v1564 = vsel %vm1563, %v1562, 0
    %v1565 = vshrl.u32 %v1564, 5
    %v1566 = vand.u32 %v1564, 31
    %v1567 = vsub.s32 32, %v1566
    %v1568 = vshrl.u32 683565275, %v1567
    %v1569 = vshll.u32 683565275, %v1566
    %v1570 = vshrl.u32 2475754826, %v1567
    %v1571 = vor.u32 %v1569, %v1570
    %v1572 = vshll.u32 2475754826, %v1566
    %v1573 = vshrl.u32 2131351028, %v1567
    %v1574 = vor.u32 %v1572, %v1573
    %v1575 = vshll.u32 2131351028, %v1566
    %v1576 = vshrl.u32 2102212464, %v1567
    %v1577 = vor.u32 %v1575, %v1576
    %v1578 = vshll.u32 2102212464, %v1566
    %v1579 = vshrl.u32 920167782, %v1567
    %v1580 = vor.u32 %v1578, %v1579
    %v1581 = vshll.u32 920167782, %v1566
    %v1582 = vshrl.u32 1326507024, %v1567
    %v1583 = vor.u32 %v1581, %v1582
    %vm1584 = vcmp.lt.s32.totalorder %v1565, 1
    %vm1585 = vcmp.lt.s32.totalorder %v1565, 2
    %vm1586 = vcmp.lt.s32.totalorder %v1565, 3
    %vm1587 = vcmp.lt.s32.totalorder %v1565, 4
    %v1588 = vsel %vm1584, %v1568, %v1571
    %v1589 = vsel %vm1587, %v1577, 2102212464
    %v1590 = vsel %vm1586, %v1574, %v1589
    %v1591 = vsel %vm1585, %v1588, %v1590
    %v1592 = vsel %vm1584, %v1571, %v1574
    %v1593 = vsel %vm1587, %v1580, 920167782
    %v1594 = vsel %vm1586, %v1577, %v1593
    %v1595 = vsel %vm1585, %v1592, %v1594
    %v1596 = vsel %vm1584, %v1574, %v1577
    %v1597 = vsel %vm1587, %v1583, 1326507024
    %v1598 = vsel %vm1586, %v1580, %v1597
    %v1599 = vsel %vm1585, %v1596, %v1598
    %v1600 = vshll.u32 %v1560, 8
    %v1601 = vand.u32 %v1600, 65535
    %v1602 = vshrl.u32 %v1600, 16
    %v1603 = vand.u32 %v1599, 65535
    %v1604 = vshrl.u32 %v1599, 16
    %v1605 = vmul.u32 %v1601, %v1603
    %v1606 = vmul.u32 %v1601, %v1604
    %v1607 = vmul.u32 %v1602, %v1603
    %v1608 = vmul.u32 %v1602, %v1604
    %v1609 = vshll.u32 %v1606, 16
    %v1610 = vshrl.u32 %v1606, 16
    %v1611 = vshll.u32 %v1607, 16
    %v1612 = vshrl.u32 %v1607, 16
    %vm1613 = vc.u32 %v1605, %v1609
    %v1614 = vsel %vm1613, 1, 0
    %v1615 = vadd.s32 %v1605, %v1609
    %v1616 = vadd.s32 %v1608, %v1614
    %vm1617 = vc.u32 %v1615, %v1611
    %v1618 = vsel %vm1617, 1, 0
    %v1619 = vadd.s32 %v1615, %v1611
    %v1620 = vadd.s32 %v1616, %v1618
    %v1621 = vadd.s32 %v1620, %v1610
    %v1622 = vadd.s32 %v1621, %v1612
    %v1623 = vand.u32 %v1600, 65535
    %v1624 = vshrl.u32 %v1600, 16
    %v1625 = vand.u32 %v1595, 65535
    %v1626 = vshrl.u32 %v1595, 16
    %v1627 = vmul.u32 %v1623, %v1625
    %v1628 = vmul.u32 %v1623, %v1626
    %v1629 = vmul.u32 %v1624, %v1625
    %v1630 = vmul.u32 %v1624, %v1626
    %v1631 = vshll.u32 %v1628, 16
    %v1632 = vshrl.u32 %v1628, 16
    %v1633 = vshll.u32 %v1629, 16
    %v1634 = vshrl.u32 %v1629, 16
    %vm1635 = vc.u32 %v1627, %v1631
    %v1636 = vsel %vm1635, 1, 0
    %v1637 = vadd.s32 %v1627, %v1631
    %v1638 = vadd.s32 %v1630, %v1636
    %vm1639 = vc.u32 %v1637, %v1633
    %v1640 = vsel %vm1639, 1, 0
    %v1641 = vadd.s32 %v1637, %v1633
    %v1642 = vadd.s32 %v1638, %v1640
    %v1643 = vadd.s32 %v1642, %v1632
    %v1644 = vadd.s32 %v1643, %v1634
    %v1645 = vmul.u32 %v1600, %v1591
    %v1646 = vadd.s32 %v1622, %v1641
    %vm1647 = vc.u32 %v1622, %v1641
    %v1648 = vadd.s32 %v1644, 1
    %v1649 = vsel %vm1647, %v1648, %v1644
    %v1650 = vadd.s32 %v1645, %v1649
    %v1651 = vadd.s32 %v1650, 536870912
    %v1652 = vshrl.u32 %v1651, 30
    %v1653 = vshll.u32 %v1652, 30
    %v1654 = vsub.s32 %v1650, %v1653
    %vm1655 = vcmp.lt.s32.totalorder %v1654, 0
    %v1656 = vsub.s32 0, %v1654
    %v1657 = vsel %vm1655, %v1656, %v1654
    %v1658 = vclz %v1657
    %v1659 = vsub.s32 %v1658, 2
    %vm1660 = vcmp.gt.s32.totalorder 0, %v1659
    %v1661 = vsel %vm1660, 0, %v1659
    %v1662 = vsub.s32 32, %v1661
    %v1663 = vshll.u32 %v1654, %v1661
    %v1664 = vshrl.u32 %v1646, %v1662
    %v1665 = vor.u32 %v1663, %v1664
    %v1666 = vsub.s32 4294967266, %v1661
    %v1667 = vadd.s32 %v1666, 127
    %v1668 = vshll.u32 %v1667, 23
    %v1669 = vor.u32 4788187, %v1668
    %v1670 = vand.u32 2147483647, %v1669
    %v1672 = vcvt.s32.f32 %v1665
    %v1673 = vmul.f32 %v1672, %v1670
    %v1674 = vxor.u32 %v1673, 2147483648
    %v1675 = vsel %vm1554, %v1674, %v1673
    %v1676 = vsub.s32 4, %v1652
    %v1677 = vsel %vm1554, %v1676, %v1652
    %v1678 = vsel %vm1553, %v289, %v1675
    %v1679 = vsel %vm1553, 0, %v1677
    %v1680 = vmul.f32 %v1678, %v1678
    %v1681 = vmul.f32 %v1680, -0.001358992
    %v1682 = vadd.f32 %v1681, 0.041655596
    %v1683 = vmul.f32 %v1680, %v1682
    %v1684 = vadd.f32 %v1683, -0.4999988
    %v1685 = vmul.f32 %v1680, %v1684
    %v1686 = vadd.f32 1.0, %v1685
    %v1687 = vmul.f32 %v1678, %v1678
    %v1688 = vmul.f32 %v1687, -0.00019511016
    %v1689 = vadd.f32 %v1688, 0.008332121
    %v1690 = vmul.f32 %v1687, %v1689
    %v1691 = vadd.f32 %v1690, -0.16666654
    %v1692 = vmul.f32 %v1687, %v1691
    %v1693 = vadd.f32 %v1692, 1.0
    %v1694 = vmul.f32 %v1693, %v1678
    %vm1695 = vweird.f32 %v289
    %v1696 = vadd.s32 %v1679, 3
    %v1697 = vand.u32 %v1696, 3
    %vm1698 = vcmp.lt.s32.totalorder %v1697, 2
    %vm1699 = vcmp.eq.s32.totalorder %v1697, 0
    %v1700 = vxor.u32 %v1694, 2147483648
    %v1701 = vsel %vm1699, %v1686, %v1700
    %vm1702 = vcmp.eq.s32.totalorder %v1697, 2
    %v1703 = vxor.u32 %v1686, 2147483648
    %v1704 = vsel %vm1702, %v1703, %v1694
    %v1705 = vsel %vm1698, %v1701, %v1704
    %v1706 = vsel %vm1695, nan, %v1705
    %v1707 = vand.u32 2147483647, %v292
    %vm1708 = vcmp.le.f32.partialorder %v1707, 0.7853982
    %vm1709 = vcmp.lt.s32.totalorder %v292, 0
    %v1710 = vand.u32 %v292, 2139095040
    %v1711 = vshrl.u32 %v1710, 23
    %v1712 = vsub.s32 %v1711, 127
    %v1713 = vand.u32 2147483647, %v292
    %v1714 = vand.u32 %v1713, 8388607
    %v1715 = vor.u32 %v1714, 8388608
    %v1716 = vsub.s32 0, %v1715
    %v1717 = vadd.s32 %v1712, 1
    %vm1718 = vcmp.gt.s32.totalorder %v1717, 0
    %v1719 = vsel %vm1718, %v1717, 0
    %v1720 = vshrl.u32 %v1719, 5
    %v1721 = vand.u32 %v1719, 31
    %v1722 = vsub.s32 32, %v1721
    %v1723 = vshrl.u32 683565275, %v1722
    %v1724 = vshll.u32 683565275, %v1721
    %v1725 = vshrl.u32 2475754826, %v1722
    %v1726 = vor.u32 %v1724, %v1725
    %v1727 = vshll.u32 2475754826, %v1721
    %v1728 = vshrl.u32 2131351028, %v1722
    %v1729 = vor.u32 %v1727, %v1728
    %v1730 = vshll.u32 2131351028, %v1721
    %v1731 = vshrl.u32 2102212464, %v1722
    %v1732 = vor.u32 %v1730, %v1731
    %v1733 = vshll.u32 2102212464, %v1721
    %v1734 = vshrl.u32 920167782, %v1722
    %v1735 = vor.u32 %v1733, %v1734
    %v1736 = vshll.u32 920167782, %v1721
    %v1737 = vshrl.u32 1326507024, %v1722
    %v1738 = vor.u32 %v1736, %v1737
    %vm1739 = vcmp.lt.s32.totalorder %v1720, 1
    %vm1740 = vcmp.lt.s32.totalorder %v1720, 2
    %vm1741 = vcmp.lt.s32.totalorder %v1720, 3
    %vm1742 = vcmp.lt.s32.totalorder %v1720, 4
    %v1743 = vsel %vm1739, %v1723, %v1726
    %v1744 = vsel %vm1742, %v1732, 2102212464
    %v1745 = vsel %vm1741, %v1729, %v1744
    %v1746 = vsel %vm1740, %v1743, %v1745
    %v1747 = vsel %vm1739, %v1726, %v1729
    %v1748 = vsel %vm1742, %v1735, 920167782
    %v1749 = vsel %vm1741, %v1732, %v1748
    %v1750 = vsel %vm1740, %v1747, %v1749
    %v1751 = vsel %vm1739, %v1729, %v1732
    %v1752 = vsel %vm1742, %v1738, 1326507024
    %v1753 = vsel %vm1741, %v1735, %v1752
    %v1754 = vsel %vm1740, %v1751, %v1753
    %v1755 = vshll.u32 %v1715, 8
    %v1756 = vand.u32 %v1755, 65535
    %v1757 = vshrl.u32 %v1755, 16
    %v1758 = vand.u32 %v1754, 65535
    %v1759 = vshrl.u32 %v1754, 16
    %v1760 = vmul.u32 %v1756, %v1758
    %v1761 = vmul.u32 %v1756, %v1759
    %v1762 = vmul.u32 %v1757, %v1758
    %v1763 = vmul.u32 %v1757, %v1759
    %v1764 = vshll.u32 %v1761, 16
    %v1765 = vshrl.u32 %v1761, 16
    %v1766 = vshll.u32 %v1762, 16
    %v1767 = vshrl.u32 %v1762, 16
    %vm1768 = vc.u32 %v1760, %v1764
    %v1769 = vsel %vm1768, 1, 0
    %v1770 = vadd.s32 %v1760, %v1764
    %v1771 = vadd.s32 %v1763, %v1769
    %vm1772 = vc.u32 %v1770, %v1766
    %v1773 = vsel %vm1772, 1, 0
    %v1774 = vadd.s32 %v1770, %v1766
    %v1775 = vadd.s32 %v1771, %v1773
    %v1776 = vadd.s32 %v1775, %v1765
    %v1777 = vadd.s32 %v1776, %v1767
    %v1778 = vand.u32 %v1755, 65535
    %v1779 = vshrl.u32 %v1755, 16
    %v1780 = vand.u32 %v1750, 65535
    %v1781 = vshrl.u32 %v1750, 16
    %v1782 = vmul.u32 %v1778, %v1780
    %v1783 = vmul.u32 %v1778, %v1781
    %v1784 = vmul.u32 %v1779, %v1780
    %v1785 = vmul.u32 %v1779, %v1781
    %v1786 = vshll.u32 %v1783, 16
    %v1787 = vshrl.u32 %v1783, 16
    %v1788 = vshll.u32 %v1784, 16
    %v1789 = vshrl.u32 %v1784, 16
    %vm1790 = vc.u32 %v1782, %v1786
    %v1791 = vsel %vm1790, 1, 0
    %v1792 = vadd.s32 %v1782, %v1786
    %v1793 = vadd.s32 %v1785, %v1791
    %vm1794 = vc.u32 %v1792, %v1788
    %v1795 = vsel %vm1794, 1, 0
    %v1796 = vadd.s32 %v1792, %v1788
    %v1797 = vadd.s32 %v1793, %v1795
    %v1798 = vadd.s32 %v1797, %v1787
    %v1799 = vadd.s32 %v1798, %v1789
    %v1800 = vmul.u32 %v1755, %v1746
    %v1801 = vadd.s32 %v1777, %v1796
    %vm1802 = vc.u32 %v1777, %v1796
    %v1803 = vadd.s32 %v1799, 1
    %v1804 = vsel %vm1802, %v1803, %v1799
    %v1805 = vadd.s32 %v1800, %v1804
    %v1806 = vadd.s32 %v1805, 536870912
    %v1807 = vshrl.u32 %v1806, 30
    %v1808 = vshll.u32 %v1807, 30
    %v1809 = vsub.s32 %v1805, %v1808
    %vm1810 = vcmp.lt.s32.totalorder %v1809, 0
    %v1811 = vsub.s32 0, %v1809
    %v1812 = vsel %vm1810, %v1811, %v1809
    %v1813 = vclz %v1812
    %v1814 = vsub.s32 %v1813, 2
    %vm1815 = vcmp.gt.s32.totalorder 0, %v1814
    %v1816 = vsel %vm1815, 0, %v1814
    %v1817 = vsub.s32 32, %v1816
    %v1818 = vshll.u32 %v1809, %v1816
    %v1819 = vshrl.u32 %v1801, %v1817
    %v1820 = vor.u32 %v1818, %v1819
    %v1821 = vsub.s32 4294967266, %v1816
    %v1822 = vadd.s32 %v1821, 127
    %v1823 = vshll.u32 %v1822, 23
    %v1824 = vor.u32 4788187, %v1823
    %v1825 = vand.u32 2147483647, %v1824
    %v1827 = vcvt.s32.f32 %v1820
    %v1828 = vmul.f32 %v1827, %v1825
    %v1829 = vxor.u32 %v1828, 2147483648
    %v1830 = vsel %vm1709, %v1829, %v1828
    %v1831 = vsub.s32 4, %v1807
    %v1832 = vsel %vm1709, %v1831, %v1807
    %v1833 = vsel %vm1708, %v292, %v1830
    %v1834 = vsel %vm1708, 0, %v1832
    %v1835 = vmul.f32 %v1833, %v1833
    %v1836 = vmul.f32 %v1835, -0.001358992
    %v1837 = vadd.f32 %v1836, 0.041655596
    %v1838 = vmul.f32 %v1835, %v1837
    %v1839 = vadd.f32 %v1838, -0.4999988
    %v1840 = vmul.f32 %v1835, %v1839
    %v1841 = vadd.f32 1.0, %v1840
    %v1842 = vmul.f32 %v1833, %v1833
    %v1843 = vmul.f32 %v1842, -0.00019511016
    %v1844 = vadd.f32 %v1843, 0.008332121
    %v1845 = vmul.f32 %v1842, %v1844
    %v1846 = vadd.f32 %v1845, -0.16666654
    %v1847 = vmul.f32 %v1842, %v1846
    %v1848 = vadd.f32 %v1847, 1.0
    %v1849 = vmul.f32 %v1848, %v1833
    %vm1850 = vweird.f32 %v292
    %v1851 = vadd.s32 %v1834, 3
    %v1852 = vand.u32 %v1851, 3
    %vm1853 = vcmp.lt.s32.totalorder %v1852, 2
    %vm1854 = vcmp.eq.s32.totalorder %v1852, 0
    %v1855 = vxor.u32 %v1849, 2147483648
    %v1856 = vsel %vm1854, %v1841, %v1855
    %vm1857 = vcmp.eq.s32.totalorder %v1852, 2
    %v1858 = vxor.u32 %v1841, 2147483648
    %v1859 = vsel %vm1857, %v1858, %v1849
    %v1860 = vsel %vm1853, %v1856, %v1859
    %v1861 = vsel %vm1850, nan, %v1860
    %v1862 = vand.u32 2147483647, %v295
    %vm1863 = vcmp.le.f32.partialorder %v1862, 0.7853982
    %vm1864 = vcmp.lt.s32.totalorder %v295, 0
    %v1865 = vand.u32 %v295, 2139095040
    %v1866 = vshrl.u32 %v1865, 23
    %v1867 = vsub.s32 %v1866, 127
    %v1868 = vand.u32 2147483647, %v295
    %v1869 = vand.u32 %v1868, 8388607
    %v1870 = vor.u32 %v1869, 8388608
    %v1871 = vsub.s32 0, %v1870
    %v1872 = vadd.s32 %v1867, 1
    %vm1873 = vcmp.gt.s32.totalorder %v1872, 0
    %v1874 = vsel %vm1873, %v1872, 0
    %v1875 = vshrl.u32 %v1874, 5
    %v1876 = vand.u32 %v1874, 31
    %v1877 = vsub.s32 32, %v1876
    %v1878 = vshrl.u32 683565275, %v1877
    %v1879 = vshll.u32 683565275, %v1876
    %v1880 = vshrl.u32 2475754826, %v1877
    %v1881 = vor.u32 %v1879, %v1880
    %v1882 = vshll.u32 2475754826, %v1876
    %v1883 = vshrl.u32 2131351028, %v1877
    %v1884 = vor.u32 %v1882, %v1883
    %v1885 = vshll.u32 2131351028, %v1876
    %v1886 = vshrl.u32 2102212464, %v1877
    %v1887 = vor.u32 %v1885, %v1886
    %v1888 = vshll.u32 2102212464, %v1876
    %v1889 = vshrl.u32 920167782, %v1877
    %v1890 = vor.u32 %v1888, %v1889
    %v1891 = vshll.u32 920167782, %v1876
    %v1892 = vshrl.u32 1326507024, %v1877
    %v1893 = vor.u32 %v1891, %v1892
    %vm1894 = vcmp.lt.s32.totalorder %v1875, 1
    %vm1895 = vcmp.lt.s32.totalorder %v1875, 2
    %vm1896 = vcmp.lt.s32.totalorder %v1875, 3
    %vm1897 = vcmp.lt.s32.totalorder %v1875, 4
    %v1898 = vsel %vm1894, %v1878, %v1881
    %v1899 = vsel %vm1897, %v1887, 2102212464
    %v1900 = vsel %vm1896, %v1884, %v1899
    %v1901 = vsel %vm1895, %v1898, %v1900
    %v1902 = vsel %vm1894, %v1881, %v1884
    %v1903 = vsel %vm1897, %v1890, 920167782
    %v1904 = vsel %vm1896, %v1887, %v1903
    %v1905 = vsel %vm1895, %v1902, %v1904
    %v1906 = vsel %vm1894, %v1884, %v1887
    %v1907 = vsel %vm1897, %v1893, 1326507024
    %v1908 = vsel %vm1896, %v1890, %v1907
    %v1909 = vsel %vm1895, %v1906, %v1908
    %v1910 = vshll.u32 %v1870, 8
    %v1911 = vand.u32 %v1910, 65535
    %v1912 = vshrl.u32 %v1910, 16
    %v1913 = vand.u32 %v1909, 65535
    %v1914 = vshrl.u32 %v1909, 16
    %v1915 = vmul.u32 %v1911, %v1913
    %v1916 = vmul.u32 %v1911, %v1914
    %v1917 = vmul.u32 %v1912, %v1913
    %v1918 = vmul.u32 %v1912, %v1914
    %v1919 = vshll.u32 %v1916, 16
    %v1920 = vshrl.u32 %v1916, 16
    %v1921 = vshll.u32 %v1917, 16
    %v1922 = vshrl.u32 %v1917, 16
    %vm1923 = vc.u32 %v1915, %v1919
    %v1924 = vsel %vm1923, 1, 0
    %v1925 = vadd.s32 %v1915, %v1919
    %v1926 = vadd.s32 %v1918, %v1924
    %vm1927 = vc.u32 %v1925, %v1921
    %v1928 = vsel %vm1927, 1, 0
    %v1929 = vadd.s32 %v1925, %v1921
    %v1930 = vadd.s32 %v1926, %v1928
    %v1931 = vadd.s32 %v1930, %v1920
    %v1932 = vadd.s32 %v1931, %v1922
    %v1933 = vand.u32 %v1910, 65535
    %v1934 = vshrl.u32 %v1910, 16
    %v1935 = vand.u32 %v1905, 65535
    %v1936 = vshrl.u32 %v1905, 16
    %v1937 = vmul.u32 %v1933, %v1935
    %v1938 = vmul.u32 %v1933, %v1936
    %v1939 = vmul.u32 %v1934, %v1935
    %v1940 = vmul.u32 %v1934, %v1936
    %v1941 = vshll.u32 %v1938, 16
    %v1942 = vshrl.u32 %v1938, 16
    %v1943 = vshll.u32 %v1939, 16
    %v1944 = vshrl.u32 %v1939, 16
    %vm1945 = vc.u32 %v1937, %v1941
    %v1946 = vsel %vm1945, 1, 0
    %v1947 = vadd.s32 %v1937, %v1941
    %v1948 = vadd.s32 %v1940, %v1946
    %vm1949 = vc.u32 %v1947, %v1943
    %v1950 = vsel %vm1949, 1, 0
    %v1951 = vadd.s32 %v1947, %v1943
    %v1952 = vadd.s32 %v1948, %v1950
    %v1953 = vadd.s32 %v1952, %v1942
    %v1954 = vadd.s32 %v1953, %v1944
    %v1955 = vmul.u32 %v1910, %v1901
    %v1956 = vadd.s32 %v1932, %v1951
    %vm1957 = vc.u32 %v1932, %v1951
    %v1958 = vadd.s32 %v1954, 1
    %v1959 = vsel %vm1957, %v1958, %v1954
    %v1960 = vadd.s32 %v1955, %v1959
    %v1961 = vadd.s32 %v1960, 536870912
    %v1962 = vshrl.u32 %v1961, 30
    %v1963 = vshll.u32 %v1962, 30
    %v1964 = vsub.s32 %v1960, %v1963
    %vm1965 = vcmp.lt.s32.totalorder %v1964, 0
    %v1966 = vsub.s32 0, %v1964
    %v1967 = vsel %vm1965, %v1966, %v1964
    %v1968 = vclz %v1967
    %v1969 = vsub.s32 %v1968, 2
    %vm1970 = vcmp.gt.s32.totalorder 0, %v1969
    %v1971 = vsel %vm1970, 0, %v1969
    %v1972 = vsub.s32 32, %v1971
    %v1973 = vshll.u32 %v1964, %v1971
    %v1974 = vshrl.u32 %v1956, %v1972
    %v1975 = vor.u32 %v1973, %v1974
    %v1976 = vsub.s32 4294967266, %v1971
    %v1977 = vadd.s32 %v1976, 127
    %v1978 = vshll.u32 %v1977, 23
    %v1979 = vor.u32 4788187, %v1978
    %v1980 = vand.u32 2147483647, %v1979
    %v1982 = vcvt.s32.f32 %v1975
    %v1983 = vmul.f32 %v1982, %v1980
    %v1984 = vxor.u32 %v1983, 2147483648
    %v1985 = vsel %vm1864, %v1984, %v1983
    %v1986 = vsub.s32 4, %v1962
    %v1987 = vsel %vm1864, %v1986, %v1962
    %v1988 = vsel %vm1863, %v295, %v1985
    %v1989 = vsel %vm1863, 0, %v1987
    %v1990 = vmul.f32 %v1988, %v1988
    %v1991 = vmul.f32 %v1990, -0.001358992
    %v1992 = vadd.f32 %v1991, 0.041655596
    %v1993 = vmul.f32 %v1990, %v1992
    %v1994 = vadd.f32 %v1993, -0.4999988
    %v1995 = vmul.f32 %v1990, %v1994
    %v1996 = vadd.f32 1.0, %v1995
    %v1997 = vmul.f32 %v1988, %v1988
    %v1998 = vmul.f32 %v1997, -0.00019511016
    %v1999 = vadd.f32 %v1998, 0.008332121
    %v2000 = vmul.f32 %v1997, %v1999
    %v2001 = vadd.f32 %v2000, -0.16666654
    %v2002 = vmul.f32 %v1997, %v2001
    %v2003 = vadd.f32 %v2002, 1.0
    %v2004 = vmul.f32 %v2003, %v1988
    %vm2005 = vweird.f32 %v295
    %v2006 = vadd.s32 %v1989, 3
    %v2007 = vand.u32 %v2006, 3
    %vm2008 = vcmp.lt.s32.totalorder %v2007, 2
    %vm2009 = vcmp.eq.s32.totalorder %v2007, 0
    %v2010 = vxor.u32 %v2004, 2147483648
    %v2011 = vsel %vm2009, %v1996, %v2010
    %vm2012 = vcmp.eq.s32.totalorder %v2007, 2
    %v2013 = vxor.u32 %v1996, 2147483648
    %v2014 = vsel %vm2012, %v2013, %v2004
    %v2015 = vsel %vm2008, %v2011, %v2014
    %v2016 = vsel %vm2005, nan, %v2015
    %v2017 = vand.u32 2147483647, %v298
    %vm2018 = vcmp.le.f32.partialorder %v2017, 0.7853982
    %vm2019 = vcmp.lt.s32.totalorder %v298, 0
    %v2020 = vand.u32 %v298, 2139095040
    %v2021 = vshrl.u32 %v2020, 23
    %v2022 = vsub.s32 %v2021, 127
    %v2023 = vand.u32 2147483647, %v298
    %v2024 = vand.u32 %v2023, 8388607
    %v2025 = vor.u32 %v2024, 8388608
    %v2026 = vsub.s32 0, %v2025
    %v2027 = vadd.s32 %v2022, 1
    %vm2028 = vcmp.gt.s32.totalorder %v2027, 0
    %v2029 = vsel %vm2028, %v2027, 0
    %v2030 = vshrl.u32 %v2029, 5
    %v2031 = vand.u32 %v2029, 31
    %v2032 = vsub.s32 32, %v2031
    %v2033 = vshrl.u32 683565275, %v2032
    %v2034 = vshll.u32 683565275, %v2031
    %v2035 = vshrl.u32 2475754826, %v2032
    %v2036 = vor.u32 %v2034, %v2035
    %v2037 = vshll.u32 2475754826, %v2031
    %v2038 = vshrl.u32 2131351028, %v2032
    %v2039 = vor.u32 %v2037, %v2038
    %v2040 = vshll.u32 2131351028, %v2031
    %v2041 = vshrl.u32 2102212464, %v2032
    %v2042 = vor.u32 %v2040, %v2041
    %v2043 = vshll.u32 2102212464, %v2031
    %v2044 = vshrl.u32 920167782, %v2032
    %v2045 = vor.u32 %v2043, %v2044
    %v2046 = vshll.u32 920167782, %v2031
    %v2047 = vshrl.u32 1326507024, %v2032
    %v2048 = vor.u32 %v2046, %v2047
    %vm2049 = vcmp.lt.s32.totalorder %v2030, 1
    %vm2050 = vcmp.lt.s32.totalorder %v2030, 2
    %vm2051 = vcmp.lt.s32.totalorder %v2030, 3
    %vm2052 = vcmp.lt.s32.totalorder %v2030, 4
    %v2053 = vsel %vm2049, %v2033, %v2036
    %v2054 = vsel %vm2052, %v2042, 2102212464
    %v2055 = vsel %vm2051, %v2039, %v2054
    %v2056 = vsel %vm2050, %v2053, %v2055
    %v2057 = vsel %vm2049, %v2036, %v2039
    %v2058 = vsel %vm2052, %v2045, 920167782
    %v2059 = vsel %vm2051, %v2042, %v2058
    %v2060 = vsel %vm2050, %v2057, %v2059
    %v2061 = vsel %vm2049, %v2039, %v2042
    %v2062 = vsel %vm2052, %v2048, 1326507024
    %v2063 = vsel %vm2051, %v2045, %v2062
    %v2064 = vsel %vm2050, %v2061, %v2063
    %v2065 = vshll.u32 %v2025, 8
    %v2066 = vand.u32 %v2065, 65535
    %v2067 = vshrl.u32 %v2065, 16
    %v2068 = vand.u32 %v2064, 65535
    %v2069 = vshrl.u32 %v2064, 16
    %v2070 = vmul.u32 %v2066, %v2068
    %v2071 = vmul.u32 %v2066, %v2069
    %v2072 = vmul.u32 %v2067, %v2068
    %v2073 = vmul.u32 %v2067, %v2069
    %v2074 = vshll.u32 %v2071, 16
    %v2075 = vshrl.u32 %v2071, 16
    %v2076 = vshll.u32 %v2072, 16
    %v2077 = vshrl.u32 %v2072, 16
    %vm2078 = vc.u32 %v2070, %v2074
    %v2079 = vsel %vm2078, 1, 0
    %v2080 = vadd.s32 %v2070, %v2074
    %v2081 = vadd.s32 %v2073, %v2079
    %vm2082 = vc.u32 %v2080, %v2076
    %v2083 = vsel %vm2082, 1, 0
    %v2084 = vadd.s32 %v2080, %v2076
    %v2085 = vadd.s32 %v2081, %v2083
    %v2086 = vadd.s32 %v2085, %v2075
    %v2087 = vadd.s32 %v2086, %v2077
    %v2088 = vand.u32 %v2065, 65535
    %v2089 = vshrl.u32 %v2065, 16
    %v2090 = vand.u32 %v2060, 65535
    %v2091 = vshrl.u32 %v2060, 16
    %v2092 = vmul.u32 %v2088, %v2090
    %v2093 = vmul.u32 %v2088, %v2091
    %v2094 = vmul.u32 %v2089, %v2090
    %v2095 = vmul.u32 %v2089, %v2091
    %v2096 = vshll.u32 %v2093, 16
    %v2097 = vshrl.u32 %v2093, 16
    %v2098 = vshll.u32 %v2094, 16
    %v2099 = vshrl.u32 %v2094, 16
    %vm2100 = vc.u32 %v2092, %v2096
    %v2101 = vsel %vm2100, 1, 0
    %v2102 = vadd.s32 %v2092, %v2096
    %v2103 = vadd.s32 %v2095, %v2101
    %vm2104 = vc.u32 %v2102, %v2098
    %v2105 = vsel %vm2104, 1, 0
    %v2106 = vadd.s32 %v2102, %v2098
    %v2107 = vadd.s32 %v2103, %v2105
    %v2108 = vadd.s32 %v2107, %v2097
    %v2109 = vadd.s32 %v2108, %v2099
    %v2110 = vmul.u32 %v2065, %v2056
    %v2111 = vadd.s32 %v2087, %v2106
    %vm2112 = vc.u32 %v2087, %v2106
    %v2113 = vadd.s32 %v2109, 1
    %v2114 = vsel %vm2112, %v2113, %v2109
    %v2115 = vadd.s32 %v2110, %v2114
    %v2116 = vadd.s32 %v2115, 536870912
    %v2117 = vshrl.u32 %v2116, 30
    %v2118 = vshll.u32 %v2117, 30
    %v2119 = vsub.s32 %v2115, %v2118
    %vm2120 = vcmp.lt.s32.totalorder %v2119, 0
    %v2121 = vsub.s32 0, %v2119
    %v2122 = vsel %vm2120, %v2121, %v2119
    %v2123 = vclz %v2122
    %v2124 = vsub.s32 %v2123, 2
    %vm2125 = vcmp.gt.s32.totalorder 0, %v2124
    %v2126 = vsel %vm2125, 0, %v2124
    %v2127 = vsub.s32 32, %v2126
    %v2128 = vshll.u32 %v2119, %v2126
    %v2129 = vshrl.u32 %v2111, %v2127
    %v2130 = vor.u32 %v2128, %v2129
    %v2131 = vsub.s32 4294967266, %v2126
    %v2132 = vadd.s32 %v2131, 127
    %v2133 = vshll.u32 %v2132, 23
    %v2134 = vor.u32 4788187, %v2133
    %v2135 = vand.u32 2147483647, %v2134
    %v2137 = vcvt.s32.f32 %v2130
    %v2138 = vmul.f32 %v2137, %v2135
    %v2139 = vxor.u32 %v2138, 2147483648
    %v2140 = vsel %vm2019, %v2139, %v2138
    %v2141 = vsub.s32 4, %v2117
    %v2142 = vsel %vm2019, %v2141, %v2117
    %v2143 = vsel %vm2018, %v298, %v2140
    %v2144 = vsel %vm2018, 0, %v2142
    %v2145 = vmul.f32 %v2143, %v2143
    %v2146 = vmul.f32 %v2145, -0.001358992
    %v2147 = vadd.f32 %v2146, 0.041655596
    %v2148 = vmul.f32 %v2145, %v2147
    %v2149 = vadd.f32 %v2148, -0.4999988
    %v2150 = vmul.f32 %v2145, %v2149
    %v2151 = vadd.f32 1.0, %v2150
    %v2152 = vmul.f32 %v2143, %v2143
    %v2153 = vmul.f32 %v2152, -0.00019511016
    %v2154 = vadd.f32 %v2153, 0.008332121
    %v2155 = vmul.f32 %v2152, %v2154
    %v2156 = vadd.f32 %v2155, -0.16666654
    %v2157 = vmul.f32 %v2152, %v2156
    %v2158 = vadd.f32 %v2157, 1.0
    %v2159 = vmul.f32 %v2158, %v2143
    %vm2160 = vweird.f32 %v298
    %v2161 = vadd.s32 %v2144, 3
    %v2162 = vand.u32 %v2161, 3
    %vm2163 = vcmp.lt.s32.totalorder %v2162, 2
    %vm2164 = vcmp.eq.s32.totalorder %v2162, 0
    %v2165 = vxor.u32 %v2159, 2147483648
    %v2166 = vsel %vm2164, %v2151, %v2165
    %vm2167 = vcmp.eq.s32.totalorder %v2162, 2
    %v2168 = vxor.u32 %v2151, 2147483648
    %v2169 = vsel %vm2167, %v2168, %v2159
    %v2170 = vsel %vm2163, %v2166, %v2169
    %v2171 = vsel %vm2160, nan, %v2170
    %v2172 = vand.u32 2147483647, %v301
    %vm2173 = vcmp.le.f32.partialorder %v2172, 0.7853982
    %vm2174 = vcmp.lt.s32.totalorder %v301, 0
    %v2175 = vand.u32 %v301, 2139095040
    %v2176 = vshrl.u32 %v2175, 23
    %v2177 = vsub.s32 %v2176, 127
    %v2178 = vand.u32 2147483647, %v301
    %v2179 = vand.u32 %v2178, 8388607
    %v2180 = vor.u32 %v2179, 8388608
    %v2181 = vsub.s32 0, %v2180
    %v2182 = vadd.s32 %v2177, 1
    %vm2183 = vcmp.gt.s32.totalorder %v2182, 0
    %v2184 = vsel %vm2183, %v2182, 0
    %v2185 = vshrl.u32 %v2184, 5
    %v2186 = vand.u32 %v2184, 31
    %v2187 = vsub.s32 32, %v2186
    %v2188 = vshrl.u32 683565275, %v2187
    %v2189 = vshll.u32 683565275, %v2186
    %v2190 = vshrl.u32 2475754826, %v2187
    %v2191 = vor.u32 %v2189, %v2190
    %v2192 = vshll.u32 2475754826, %v2186
    %v2193 = vshrl.u32 2131351028, %v2187
    %v2194 = vor.u32 %v2192, %v2193
    %v2195 = vshll.u32 2131351028, %v2186
    %v2196 = vshrl.u32 2102212464, %v2187
    %v2197 = vor.u32 %v2195, %v2196
    %v2198 = vshll.u32 2102212464, %v2186
    %v2199 = vshrl.u32 920167782, %v2187
    %v2200 = vor.u32 %v2198, %v2199
    %v2201 = vshll.u32 920167782, %v2186
    %v2202 = vshrl.u32 1326507024, %v2187
    %v2203 = vor.u32 %v2201, %v2202
    %vm2204 = vcmp.lt.s32.totalorder %v2185, 1
    %vm2205 = vcmp.lt.s32.totalorder %v2185, 2
    %vm2206 = vcmp.lt.s32.totalorder %v2185, 3
    %vm2207 = vcmp.lt.s32.totalorder %v2185, 4
    %v2208 = vsel %vm2204, %v2188, %v2191
    %v2209 = vsel %vm2207, %v2197, 2102212464
    %v2210 = vsel %vm2206, %v2194, %v2209
    %v2211 = vsel %vm2205, %v2208, %v2210
    %v2212 = vsel %vm2204, %v2191, %v2194
    %v2213 = vsel %vm2207, %v2200, 920167782
    %v2214 = vsel %vm2206, %v2197, %v2213
    %v2215 = vsel %vm2205, %v2212, %v2214
    %v2216 = vsel %vm2204, %v2194, %v2197
    %v2217 = vsel %vm2207, %v2203, 1326507024
    %v2218 = vsel %vm2206, %v2200, %v2217
    %v2219 = vsel %vm2205, %v2216, %v2218
    %v2220 = vshll.u32 %v2180, 8
    %v2221 = vand.u32 %v2220, 65535
    %v2222 = vshrl.u32 %v2220, 16
    %v2223 = vand.u32 %v2219, 65535
    %v2224 = vshrl.u32 %v2219, 16
    %v2225 = vmul.u32 %v2221, %v2223
    %v2226 = vmul.u32 %v2221, %v2224
    %v2227 = vmul.u32 %v2222, %v2223
    %v2228 = vmul.u32 %v2222, %v2224
    %v2229 = vshll.u32 %v2226, 16
    %v2230 = vshrl.u32 %v2226, 16
    %v2231 = vshll.u32 %v2227, 16
    %v2232 = vshrl.u32 %v2227, 16
    %vm2233 = vc.u32 %v2225, %v2229
    %v2234 = vsel %vm2233, 1, 0
    %v2235 = vadd.s32 %v2225, %v2229
    %v2236 = vadd.s32 %v2228, %v2234
    %vm2237 = vc.u32 %v2235, %v2231
    %v2238 = vsel %vm2237, 1, 0
    %v2239 = vadd.s32 %v2235, %v2231
    %v2240 = vadd.s32 %v2236, %v2238
    %v2241 = vadd.s32 %v2240, %v2230
    %v2242 = vadd.s32 %v2241, %v2232
    %v2243 = vand.u32 %v2220, 65535
    %v2244 = vshrl.u32 %v2220, 16
    %v2245 = vand.u32 %v2215, 65535
    %v2246 = vshrl.u32 %v2215, 16
    %v2247 = vmul.u32 %v2243, %v2245
    %v2248 = vmul.u32 %v2243, %v2246
    %v2249 = vmul.u32 %v2244, %v2245
    %v2250 = vmul.u32 %v2244, %v2246
    %v2251 = vshll.u32 %v2248, 16
    %v2252 = vshrl.u32 %v2248, 16
    %v2253 = vshll.u32 %v2249, 16
    %v2254 = vshrl.u32 %v2249, 16
    %vm2255 = vc.u32 %v2247, %v2251
    %v2256 = vsel %vm2255, 1, 0
    %v2257 = vadd.s32 %v2247, %v2251
    %v2258 = vadd.s32 %v2250, %v2256
    %vm2259 = vc.u32 %v2257, %v2253
    %v2260 = vsel %vm2259, 1, 0
    %v2261 = vadd.s32 %v2257, %v2253
    %v2262 = vadd.s32 %v2258, %v2260
    %v2263 = vadd.s32 %v2262, %v2252
    %v2264 = vadd.s32 %v2263, %v2254
    %v2265 = vmul.u32 %v2220, %v2211
    %v2266 = vadd.s32 %v2242, %v2261
    %vm2267 = vc.u32 %v2242, %v2261
    %v2268 = vadd.s32 %v2264, 1
    %v2269 = vsel %vm2267, %v2268, %v2264
    %v2270 = vadd.s32 %v2265, %v2269
    %v2271 = vadd.s32 %v2270, 536870912
    %v2272 = vshrl.u32 %v2271, 30
    %v2273 = vshll.u32 %v2272, 30
    %v2274 = vsub.s32 %v2270, %v2273
    %vm2275 = vcmp.lt.s32.totalorder %v2274, 0
    %v2276 = vsub.s32 0, %v2274
    %v2277 = vsel %vm2275, %v2276, %v2274
    %v2278 = vclz %v2277
    %v2279 = vsub.s32 %v2278, 2
    %vm2280 = vcmp.gt.s32.totalorder 0, %v2279
    %v2281 = vsel %vm2280, 0, %v2279
    %v2282 = vsub.s32 32, %v2281
    %v2283 = vshll.u32 %v2274, %v2281
    %v2284 = vshrl.u32 %v2266, %v2282
    %v2285 = vor.u32 %v2283, %v2284
    %v2286 = vsub.s32 4294967266, %v2281
    %v2287 = vadd.s32 %v2286, 127
    %v2288 = vshll.u32 %v2287, 23
    %v2289 = vor.u32 4788187, %v2288
    %v2290 = vand.u32 2147483647, %v2289
    %v2292 = vcvt.s32.f32 %v2285
    %v2293 = vmul.f32 %v2292, %v2290
    %v2294 = vxor.u32 %v2293, 2147483648
    %v2295 = vsel %vm2174, %v2294, %v2293
    %v2296 = vsub.s32 4, %v2272
    %v2297 = vsel %vm2174, %v2296, %v2272
    %v2298 = vsel %vm2173, %v301, %v2295
    %v2299 = vsel %vm2173, 0, %v2297
    %v2300 = vmul.f32 %v2298, %v2298
    %v2301 = vmul.f32 %v2300, -0.001358992
    %v2302 = vadd.f32 %v2301, 0.041655596
    %v2303 = vmul.f32 %v2300, %v2302
    %v2304 = vadd.f32 %v2303, -0.4999988
    %v2305 = vmul.f32 %v2300, %v2304
    %v2306 = vadd.f32 1.0, %v2305
    %v2307 = vmul.f32 %v2298, %v2298
    %v2308 = vmul.f32 %v2307, -0.00019511016
    %v2309 = vadd.f32 %v2308, 0.008332121
    %v2310 = vmul.f32 %v2307, %v2309
    %v2311 = vadd.f32 %v2310, -0.16666654
    %v2312 = vmul.f32 %v2307, %v2311
    %v2313 = vadd.f32 %v2312, 1.0
    %v2314 = vmul.f32 %v2313, %v2298
    %vm2315 = vweird.f32 %v301
    %v2316 = vadd.s32 %v2299, 3
    %v2317 = vand.u32 %v2316, 3
    %vm2318 = vcmp.lt.s32.totalorder %v2317, 2
    %vm2319 = vcmp.eq.s32.totalorder %v2317, 0
    %v2320 = vxor.u32 %v2314, 2147483648
    %v2321 = vsel %vm2319, %v2306, %v2320
    %vm2322 = vcmp.eq.s32.totalorder %v2317, 2
    %v2323 = vxor.u32 %v2306, 2147483648
    %v2324 = vsel %vm2322, %v2323, %v2314
    %v2325 = vsel %vm2318, %v2321, %v2324
    %v2326 = vsel %vm2315, nan, %v2325
    %v2327 = vand.u32 2147483647, %v304
    %vm2328 = vcmp.le.f32.partialorder %v2327, 0.7853982
    %vm2329 = vcmp.lt.s32.totalorder %v304, 0
    %v2330 = vand.u32 %v304, 2139095040
    %v2331 = vshrl.u32 %v2330, 23
    %v2332 = vsub.s32 %v2331, 127
    %v2333 = vand.u32 2147483647, %v304
    %v2334 = vand.u32 %v2333, 8388607
    %v2335 = vor.u32 %v2334, 8388608
    %v2336 = vsub.s32 0, %v2335
    %v2337 = vadd.s32 %v2332, 1
    %vm2338 = vcmp.gt.s32.totalorder %v2337, 0
    %v2339 = vsel %vm2338, %v2337, 0
    %v2340 = vshrl.u32 %v2339, 5
    %v2341 = vand.u32 %v2339, 31
    %v2342 = vsub.s32 32, %v2341
    %v2343 = vshrl.u32 683565275, %v2342
    %v2344 = vshll.u32 683565275, %v2341
    %v2345 = vshrl.u32 2475754826, %v2342
    %v2346 = vor.u32 %v2344, %v2345
    %v2347 = vshll.u32 2475754826, %v2341
    %v2348 = vshrl.u32 2131351028, %v2342
    %v2349 = vor.u32 %v2347, %v2348
    %v2350 = vshll.u32 2131351028, %v2341
    %v2351 = vshrl.u32 2102212464, %v2342
    %v2352 = vor.u32 %v2350, %v2351
    %v2353 = vshll.u32 2102212464, %v2341
    %v2354 = vshrl.u32 920167782, %v2342
    %v2355 = vor.u32 %v2353, %v2354
    %v2356 = vshll.u32 920167782, %v2341
    %v2357 = vshrl.u32 1326507024, %v2342
    %v2358 = vor.u32 %v2356, %v2357
    %vm2359 = vcmp.lt.s32.totalorder %v2340, 1
    %vm2360 = vcmp.lt.s32.totalorder %v2340, 2
    %vm2361 = vcmp.lt.s32.totalorder %v2340, 3
    %vm2362 = vcmp.lt.s32.totalorder %v2340, 4
    %v2363 = vsel %vm2359, %v2343, %v2346
    %v2364 = vsel %vm2362, %v2352, 2102212464
    %v2365 = vsel %vm2361, %v2349, %v2364
    %v2366 = vsel %vm2360, %v2363, %v2365
    %v2367 = vsel %vm2359, %v2346, %v2349
    %v2368 = vsel %vm2362, %v2355, 920167782
    %v2369 = vsel %vm2361, %v2352, %v2368
    %v2370 = vsel %vm2360, %v2367, %v2369
    %v2371 = vsel %vm2359, %v2349, %v2352
    %v2372 = vsel %vm2362, %v2358, 1326507024
    %v2373 = vsel %vm2361, %v2355, %v2372
    %v2374 = vsel %vm2360, %v2371, %v2373
    %v2375 = vshll.u32 %v2335, 8
    %v2376 = vand.u32 %v2375, 65535
    %v2377 = vshrl.u32 %v2375, 16
    %v2378 = vand.u32 %v2374, 65535
    %v2379 = vshrl.u32 %v2374, 16
    %v2380 = vmul.u32 %v2376, %v2378
    %v2381 = vmul.u32 %v2376, %v2379
    %v2382 = vmul.u32 %v2377, %v2378
    %v2383 = vmul.u32 %v2377, %v2379
    %v2384 = vshll.u32 %v2381, 16
    %v2385 = vshrl.u32 %v2381, 16
    %v2386 = vshll.u32 %v2382, 16
    %v2387 = vshrl.u32 %v2382, 16
    %vm2388 = vc.u32 %v2380, %v2384
    %v2389 = vsel %vm2388, 1, 0
    %v2390 = vadd.s32 %v2380, %v2384
    %v2391 = vadd.s32 %v2383, %v2389
    %vm2392 = vc.u32 %v2390, %v2386
    %v2393 = vsel %vm2392, 1, 0
    %v2394 = vadd.s32 %v2390, %v2386
    %v2395 = vadd.s32 %v2391, %v2393
    %v2396 = vadd.s32 %v2395, %v2385
    %v2397 = vadd.s32 %v2396, %v2387
    %v2398 = vand.u32 %v2375, 65535
    %v2399 = vshrl.u32 %v2375, 16
    %v2400 = vand.u32 %v2370, 65535
    %v2401 = vshrl.u32 %v2370, 16
    %v2402 = vmul.u32 %v2398, %v2400
    %v2403 = vmul.u32 %v2398, %v2401
    %v2404 = vmul.u32 %v2399, %v2400
    %v2405 = vmul.u32 %v2399, %v2401
    %v2406 = vshll.u32 %v2403, 16
    %v2407 = vshrl.u32 %v2403, 16
    %v2408 = vshll.u32 %v2404, 16
    %v2409 = vshrl.u32 %v2404, 16
    %vm2410 = vc.u32 %v2402, %v2406
    %v2411 = vsel %vm2410, 1, 0
    %v2412 = vadd.s32 %v2402, %v2406
    %v2413 = vadd.s32 %v2405, %v2411
    %vm2414 = vc.u32 %v2412, %v2408
    %v2415 = vsel %vm2414, 1, 0
    %v2416 = vadd.s32 %v2412, %v2408
    %v2417 = vadd.s32 %v2413, %v2415
    %v2418 = vadd.s32 %v2417, %v2407
    %v2419 = vadd.s32 %v2418, %v2409
    %v2420 = vmul.u32 %v2375, %v2366
    %v2421 = vadd.s32 %v2397, %v2416
    %vm2422 = vc.u32 %v2397, %v2416
    %v2423 = vadd.s32 %v2419, 1
    %v2424 = vsel %vm2422, %v2423, %v2419
    %v2425 = vadd.s32 %v2420, %v2424
    %v2426 = vadd.s32 %v2425, 536870912
    %v2427 = vshrl.u32 %v2426, 30
    %v2428 = vshll.u32 %v2427, 30
    %v2429 = vsub.s32 %v2425, %v2428
    %vm2430 = vcmp.lt.s32.totalorder %v2429, 0
    %v2431 = vsub.s32 0, %v2429
    %v2432 = vsel %vm2430, %v2431, %v2429
    %v2433 = vclz %v2432
    %v2434 = vsub.s32 %v2433, 2
    %vm2435 = vcmp.gt.s32.totalorder 0, %v2434
    %v2436 = vsel %vm2435, 0, %v2434
    %v2437 = vsub.s32 32, %v2436
    %v2438 = vshll.u32 %v2429, %v2436
    %v2439 = vshrl.u32 %v2421, %v2437
    %v2440 = vor.u32 %v2438, %v2439
    %v2441 = vsub.s32 4294967266, %v2436
    %v2442 = vadd.s32 %v2441, 127
    %v2443 = vshll.u32 %v2442, 23
    %v2444 = vor.u32 4788187, %v2443
    %v2445 = vand.u32 2147483647, %v2444
    %v2447 = vcvt.s32.f32 %v2440
    %v2448 = vmul.f32 %v2447, %v2445
    %v2449 = vxor.u32 %v2448, 2147483648
    %v2450 = vsel %vm2329, %v2449, %v2448
    %v2451 = vsub.s32 4, %v2427
    %v2452 = vsel %vm2329, %v2451, %v2427
    %v2453 = vsel %vm2328, %v304, %v2450
    %v2454 = vsel %vm2328, 0, %v2452
    %v2455 = vmul.f32 %v2453, %v2453
    %v2456 = vmul.f32 %v2455, -0.001358992
    %v2457 = vadd.f32 %v2456, 0.041655596
    %v2458 = vmul.f32 %v2455, %v2457
    %v2459 = vadd.f32 %v2458, -0.4999988
    %v2460 = vmul.f32 %v2455, %v2459
    %v2461 = vadd.f32 1.0, %v2460
    %v2462 = vmul.f32 %v2453, %v2453
    %v2463 = vmul.f32 %v2462, -0.00019511016
    %v2464 = vadd.f32 %v2463, 0.008332121
    %v2465 = vmul.f32 %v2462, %v2464
    %v2466 = vadd.f32 %v2465, -0.16666654
    %v2467 = vmul.f32 %v2462, %v2466
    %v2468 = vadd.f32 %v2467, 1.0
    %v2469 = vmul.f32 %v2468, %v2453
    %vm2470 = vweird.f32 %v304
    %v2471 = vadd.s32 %v2454, 3
    %v2472 = vand.u32 %v2471, 3
    %vm2473 = vcmp.lt.s32.totalorder %v2472, 2
    %vm2474 = vcmp.eq.s32.totalorder %v2472, 0
    %v2475 = vxor.u32 %v2469, 2147483648
    %v2476 = vsel %vm2474, %v2461, %v2475
    %vm2477 = vcmp.eq.s32.totalorder %v2472, 2
    %v2478 = vxor.u32 %v2461, 2147483648
    %v2479 = vsel %vm2477, %v2478, %v2469
    %v2480 = vsel %vm2473, %v2476, %v2479
    %v2481 = vsel %vm2470, nan, %v2480
    %v2482 = vand.u32 2147483647, %v307
    %vm2483 = vcmp.le.f32.partialorder %v2482, 0.7853982
    %vm2484 = vcmp.lt.s32.totalorder %v307, 0
    %v2485 = vand.u32 %v307, 2139095040
    %v2486 = vshrl.u32 %v2485, 23
    %v2487 = vsub.s32 %v2486, 127
    %v2488 = vand.u32 2147483647, %v307
    %v2489 = vand.u32 %v2488, 8388607
    %v2490 = vor.u32 %v2489, 8388608
    %v2491 = vsub.s32 0, %v2490
    %v2492 = vadd.s32 %v2487, 1
    %vm2493 = vcmp.gt.s32.totalorder %v2492, 0
    %v2494 = vsel %vm2493, %v2492, 0
    %v2495 = vshrl.u32 %v2494, 5
    %v2496 = vand.u32 %v2494, 31
    %v2497 = vsub.s32 32, %v2496
    %v2498 = vshrl.u32 683565275, %v2497
    %v2499 = vshll.u32 683565275, %v2496
    %v2500 = vshrl.u32 2475754826, %v2497
    %v2501 = vor.u32 %v2499, %v2500
    %v2502 = vshll.u32 2475754826, %v2496
    %v2503 = vshrl.u32 2131351028, %v2497
    %v2504 = vor.u32 %v2502, %v2503
    %v2505 = vshll.u32 2131351028, %v2496
    %v2506 = vshrl.u32 2102212464, %v2497
    %v2507 = vor.u32 %v2505, %v2506
    %v2508 = vshll.u32 2102212464, %v2496
    %v2509 = vshrl.u32 920167782, %v2497
    %v2510 = vor.u32 %v2508, %v2509
    %v2511 = vshll.u32 920167782, %v2496
    %v2512 = vshrl.u32 1326507024, %v2497
    %v2513 = vor.u32 %v2511, %v2512
    %vm2514 = vcmp.lt.s32.totalorder %v2495, 1
    %vm2515 = vcmp.lt.s32.totalorder %v2495, 2
    %vm2516 = vcmp.lt.s32.totalorder %v2495, 3
    %vm2517 = vcmp.lt.s32.totalorder %v2495, 4
    %v2518 = vsel %vm2514, %v2498, %v2501
    %v2519 = vsel %vm2517, %v2507, 2102212464
    %v2520 = vsel %vm2516, %v2504, %v2519
    %v2521 = vsel %vm2515, %v2518, %v2520
    %v2522 = vsel %vm2514, %v2501, %v2504
    %v2523 = vsel %vm2517, %v2510, 920167782
    %v2524 = vsel %vm2516, %v2507, %v2523
    %v2525 = vsel %vm2515, %v2522, %v2524
    %v2526 = vsel %vm2514, %v2504, %v2507
    %v2527 = vsel %vm2517, %v2513, 1326507024
    %v2528 = vsel %vm2516, %v2510, %v2527
    %v2529 = vsel %vm2515, %v2526, %v2528
    %v2530 = vshll.u32 %v2490, 8
    %v2531 = vand.u32 %v2530, 65535
    %v2532 = vshrl.u32 %v2530, 16
    %v2533 = vand.u32 %v2529, 65535
    %v2534 = vshrl.u32 %v2529, 16
    %v2535 = vmul.u32 %v2531, %v2533
    %v2536 = vmul.u32 %v2531, %v2534
    %v2537 = vmul.u32 %v2532, %v2533
    %v2538 = vmul.u32 %v2532, %v2534
    %v2539 = vshll.u32 %v2536, 16
    %v2540 = vshrl.u32 %v2536, 16
    %v2541 = vshll.u32 %v2537, 16
    %v2542 = vshrl.u32 %v2537, 16
    %vm2543 = vc.u32 %v2535, %v2539
    %v2544 = vsel %vm2543, 1, 0
    %v2545 = vadd.s32 %v2535, %v2539
    %v2546 = vadd.s32 %v2538, %v2544
    %vm2547 = vc.u32 %v2545, %v2541
    %v2548 = vsel %vm2547, 1, 0
    %v2549 = vadd.s32 %v2545, %v2541
    %v2550 = vadd.s32 %v2546, %v2548
    %v2551 = vadd.s32 %v2550, %v2540
    %v2552 = vadd.s32 %v2551, %v2542
    %v2553 = vand.u32 %v2530, 65535
    %v2554 = vshrl.u32 %v2530, 16
    %v2555 = vand.u32 %v2525, 65535
    %v2556 = vshrl.u32 %v2525, 16
    %v2557 = vmul.u32 %v2553, %v2555
    %v2558 = vmul.u32 %v2553, %v2556
    %v2559 = vmul.u32 %v2554, %v2555
    %v2560 = vmul.u32 %v2554, %v2556
    %v2561 = vshll.u32 %v2558, 16
    %v2562 = vshrl.u32 %v2558, 16
    %v2563 = vshll.u32 %v2559, 16
    %v2564 = vshrl.u32 %v2559, 16
    %vm2565 = vc.u32 %v2557, %v2561
    %v2566 = vsel %vm2565, 1, 0
    %v2567 = vadd.s32 %v2557, %v2561
    %v2568 = vadd.s32 %v2560, %v2566
    %vm2569 = vc.u32 %v2567, %v2563
    %v2570 = vsel %vm2569, 1, 0
    %v2571 = vadd.s32 %v2567, %v2563
    %v2572 = vadd.s32 %v2568, %v2570
    %v2573 = vadd.s32 %v2572, %v2562
    %v2574 = vadd.s32 %v2573, %v2564
    %v2575 = vmul.u32 %v2530, %v2521
    %v2576 = vadd.s32 %v2552, %v2571
    %vm2577 = vc.u32 %v2552, %v2571
    %v2578 = vadd.s32 %v2574, 1
    %v2579 = vsel %vm2577, %v2578, %v2574
    %v2580 = vadd.s32 %v2575, %v2579
    %v2581 = vadd.s32 %v2580, 536870912
    %v2582 = vshrl.u32 %v2581, 30
    %v2583 = vshll.u32 %v2582, 30
    %v2584 = vsub.s32 %v2580, %v2583
    %vm2585 = vcmp.lt.s32.totalorder %v2584, 0
    %v2586 = vsub.s32 0, %v2584
    %v2587 = vsel %vm2585, %v2586, %v2584
    %v2588 = vclz %v2587
    %v2589 = vsub.s32 %v2588, 2
    %vm2590 = vcmp.gt.s32.totalorder 0, %v2589
    %v2591 = vsel %vm2590, 0, %v2589
    %v2592 = vsub.s32 32, %v2591
    %v2593 = vshll.u32 %v2584, %v2591
    %v2594 = vshrl.u32 %v2576, %v2592
    %v2595 = vor.u32 %v2593, %v2594
    %v2596 = vsub.s32 4294967266, %v2591
    %v2597 = vadd.s32 %v2596, 127
    %v2598 = vshll.u32 %v2597, 23
    %v2599 = vor.u32 4788187, %v2598
    %v2600 = vand.u32 2147483647, %v2599
    %v2602 = vcvt.s32.f32 %v2595
    %v2603 = vmul.f32 %v2602, %v2600
    %v2604 = vxor.u32 %v2603, 2147483648
    %v2605 = vsel %vm2484, %v2604, %v2603
    %v2606 = vsub.s32 4, %v2582
    %v2607 = vsel %vm2484, %v2606, %v2582
    %v2608 = vsel %vm2483, %v307, %v2605
    %v2609 = vsel %vm2483, 0, %v2607
    %v2610 = vmul.f32 %v2608, %v2608
    %v2611 = vmul.f32 %v2610, -0.001358992
    %v2612 = vadd.f32 %v2611, 0.041655596
    %v2613 = vmul.f32 %v2610, %v2612
    %v2614 = vadd.f32 %v2613, -0.4999988
    %v2615 = vmul.f32 %v2610, %v2614
    %v2616 = vadd.f32 1.0, %v2615
    %v2617 = vmul.f32 %v2608, %v2608
    %v2618 = vmul.f32 %v2617, -0.00019511016
    %v2619 = vadd.f32 %v2618, 0.008332121
    %v2620 = vmul.f32 %v2617, %v2619
    %v2621 = vadd.f32 %v2620, -0.16666654
    %v2622 = vmul.f32 %v2617, %v2621
    %v2623 = vadd.f32 %v2622, 1.0
    %v2624 = vmul.f32 %v2623, %v2608
    %vm2625 = vweird.f32 %v307
    %v2626 = vadd.s32 %v2609, 3
    %v2627 = vand.u32 %v2626, 3
    %vm2628 = vcmp.lt.s32.totalorder %v2627, 2
    %vm2629 = vcmp.eq.s32.totalorder %v2627, 0
    %v2630 = vxor.u32 %v2624, 2147483648
    %v2631 = vsel %vm2629, %v2616, %v2630
    %vm2632 = vcmp.eq.s32.totalorder %v2627, 2
    %v2633 = vxor.u32 %v2616, 2147483648
    %v2634 = vsel %vm2632, %v2633, %v2624
    %v2635 = vsel %vm2628, %v2631, %v2634
    %v2636 = vsel %vm2625, nan, %v2635
    %v2637 = vand.u32 2147483647, %v310
    %vm2638 = vcmp.le.f32.partialorder %v2637, 0.7853982
    %vm2639 = vcmp.lt.s32.totalorder %v310, 0
    %v2640 = vand.u32 %v310, 2139095040
    %v2641 = vshrl.u32 %v2640, 23
    %v2642 = vsub.s32 %v2641, 127
    %v2643 = vand.u32 2147483647, %v310
    %v2644 = vand.u32 %v2643, 8388607
    %v2645 = vor.u32 %v2644, 8388608
    %v2646 = vsub.s32 0, %v2645
    %v2647 = vadd.s32 %v2642, 1
    %vm2648 = vcmp.gt.s32.totalorder %v2647, 0
    %v2649 = vsel %vm2648, %v2647, 0
    %v2650 = vshrl.u32 %v2649, 5
    %v2651 = vand.u32 %v2649, 31
    %v2652 = vsub.s32 32, %v2651
    %v2653 = vshrl.u32 683565275, %v2652
    %v2654 = vshll.u32 683565275, %v2651
    %v2655 = vshrl.u32 2475754826, %v2652
    %v2656 = vor.u32 %v2654, %v2655
    %v2657 = vshll.u32 2475754826, %v2651
    %v2658 = vshrl.u32 2131351028, %v2652
    %v2659 = vor.u32 %v2657, %v2658
    %v2660 = vshll.u32 2131351028, %v2651
    %v2661 = vshrl.u32 2102212464, %v2652
    %v2662 = vor.u32 %v2660, %v2661
    %v2663 = vshll.u32 2102212464, %v2651
    %v2664 = vshrl.u32 920167782, %v2652
    %v2665 = vor.u32 %v2663, %v2664
    %v2666 = vshll.u32 920167782, %v2651
    %v2667 = vshrl.u32 1326507024, %v2652
    %v2668 = vor.u32 %v2666, %v2667
    %vm2669 = vcmp.lt.s32.totalorder %v2650, 1
    %vm2670 = vcmp.lt.s32.totalorder %v2650, 2
    %vm2671 = vcmp.lt.s32.totalorder %v2650, 3
    %vm2672 = vcmp.lt.s32.totalorder %v2650, 4
    %v2673 = vsel %vm2669, %v2653, %v2656
    %v2674 = vsel %vm2672, %v2662, 2102212464
    %v2675 = vsel %vm2671, %v2659, %v2674
    %v2676 = vsel %vm2670, %v2673, %v2675
    %v2677 = vsel %vm2669, %v2656, %v2659
    %v2678 = vsel %vm2672, %v2665, 920167782
    %v2679 = vsel %vm2671, %v2662, %v2678
    %v2680 = vsel %vm2670, %v2677, %v2679
    %v2681 = vsel %vm2669, %v2659, %v2662
    %v2682 = vsel %vm2672, %v2668, 1326507024
    %v2683 = vsel %vm2671, %v2665, %v2682
    %v2684 = vsel %vm2670, %v2681, %v2683
    %v2685 = vshll.u32 %v2645, 8
    %v2686 = vand.u32 %v2685, 65535
    %v2687 = vshrl.u32 %v2685, 16
    %v2688 = vand.u32 %v2684, 65535
    %v2689 = vshrl.u32 %v2684, 16
    %v2690 = vmul.u32 %v2686, %v2688
    %v2691 = vmul.u32 %v2686, %v2689
    %v2692 = vmul.u32 %v2687, %v2688
    %v2693 = vmul.u32 %v2687, %v2689
    %v2694 = vshll.u32 %v2691, 16
    %v2695 = vshrl.u32 %v2691, 16
    %v2696 = vshll.u32 %v2692, 16
    %v2697 = vshrl.u32 %v2692, 16
    %vm2698 = vc.u32 %v2690, %v2694
    %v2699 = vsel %vm2698, 1, 0
    %v2700 = vadd.s32 %v2690, %v2694
    %v2701 = vadd.s32 %v2693, %v2699
    %vm2702 = vc.u32 %v2700, %v2696
    %v2703 = vsel %vm2702, 1, 0
    %v2704 = vadd.s32 %v2700, %v2696
    %v2705 = vadd.s32 %v2701, %v2703
    %v2706 = vadd.s32 %v2705, %v2695
    %v2707 = vadd.s32 %v2706, %v2697
    %v2708 = vand.u32 %v2685, 65535
    %v2709 = vshrl.u32 %v2685, 16
    %v2710 = vand.u32 %v2680, 65535
    %v2711 = vshrl.u32 %v2680, 16
    %v2712 = vmul.u32 %v2708, %v2710
    %v2713 = vmul.u32 %v2708, %v2711
    %v2714 = vmul.u32 %v2709, %v2710
    %v2715 = vmul.u32 %v2709, %v2711
    %v2716 = vshll.u32 %v2713, 16
    %v2717 = vshrl.u32 %v2713, 16
    %v2718 = vshll.u32 %v2714, 16
    %v2719 = vshrl.u32 %v2714, 16
    %vm2720 = vc.u32 %v2712, %v2716
    %v2721 = vsel %vm2720, 1, 0
    %v2722 = vadd.s32 %v2712, %v2716
    %v2723 = vadd.s32 %v2715, %v2721
    %vm2724 = vc.u32 %v2722, %v2718
    %v2725 = vsel %vm2724, 1, 0
    %v2726 = vadd.s32 %v2722, %v2718
    %v2727 = vadd.s32 %v2723, %v2725
    %v2728 = vadd.s32 %v2727, %v2717
    %v2729 = vadd.s32 %v2728, %v2719
    %v2730 = vmul.u32 %v2685, %v2676
    %v2731 = vadd.s32 %v2707, %v2726
    %vm2732 = vc.u32 %v2707, %v2726
    %v2733 = vadd.s32 %v2729, 1
    %v2734 = vsel %vm2732, %v2733, %v2729
    %v2735 = vadd.s32 %v2730, %v2734
    %v2736 = vadd.s32 %v2735, 536870912
    %v2737 = vshrl.u32 %v2736, 30
    %v2738 = vshll.u32 %v2737, 30
    %v2739 = vsub.s32 %v2735, %v2738
    %vm2740 = vcmp.lt.s32.totalorder %v2739, 0
    %v2741 = vsub.s32 0, %v2739
    %v2742 = vsel %vm2740, %v2741, %v2739
    %v2743 = vclz %v2742
    %v2744 = vsub.s32 %v2743, 2
    %vm2745 = vcmp.gt.s32.totalorder 0, %v2744
    %v2746 = vsel %vm2745, 0, %v2744
    %v2747 = vsub.s32 32, %v2746
    %v2748 = vshll.u32 %v2739, %v2746
    %v2749 = vshrl.u32 %v2731, %v2747
    %v2750 = vor.u32 %v2748, %v2749
    %v2751 = vsub.s32 4294967266, %v2746
    %v2752 = vadd.s32 %v2751, 127
    %v2753 = vshll.u32 %v2752, 23
    %v2754 = vor.u32 4788187, %v2753
    %v2755 = vand.u32 2147483647, %v2754
    %v2757 = vcvt.s32.f32 %v2750
    %v2758 = vmul.f32 %v2757, %v2755
    %v2759 = vxor.u32 %v2758, 2147483648
    %v2760 = vsel %vm2639, %v2759, %v2758
    %v2761 = vsub.s32 4, %v2737
    %v2762 = vsel %vm2639, %v2761, %v2737
    %v2763 = vsel %vm2638, %v310, %v2760
    %v2764 = vsel %vm2638, 0, %v2762
    %v2765 = vmul.f32 %v2763, %v2763
    %v2766 = vmul.f32 %v2765, -0.001358992
    %v2767 = vadd.f32 %v2766, 0.041655596
    %v2768 = vmul.f32 %v2765, %v2767
    %v2769 = vadd.f32 %v2768, -0.4999988
    %v2770 = vmul.f32 %v2765, %v2769
    %v2771 = vadd.f32 1.0, %v2770
    %v2772 = vmul.f32 %v2763, %v2763
    %v2773 = vmul.f32 %v2772, -0.00019511016
    %v2774 = vadd.f32 %v2773, 0.008332121
    %v2775 = vmul.f32 %v2772, %v2774
    %v2776 = vadd.f32 %v2775, -0.16666654
    %v2777 = vmul.f32 %v2772, %v2776
    %v2778 = vadd.f32 %v2777, 1.0
    %v2779 = vmul.f32 %v2778, %v2763
    %vm2780 = vweird.f32 %v310
    %v2781 = vadd.s32 %v2764, 3
    %v2782 = vand.u32 %v2781, 3
    %vm2783 = vcmp.lt.s32.totalorder %v2782, 2
    %vm2784 = vcmp.eq.s32.totalorder %v2782, 0
    %v2785 = vxor.u32 %v2779, 2147483648
    %v2786 = vsel %vm2784, %v2771, %v2785
    %vm2787 = vcmp.eq.s32.totalorder %v2782, 2
    %v2788 = vxor.u32 %v2771, 2147483648
    %v2789 = vsel %vm2787, %v2788, %v2779
    %v2790 = vsel %vm2783, %v2786, %v2789
    %v2791 = vsel %vm2780, nan, %v2790
    %2792 = vset.pattern.permute.xlu0 5
    %2793 = vperm.xlu0 %2792, %v17
    %v2794 = vpop.permute.xlu0 %2793
    %2796 = vset.pattern.permute.xlu0 5
    %2797 = vperm.xlu0 %2796, %v19
    %v2798 = vpop.permute.xlu0 %2797
    %2800 = vset.pattern.permute.xlu0 5
    %2801 = vperm.xlu0 %2800, %v21
    %v2802 = vpop.permute.xlu0 %2801
    %2804 = vset.pattern.permute.xlu0 5
    %2805 = vperm.xlu0 %2804, %v23
    %v2806 = vpop.permute.xlu0 %2805
    %2808 = vset.pattern.permute.xlu0 5
    %2809 = vperm.xlu0 %2808, %v25
    %v2810 = vpop.permute.xlu0 %2809
    %2812 = vset.pattern.permute.xlu0 5
    %2813 = vperm.xlu0 %2812, %v27
    %v2814 = vpop.permute.xlu0 %2813
    %2816 = vset.pattern.permute.xlu0 5
    %2817 = vperm.xlu0 %2816, %v29
    %v2818 = vpop.permute.xlu0 %2817
    %2820 = vset.pattern.permute.xlu0 5
    %2821 = vperm.xlu0 %2820, %v31
    %v2822 = vpop.permute.xlu0 %2821
    %2824 = vset.pattern.permute.xlu0 5
    %2825 = vperm.xlu0 %2824, %v33
    %v2826 = vpop.permute.xlu0 %2825
    %2828 = vset.pattern.permute.xlu0 5
    %2829 = vperm.xlu0 %2828, %v35
    %v2830 = vpop.permute.xlu0 %2829
    %2832 = vset.pattern.permute.xlu0 5
    %2833 = vperm.xlu0 %2832, %v37
    %v2834 = vpop.permute.xlu0 %2833
    %2836 = vset.pattern.permute.xlu0 5
    %2837 = vperm.xlu0 %2836, %v39
    %v2838 = vpop.permute.xlu0 %2837
    %2840 = vset.pattern.permute.xlu0 5
    %2841 = vperm.xlu0 %2840, %v41
    %v2842 = vpop.permute.xlu0 %2841
    %2844 = vset.pattern.permute.xlu0 5
    %2845 = vperm.xlu0 %2844, %v43
    %v2846 = vpop.permute.xlu0 %2845
    %2848 = vset.pattern.permute.xlu0 5
    %2849 = vperm.xlu0 %2848, %v45
    %v2850 = vpop.permute.xlu0 %2849
    %2852 = vset.pattern.permute.xlu0 5
    %2853 = vperm.xlu0 %2852, %v47
    %v2854 = vpop.permute.xlu0 %2853
    %2856 = vmatpush.msra.mxu0 %v2791
    %2857 = vmatpush.msra.mxu0 %v2636
    %2858 = vmatpush.msra.mxu0 %v2481
    %2859 = vmatpush.msra.mxu0 %v2326
    %2860 = vmatpush.msra.mxu0 %v2171
    %2861 = vmatpush.msra.mxu0 %v2016
    %2862 = vmatpush.msra.mxu0 %v1861
    %2863 = vmatpush.msra.mxu0 %v1706
    %2864 = vmatpush.msra.mxu0 %v1551
    %2865 = vmatpush.msra.mxu0 %v1396
    %2866 = vmatpush.msra.mxu0 %v1241
    %2867 = vmatpush.msra.mxu0 %v1086
    %2868 = vmatpush.msra.mxu0 %v931
    %2869 = vmatpush.msra.mxu0 %v776
    %2870 = vmatpush.msra.mxu0 %v621
    %2871 = vmatpush.msra.mxu0 %v466
    %2872 = vmatmul.f32.gmra.mxu0 %v16
    %v2873 = vpop.f32.mrf.mxu0
    %v2874 = vadd.f32 %v2794, %v2873
    %2875 = vmatmul.f32.gmra.mxu0 %v18
    %v2876 = vpop.f32.mrf.mxu0
    %v2877 = vadd.f32 %v2798, %v2876
    %2878 = vmatmul.f32.gmra.mxu0 %v20
    %v2879 = vpop.f32.mrf.mxu0
    %v2880 = vadd.f32 %v2802, %v2879
    %2881 = vmatmul.f32.gmra.mxu0 %v22
    %v2882 = vpop.f32.mrf.mxu0
    %v2883 = vadd.f32 %v2806, %v2882
    %2884 = vmatmul.f32.gmra.mxu0 %v24
    %v2885 = vpop.f32.mrf.mxu0
    %v2886 = vadd.f32 %v2810, %v2885
    %2887 = vmatmul.f32.gmra.mxu0 %v26
    %v2888 = vpop.f32.mrf.mxu0
    %v2889 = vadd.f32 %v2814, %v2888
    %2890 = vmatmul.f32.gmra.mxu0 %v28
    %v2891 = vpop.f32.mrf.mxu0
    %v2892 = vadd.f32 %v2818, %v2891
    %2893 = vmatmul.f32.gmra.mxu0 %v30
    %v2894 = vpop.f32.mrf.mxu0
    %v2895 = vadd.f32 %v2822, %v2894
    %2896 = vmatmul.f32.gmra.mxu0 %v32
    %v2897 = vpop.f32.mrf.mxu0
    %v2898 = vadd.f32 %v2826, %v2897
    %2899 = vmatmul.f32.gmra.mxu0 %v34
    %v2900 = vpop.f32.mrf.mxu0
    %v2901 = vadd.f32 %v2830, %v2900
    %2902 = vmatmul.f32.gmra.mxu0 %v36
    %v2903 = vpop.f32.mrf.mxu0
    %v2904 = vadd.f32 %v2834, %v2903
    %2905 = vmatmul.f32.gmra.mxu0 %v38
    %v2906 = vpop.f32.mrf.mxu0
    %v2907 = vadd.f32 %v2838, %v2906
    %2908 = vmatmul.f32.gmra.mxu0 %v40
    %v2909 = vpop.f32.mrf.mxu0
    %v2910 = vadd.f32 %v2842, %v2909
    %2911 = vmatmul.f32.gmra.mxu0 %v42
    %v2912 = vpop.f32.mrf.mxu0
    %v2913 = vadd.f32 %v2846, %v2912
    %2914 = vmatmul.f32.gmra.mxu0 %v44
    %v2915 = vpop.f32.mrf.mxu0
    %v2916 = vadd.f32 %v2850, %v2915
    %2917 = vmatmul.f32.gmra.mxu0 %v46
    %v2918 = vpop.f32.mrf.mxu0
    %v2919 = vadd.f32 %v2854, %v2918
    %2920 = vdwg.mxu0
    %v2921 = vand.u32 2147483647, %v2874
    %vm2922 = vcmp.le.f32.partialorder %v2921, 0.7853982
    %vm2923 = vcmp.lt.s32.totalorder %v2874, 0
    %v2924 = vand.u32 %v2874, 2139095040
    %v2925 = vshrl.u32 %v2924, 23
    %v2926 = vsub.s32 %v2925, 127
    %v2927 = vand.u32 2147483647, %v2874
    %v2928 = vand.u32 %v2927, 8388607
    %v2929 = vor.u32 %v2928, 8388608
    %v2930 = vsub.s32 0, %v2929
    %v2931 = vadd.s32 %v2926, 1
    %vm2932 = vcmp.gt.s32.totalorder %v2931, 0
    %v2933 = vsel %vm2932, %v2931, 0
    %v2934 = vshrl.u32 %v2933, 5
    %v2935 = vand.u32 %v2933, 31
    %v2936 = vsub.s32 32, %v2935
    %v2937 = vshrl.u32 683565275, %v2936
    %v2938 = vshll.u32 683565275, %v2935
    %v2939 = vshrl.u32 2475754826, %v2936
    %v2940 = vor.u32 %v2938, %v2939
    %v2941 = vshll.u32 2475754826, %v2935
    %v2942 = vshrl.u32 2131351028, %v2936
    %v2943 = vor.u32 %v2941, %v2942
    %v2944 = vshll.u32 2131351028, %v2935
    %v2945 = vshrl.u32 2102212464, %v2936
    %v2946 = vor.u32 %v2944, %v2945
    %v2947 = vshll.u32 2102212464, %v2935
    %v2948 = vshrl.u32 920167782, %v2936
    %v2949 = vor.u32 %v2947, %v2948
    %v2950 = vshll.u32 920167782, %v2935
    %v2951 = vshrl.u32 1326507024, %v2936
    %v2952 = vor.u32 %v2950, %v2951
    %vm2953 = vcmp.lt.s32.totalorder %v2934, 1
    %vm2954 = vcmp.lt.s32.totalorder %v2934, 2
    %vm2955 = vcmp.lt.s32.totalorder %v2934, 3
    %vm2956 = vcmp.lt.s32.totalorder %v2934, 4
    %v2957 = vsel %vm2953, %v2937, %v2940
    %v2958 = vsel %vm2956, %v2946, 2102212464
    %v2959 = vsel %vm2955, %v2943, %v2958
    %v2960 = vsel %vm2954, %v2957, %v2959
    %v2961 = vsel %vm2953, %v2940, %v2943
    %v2962 = vsel %vm2956, %v2949, 920167782
    %v2963 = vsel %vm2955, %v2946, %v2962
    %v2964 = vsel %vm2954, %v2961, %v2963
    %v2965 = vsel %vm2953, %v2943, %v2946
    %v2966 = vsel %vm2956, %v2952, 1326507024
    %v2967 = vsel %vm2955, %v2949, %v2966
    %v2968 = vsel %vm2954, %v2965, %v2967
    %v2969 = vshll.u32 %v2929, 8
    %v2970 = vand.u32 %v2969, 65535
    %v2971 = vshrl.u32 %v2969, 16
    %v2972 = vand.u32 %v2968, 65535
    %v2973 = vshrl.u32 %v2968, 16
    %v2974 = vmul.u32 %v2970, %v2972
    %v2975 = vmul.u32 %v2970, %v2973
    %v2976 = vmul.u32 %v2971, %v2972
    %v2977 = vmul.u32 %v2971, %v2973
    %v2978 = vshll.u32 %v2975, 16
    %v2979 = vshrl.u32 %v2975, 16
    %v2980 = vshll.u32 %v2976, 16
    %v2981 = vshrl.u32 %v2976, 16
    %vm2982 = vc.u32 %v2974, %v2978
    %v2983 = vsel %vm2982, 1, 0
    %v2984 = vadd.s32 %v2974, %v2978
    %v2985 = vadd.s32 %v2977, %v2983
    %vm2986 = vc.u32 %v2984, %v2980
    %v2987 = vsel %vm2986, 1, 0
    %v2988 = vadd.s32 %v2984, %v2980
    %v2989 = vadd.s32 %v2985, %v2987
    %v2990 = vadd.s32 %v2989, %v2979
    %v2991 = vadd.s32 %v2990, %v2981
    %v2992 = vand.u32 %v2969, 65535
    %v2993 = vshrl.u32 %v2969, 16
    %v2994 = vand.u32 %v2964, 65535
    %v2995 = vshrl.u32 %v2964, 16
    %v2996 = vmul.u32 %v2992, %v2994
    %v2997 = vmul.u32 %v2992, %v2995
    %v2998 = vmul.u32 %v2993, %v2994
    %v2999 = vmul.u32 %v2993, %v2995
    %v3000 = vshll.u32 %v2997, 16
    %v3001 = vshrl.u32 %v2997, 16
    %v3002 = vshll.u32 %v2998, 16
    %v3003 = vshrl.u32 %v2998, 16
    %vm3004 = vc.u32 %v2996, %v3000
    %v3005 = vsel %vm3004, 1, 0
    %v3006 = vadd.s32 %v2996, %v3000
    %v3007 = vadd.s32 %v2999, %v3005
    %vm3008 = vc.u32 %v3006, %v3002
    %v3009 = vsel %vm3008, 1, 0
    %v3010 = vadd.s32 %v3006, %v3002
    %v3011 = vadd.s32 %v3007, %v3009
    %v3012 = vadd.s32 %v3011, %v3001
    %v3013 = vadd.s32 %v3012, %v3003
    %v3014 = vmul.u32 %v2969, %v2960
    %v3015 = vadd.s32 %v2991, %v3010
    %vm3016 = vc.u32 %v2991, %v3010
    %v3017 = vadd.s32 %v3013, 1
    %v3018 = vsel %vm3016, %v3017, %v3013
    %v3019 = vadd.s32 %v3014, %v3018
    %v3020 = vadd.s32 %v3019, 536870912
    %v3021 = vshrl.u32 %v3020, 30
    %v3022 = vshll.u32 %v3021, 30
    %v3023 = vsub.s32 %v3019, %v3022
    %vm3024 = vcmp.lt.s32.totalorder %v3023, 0
    %v3025 = vsub.s32 0, %v3023
    %v3026 = vsel %vm3024, %v3025, %v3023
    %v3027 = vclz %v3026
    %v3028 = vsub.s32 %v3027, 2
    %vm3029 = vcmp.gt.s32.totalorder 0, %v3028
    %v3030 = vsel %vm3029, 0, %v3028
    %v3031 = vsub.s32 32, %v3030
    %v3032 = vshll.u32 %v3023, %v3030
    %v3033 = vshrl.u32 %v3015, %v3031
    %v3034 = vor.u32 %v3032, %v3033
    %v3035 = vsub.s32 4294967266, %v3030
    %v3036 = vadd.s32 %v3035, 127
    %v3037 = vshll.u32 %v3036, 23
    %v3038 = vor.u32 4788187, %v3037
    %v3039 = vand.u32 2147483647, %v3038
    %v3041 = vcvt.s32.f32 %v3034
    %v3042 = vmul.f32 %v3041, %v3039
    %v3043 = vxor.u32 %v3042, 2147483648
    %v3044 = vsel %vm2923, %v3043, %v3042
    %v3045 = vsub.s32 4, %v3021
    %v3046 = vsel %vm2923, %v3045, %v3021
    %v3047 = vsel %vm2922, %v2874, %v3044
    %v3048 = vsel %vm2922, 0, %v3046
    %v3049 = vmul.f32 %v3047, %v3047
    %v3050 = vmul.f32 %v3049, -0.001358992
    %v3051 = vadd.f32 %v3050, 0.041655596
    %v3052 = vmul.f32 %v3049, %v3051
    %v3053 = vadd.f32 %v3052, -0.4999988
    %v3054 = vmul.f32 %v3049, %v3053
    %v3055 = vadd.f32 1.0, %v3054
    %v3056 = vmul.f32 %v3047, %v3047
    %v3057 = vmul.f32 %v3056, -0.00019511016
    %v3058 = vadd.f32 %v3057, 0.008332121
    %v3059 = vmul.f32 %v3056, %v3058
    %v3060 = vadd.f32 %v3059, -0.16666654
    %v3061 = vmul.f32 %v3056, %v3060
    %v3062 = vadd.f32 %v3061, 1.0
    %v3063 = vmul.f32 %v3062, %v3047
    %vm3064 = vweird.f32 %v2874
    %v3065 = vadd.s32 %v3048, 3
    %v3066 = vand.u32 %v3065, 3
    %vm3067 = vcmp.lt.s32.totalorder %v3066, 2
    %vm3068 = vcmp.eq.s32.totalorder %v3066, 0
    %v3069 = vxor.u32 %v3063, 2147483648
    %v3070 = vsel %vm3068, %v3055, %v3069
    %vm3071 = vcmp.eq.s32.totalorder %v3066, 2
    %v3072 = vxor.u32 %v3055, 2147483648
    %v3073 = vsel %vm3071, %v3072, %v3063
    %v3074 = vsel %vm3067, %v3070, %v3073
    %v3075 = vsel %vm3064, nan, %v3074
    %v3076 = vand.u32 2147483647, %v2877
    %vm3077 = vcmp.le.f32.partialorder %v3076, 0.7853982
    %vm3078 = vcmp.lt.s32.totalorder %v2877, 0
    %v3079 = vand.u32 %v2877, 2139095040
    %v3080 = vshrl.u32 %v3079, 23
    %v3081 = vsub.s32 %v3080, 127
    %v3082 = vand.u32 2147483647, %v2877
    %v3083 = vand.u32 %v3082, 8388607
    %v3084 = vor.u32 %v3083, 8388608
    %v3085 = vsub.s32 0, %v3084
    %v3086 = vadd.s32 %v3081, 1
    %vm3087 = vcmp.gt.s32.totalorder %v3086, 0
    %v3088 = vsel %vm3087, %v3086, 0
    %v3089 = vshrl.u32 %v3088, 5
    %v3090 = vand.u32 %v3088, 31
    %v3091 = vsub.s32 32, %v3090
    %v3092 = vshrl.u32 683565275, %v3091
    %v3093 = vshll.u32 683565275, %v3090
    %v3094 = vshrl.u32 2475754826, %v3091
    %v3095 = vor.u32 %v3093, %v3094
    %v3096 = vshll.u32 2475754826, %v3090
    %v3097 = vshrl.u32 2131351028, %v3091
    %v3098 = vor.u32 %v3096, %v3097
    %v3099 = vshll.u32 2131351028, %v3090
    %v3100 = vshrl.u32 2102212464, %v3091
    %v3101 = vor.u32 %v3099, %v3100
    %v3102 = vshll.u32 2102212464, %v3090
    %v3103 = vshrl.u32 920167782, %v3091
    %v3104 = vor.u32 %v3102, %v3103
    %v3105 = vshll.u32 920167782, %v3090
    %v3106 = vshrl.u32 1326507024, %v3091
    %v3107 = vor.u32 %v3105, %v3106
    %vm3108 = vcmp.lt.s32.totalorder %v3089, 1
    %vm3109 = vcmp.lt.s32.totalorder %v3089, 2
    %vm3110 = vcmp.lt.s32.totalorder %v3089, 3
    %vm3111 = vcmp.lt.s32.totalorder %v3089, 4
    %v3112 = vsel %vm3108, %v3092, %v3095
    %v3113 = vsel %vm3111, %v3101, 2102212464
    %v3114 = vsel %vm3110, %v3098, %v3113
    %v3115 = vsel %vm3109, %v3112, %v3114
    %v3116 = vsel %vm3108, %v3095, %v3098
    %v3117 = vsel %vm3111, %v3104, 920167782
    %v3118 = vsel %vm3110, %v3101, %v3117
    %v3119 = vsel %vm3109, %v3116, %v3118
    %v3120 = vsel %vm3108, %v3098, %v3101
    %v3121 = vsel %vm3111, %v3107, 1326507024
    %v3122 = vsel %vm3110, %v3104, %v3121
    %v3123 = vsel %vm3109, %v3120, %v3122
    %v3124 = vshll.u32 %v3084, 8
    %v3125 = vand.u32 %v3124, 65535
    %v3126 = vshrl.u32 %v3124, 16
    %v3127 = vand.u32 %v3123, 65535
    %v3128 = vshrl.u32 %v3123, 16
    %v3129 = vmul.u32 %v3125, %v3127
    %v3130 = vmul.u32 %v3125, %v3128
    %v3131 = vmul.u32 %v3126, %v3127
    %v3132 = vmul.u32 %v3126, %v3128
    %v3133 = vshll.u32 %v3130, 16
    %v3134 = vshrl.u32 %v3130, 16
    %v3135 = vshll.u32 %v3131, 16
    %v3136 = vshrl.u32 %v3131, 16
    %vm3137 = vc.u32 %v3129, %v3133
    %v3138 = vsel %vm3137, 1, 0
    %v3139 = vadd.s32 %v3129, %v3133
    %v3140 = vadd.s32 %v3132, %v3138
    %vm3141 = vc.u32 %v3139, %v3135
    %v3142 = vsel %vm3141, 1, 0
    %v3143 = vadd.s32 %v3139, %v3135
    %v3144 = vadd.s32 %v3140, %v3142
    %v3145 = vadd.s32 %v3144, %v3134
    %v3146 = vadd.s32 %v3145, %v3136
    %v3147 = vand.u32 %v3124, 65535
    %v3148 = vshrl.u32 %v3124, 16
    %v3149 = vand.u32 %v3119, 65535
    %v3150 = vshrl.u32 %v3119, 16
    %v3151 = vmul.u32 %v3147, %v3149
    %v3152 = vmul.u32 %v3147, %v3150
    %v3153 = vmul.u32 %v3148, %v3149
    %v3154 = vmul.u32 %v3148, %v3150
    %v3155 = vshll.u32 %v3152, 16
    %v3156 = vshrl.u32 %v3152, 16
    %v3157 = vshll.u32 %v3153, 16
    %v3158 = vshrl.u32 %v3153, 16
    %vm3159 = vc.u32 %v3151, %v3155
    %v3160 = vsel %vm3159, 1, 0
    %v3161 = vadd.s32 %v3151, %v3155
    %v3162 = vadd.s32 %v3154, %v3160
    %vm3163 = vc.u32 %v3161, %v3157
    %v3164 = vsel %vm3163, 1, 0
    %v3165 = vadd.s32 %v3161, %v3157
    %v3166 = vadd.s32 %v3162, %v3164
    %v3167 = vadd.s32 %v3166, %v3156
    %v3168 = vadd.s32 %v3167, %v3158
    %v3169 = vmul.u32 %v3124, %v3115
    %v3170 = vadd.s32 %v3146, %v3165
    %vm3171 = vc.u32 %v3146, %v3165
    %v3172 = vadd.s32 %v3168, 1
    %v3173 = vsel %vm3171, %v3172, %v3168
    %v3174 = vadd.s32 %v3169, %v3173
    %v3175 = vadd.s32 %v3174, 536870912
    %v3176 = vshrl.u32 %v3175, 30
    %v3177 = vshll.u32 %v3176, 30
    %v3178 = vsub.s32 %v3174, %v3177
    %vm3179 = vcmp.lt.s32.totalorder %v3178, 0
    %v3180 = vsub.s32 0, %v3178
    %v3181 = vsel %vm3179, %v3180, %v3178
    %v3182 = vclz %v3181
    %v3183 = vsub.s32 %v3182, 2
    %vm3184 = vcmp.gt.s32.totalorder 0, %v3183
    %v3185 = vsel %vm3184, 0, %v3183
    %v3186 = vsub.s32 32, %v3185
    %v3187 = vshll.u32 %v3178, %v3185
    %v3188 = vshrl.u32 %v3170, %v3186
    %v3189 = vor.u32 %v3187, %v3188
    %v3190 = vsub.s32 4294967266, %v3185
    %v3191 = vadd.s32 %v3190, 127
    %v3192 = vshll.u32 %v3191, 23
    %v3193 = vor.u32 4788187, %v3192
    %v3194 = vand.u32 2147483647, %v3193
    %v3196 = vcvt.s32.f32 %v3189
    %v3197 = vmul.f32 %v3196, %v3194
    %v3198 = vxor.u32 %v3197, 2147483648
    %v3199 = vsel %vm3078, %v3198, %v3197
    %v3200 = vsub.s32 4, %v3176
    %v3201 = vsel %vm3078, %v3200, %v3176
    %v3202 = vsel %vm3077, %v2877, %v3199
    %v3203 = vsel %vm3077, 0, %v3201
    %v3204 = vmul.f32 %v3202, %v3202
    %v3205 = vmul.f32 %v3204, -0.001358992
    %v3206 = vadd.f32 %v3205, 0.041655596
    %v3207 = vmul.f32 %v3204, %v3206
    %v3208 = vadd.f32 %v3207, -0.4999988
    %v3209 = vmul.f32 %v3204, %v3208
    %v3210 = vadd.f32 1.0, %v3209
    %v3211 = vmul.f32 %v3202, %v3202
    %v3212 = vmul.f32 %v3211, -0.00019511016
    %v3213 = vadd.f32 %v3212, 0.008332121
    %v3214 = vmul.f32 %v3211, %v3213
    %v3215 = vadd.f32 %v3214, -0.16666654
    %v3216 = vmul.f32 %v3211, %v3215
    %v3217 = vadd.f32 %v3216, 1.0
    %v3218 = vmul.f32 %v3217, %v3202
    %vm3219 = vweird.f32 %v2877
    %v3220 = vadd.s32 %v3203, 3
    %v3221 = vand.u32 %v3220, 3
    %vm3222 = vcmp.lt.s32.totalorder %v3221, 2
    %vm3223 = vcmp.eq.s32.totalorder %v3221, 0
    %v3224 = vxor.u32 %v3218, 2147483648
    %v3225 = vsel %vm3223, %v3210, %v3224
    %vm3226 = vcmp.eq.s32.totalorder %v3221, 2
    %v3227 = vxor.u32 %v3210, 2147483648
    %v3228 = vsel %vm3226, %v3227, %v3218
    %v3229 = vsel %vm3222, %v3225, %v3228
    %v3230 = vsel %vm3219, nan, %v3229
    %v3231 = vand.u32 2147483647, %v2880
    %vm3232 = vcmp.le.f32.partialorder %v3231, 0.7853982
    %vm3233 = vcmp.lt.s32.totalorder %v2880, 0
    %v3234 = vand.u32 %v2880, 2139095040
    %v3235 = vshrl.u32 %v3234, 23
    %v3236 = vsub.s32 %v3235, 127
    %v3237 = vand.u32 2147483647, %v2880
    %v3238 = vand.u32 %v3237, 8388607
    %v3239 = vor.u32 %v3238, 8388608
    %v3240 = vsub.s32 0, %v3239
    %v3241 = vadd.s32 %v3236, 1
    %vm3242 = vcmp.gt.s32.totalorder %v3241, 0
    %v3243 = vsel %vm3242, %v3241, 0
    %v3244 = vshrl.u32 %v3243, 5
    %v3245 = vand.u32 %v3243, 31
    %v3246 = vsub.s32 32, %v3245
    %v3247 = vshrl.u32 683565275, %v3246
    %v3248 = vshll.u32 683565275, %v3245
    %v3249 = vshrl.u32 2475754826, %v3246
    %v3250 = vor.u32 %v3248, %v3249
    %v3251 = vshll.u32 2475754826, %v3245
    %v3252 = vshrl.u32 2131351028, %v3246
    %v3253 = vor.u32 %v3251, %v3252
    %v3254 = vshll.u32 2131351028, %v3245
    %v3255 = vshrl.u32 2102212464, %v3246
    %v3256 = vor.u32 %v3254, %v3255
    %v3257 = vshll.u32 2102212464, %v3245
    %v3258 = vshrl.u32 920167782, %v3246
    %v3259 = vor.u32 %v3257, %v3258
    %v3260 = vshll.u32 920167782, %v3245
    %v3261 = vshrl.u32 1326507024, %v3246
    %v3262 = vor.u32 %v3260, %v3261
    %vm3263 = vcmp.lt.s32.totalorder %v3244, 1
    %vm3264 = vcmp.lt.s32.totalorder %v3244, 2
    %vm3265 = vcmp.lt.s32.totalorder %v3244, 3
    %vm3266 = vcmp.lt.s32.totalorder %v3244, 4
    %v3267 = vsel %vm3263, %v3247, %v3250
    %v3268 = vsel %vm3266, %v3256, 2102212464
    %v3269 = vsel %vm3265, %v3253, %v3268
    %v3270 = vsel %vm3264, %v3267, %v3269
    %v3271 = vsel %vm3263, %v3250, %v3253
    %v3272 = vsel %vm3266, %v3259, 920167782
    %v3273 = vsel %vm3265, %v3256, %v3272
    %v3274 = vsel %vm3264, %v3271, %v3273
    %v3275 = vsel %vm3263, %v3253, %v3256
    %v3276 = vsel %vm3266, %v3262, 1326507024
    %v3277 = vsel %vm3265, %v3259, %v3276
    %v3278 = vsel %vm3264, %v3275, %v3277
    %v3279 = vshll.u32 %v3239, 8
    %v3280 = vand.u32 %v3279, 65535
    %v3281 = vshrl.u32 %v3279, 16
    %v3282 = vand.u32 %v3278, 65535
    %v3283 = vshrl.u32 %v3278, 16
    %v3284 = vmul.u32 %v3280, %v3282
    %v3285 = vmul.u32 %v3280, %v3283
    %v3286 = vmul.u32 %v3281, %v3282
    %v3287 = vmul.u32 %v3281, %v3283
    %v3288 = vshll.u32 %v3285, 16
    %v3289 = vshrl.u32 %v3285, 16
    %v3290 = vshll.u32 %v3286, 16
    %v3291 = vshrl.u32 %v3286, 16
    %vm3292 = vc.u32 %v3284, %v3288
    %v3293 = vsel %vm3292, 1, 0
    %v3294 = vadd.s32 %v3284, %v3288
    %v3295 = vadd.s32 %v3287, %v3293
    %vm3296 = vc.u32 %v3294, %v3290
    %v3297 = vsel %vm3296, 1, 0
    %v3298 = vadd.s32 %v3294, %v3290
    %v3299 = vadd.s32 %v3295, %v3297
    %v3300 = vadd.s32 %v3299, %v3289
    %v3301 = vadd.s32 %v3300, %v3291
    %v3302 = vand.u32 %v3279, 65535
    %v3303 = vshrl.u32 %v3279, 16
    %v3304 = vand.u32 %v3274, 65535
    %v3305 = vshrl.u32 %v3274, 16
    %v3306 = vmul.u32 %v3302, %v3304
    %v3307 = vmul.u32 %v3302, %v3305
    %v3308 = vmul.u32 %v3303, %v3304
    %v3309 = vmul.u32 %v3303, %v3305
    %v3310 = vshll.u32 %v3307, 16
    %v3311 = vshrl.u32 %v3307, 16
    %v3312 = vshll.u32 %v3308, 16
    %v3313 = vshrl.u32 %v3308, 16
    %vm3314 = vc.u32 %v3306, %v3310
    %v3315 = vsel %vm3314, 1, 0
    %v3316 = vadd.s32 %v3306, %v3310
    %v3317 = vadd.s32 %v3309, %v3315
    %vm3318 = vc.u32 %v3316, %v3312
    %v3319 = vsel %vm3318, 1, 0
    %v3320 = vadd.s32 %v3316, %v3312
    %v3321 = vadd.s32 %v3317, %v3319
    %v3322 = vadd.s32 %v3321, %v3311
    %v3323 = vadd.s32 %v3322, %v3313
    %v3324 = vmul.u32 %v3279, %v3270
    %v3325 = vadd.s32 %v3301, %v3320
    %vm3326 = vc.u32 %v3301, %v3320
    %v3327 = vadd.s32 %v3323, 1
    %v3328 = vsel %vm3326, %v3327, %v3323
    %v3329 = vadd.s32 %v3324, %v3328
    %v3330 = vadd.s32 %v3329, 536870912
    %v3331 = vshrl.u32 %v3330, 30
    %v3332 = vshll.u32 %v3331, 30
    %v3333 = vsub.s32 %v3329, %v3332
    %vm3334 = vcmp.lt.s32.totalorder %v3333, 0
    %v3335 = vsub.s32 0, %v3333
    %v3336 = vsel %vm3334, %v3335, %v3333
    %v3337 = vclz %v3336
    %v3338 = vsub.s32 %v3337, 2
    %vm3339 = vcmp.gt.s32.totalorder 0, %v3338
    %v3340 = vsel %vm3339, 0, %v3338
    %v3341 = vsub.s32 32, %v3340
    %v3342 = vshll.u32 %v3333, %v3340
    %v3343 = vshrl.u32 %v3325, %v3341
    %v3344 = vor.u32 %v3342, %v3343
    %v3345 = vsub.s32 4294967266, %v3340
    %v3346 = vadd.s32 %v3345, 127
    %v3347 = vshll.u32 %v3346, 23
    %v3348 = vor.u32 4788187, %v3347
    %v3349 = vand.u32 2147483647, %v3348
    %v3351 = vcvt.s32.f32 %v3344
    %v3352 = vmul.f32 %v3351, %v3349
    %v3353 = vxor.u32 %v3352, 2147483648
    %v3354 = vsel %vm3233, %v3353, %v3352
    %v3355 = vsub.s32 4, %v3331
    %v3356 = vsel %vm3233, %v3355, %v3331
    %v3357 = vsel %vm3232, %v2880, %v3354
    %v3358 = vsel %vm3232, 0, %v3356
    %v3359 = vmul.f32 %v3357, %v3357
    %v3360 = vmul.f32 %v3359, -0.001358992
    %v3361 = vadd.f32 %v3360, 0.041655596
    %v3362 = vmul.f32 %v3359, %v3361
    %v3363 = vadd.f32 %v3362, -0.4999988
    %v3364 = vmul.f32 %v3359, %v3363
    %v3365 = vadd.f32 1.0, %v3364
    %v3366 = vmul.f32 %v3357, %v3357
    %v3367 = vmul.f32 %v3366, -0.00019511016
    %v3368 = vadd.f32 %v3367, 0.008332121
    %v3369 = vmul.f32 %v3366, %v3368
    %v3370 = vadd.f32 %v3369, -0.16666654
    %v3371 = vmul.f32 %v3366, %v3370
    %v3372 = vadd.f32 %v3371, 1.0
    %v3373 = vmul.f32 %v3372, %v3357
    %vm3374 = vweird.f32 %v2880
    %v3375 = vadd.s32 %v3358, 3
    %v3376 = vand.u32 %v3375, 3
    %vm3377 = vcmp.lt.s32.totalorder %v3376, 2
    %vm3378 = vcmp.eq.s32.totalorder %v3376, 0
    %v3379 = vxor.u32 %v3373, 2147483648
    %v3380 = vsel %vm3378, %v3365, %v3379
    %vm3381 = vcmp.eq.s32.totalorder %v3376, 2
    %v3382 = vxor.u32 %v3365, 2147483648
    %v3383 = vsel %vm3381, %v3382, %v3373
    %v3384 = vsel %vm3377, %v3380, %v3383
    %v3385 = vsel %vm3374, nan, %v3384
    %v3386 = vand.u32 2147483647, %v2883
    %vm3387 = vcmp.le.f32.partialorder %v3386, 0.7853982
    %vm3388 = vcmp.lt.s32.totalorder %v2883, 0
    %v3389 = vand.u32 %v2883, 2139095040
    %v3390 = vshrl.u32 %v3389, 23
    %v3391 = vsub.s32 %v3390, 127
    %v3392 = vand.u32 2147483647, %v2883
    %v3393 = vand.u32 %v3392, 8388607
    %v3394 = vor.u32 %v3393, 8388608
    %v3395 = vsub.s32 0, %v3394
    %v3396 = vadd.s32 %v3391, 1
    %vm3397 = vcmp.gt.s32.totalorder %v3396, 0
    %v3398 = vsel %vm3397, %v3396, 0
    %v3399 = vshrl.u32 %v3398, 5
    %v3400 = vand.u32 %v3398, 31
    %v3401 = vsub.s32 32, %v3400
    %v3402 = vshrl.u32 683565275, %v3401
    %v3403 = vshll.u32 683565275, %v3400
    %v3404 = vshrl.u32 2475754826, %v3401
    %v3405 = vor.u32 %v3403, %v3404
    %v3406 = vshll.u32 2475754826, %v3400
    %v3407 = vshrl.u32 2131351028, %v3401
    %v3408 = vor.u32 %v3406, %v3407
    %v3409 = vshll.u32 2131351028, %v3400
    %v3410 = vshrl.u32 2102212464, %v3401
    %v3411 = vor.u32 %v3409, %v3410
    %v3412 = vshll.u32 2102212464, %v3400
    %v3413 = vshrl.u32 920167782, %v3401
    %v3414 = vor.u32 %v3412, %v3413
    %v3415 = vshll.u32 920167782, %v3400
    %v3416 = vshrl.u32 1326507024, %v3401
    %v3417 = vor.u32 %v3415, %v3416
    %vm3418 = vcmp.lt.s32.totalorder %v3399, 1
    %vm3419 = vcmp.lt.s32.totalorder %v3399, 2
    %vm3420 = vcmp.lt.s32.totalorder %v3399, 3
    %vm3421 = vcmp.lt.s32.totalorder %v3399, 4
    %v3422 = vsel %vm3418, %v3402, %v3405
    %v3423 = vsel %vm3421, %v3411, 2102212464
    %v3424 = vsel %vm3420, %v3408, %v3423
    %v3425 = vsel %vm3419, %v3422, %v3424
    %v3426 = vsel %vm3418, %v3405, %v3408
    %v3427 = vsel %vm3421, %v3414, 920167782
    %v3428 = vsel %vm3420, %v3411, %v3427
    %v3429 = vsel %vm3419, %v3426, %v3428
    %v3430 = vsel %vm3418, %v3408, %v3411
    %v3431 = vsel %vm3421, %v3417, 1326507024
    %v3432 = vsel %vm3420, %v3414, %v3431
    %v3433 = vsel %vm3419, %v3430, %v3432
    %v3434 = vshll.u32 %v3394, 8
    %v3435 = vand.u32 %v3434, 65535
    %v3436 = vshrl.u32 %v3434, 16
    %v3437 = vand.u32 %v3433, 65535
    %v3438 = vshrl.u32 %v3433, 16
    %v3439 = vmul.u32 %v3435, %v3437
    %v3440 = vmul.u32 %v3435, %v3438
    %v3441 = vmul.u32 %v3436, %v3437
    %v3442 = vmul.u32 %v3436, %v3438
    %v3443 = vshll.u32 %v3440, 16
    %v3444 = vshrl.u32 %v3440, 16
    %v3445 = vshll.u32 %v3441, 16
    %v3446 = vshrl.u32 %v3441, 16
    %vm3447 = vc.u32 %v3439, %v3443
    %v3448 = vsel %vm3447, 1, 0
    %v3449 = vadd.s32 %v3439, %v3443
    %v3450 = vadd.s32 %v3442, %v3448
    %vm3451 = vc.u32 %v3449, %v3445
    %v3452 = vsel %vm3451, 1, 0
    %v3453 = vadd.s32 %v3449, %v3445
    %v3454 = vadd.s32 %v3450, %v3452
    %v3455 = vadd.s32 %v3454, %v3444
    %v3456 = vadd.s32 %v3455, %v3446
    %v3457 = vand.u32 %v3434, 65535
    %v3458 = vshrl.u32 %v3434, 16
    %v3459 = vand.u32 %v3429, 65535
    %v3460 = vshrl.u32 %v3429, 16
    %v3461 = vmul.u32 %v3457, %v3459
    %v3462 = vmul.u32 %v3457, %v3460
    %v3463 = vmul.u32 %v3458, %v3459
    %v3464 = vmul.u32 %v3458, %v3460
    %v3465 = vshll.u32 %v3462, 16
    %v3466 = vshrl.u32 %v3462, 16
    %v3467 = vshll.u32 %v3463, 16
    %v3468 = vshrl.u32 %v3463, 16
    %vm3469 = vc.u32 %v3461, %v3465
    %v3470 = vsel %vm3469, 1, 0
    %v3471 = vadd.s32 %v3461, %v3465
    %v3472 = vadd.s32 %v3464, %v3470
    %vm3473 = vc.u32 %v3471, %v3467
    %v3474 = vsel %vm3473, 1, 0
    %v3475 = vadd.s32 %v3471, %v3467
    %v3476 = vadd.s32 %v3472, %v3474
    %v3477 = vadd.s32 %v3476, %v3466
    %v3478 = vadd.s32 %v3477, %v3468
    %v3479 = vmul.u32 %v3434, %v3425
    %v3480 = vadd.s32 %v3456, %v3475
    %vm3481 = vc.u32 %v3456, %v3475
    %v3482 = vadd.s32 %v3478, 1
    %v3483 = vsel %vm3481, %v3482, %v3478
    %v3484 = vadd.s32 %v3479, %v3483
    %v3485 = vadd.s32 %v3484, 536870912
    %v3486 = vshrl.u32 %v3485, 30
    %v3487 = vshll.u32 %v3486, 30
    %v3488 = vsub.s32 %v3484, %v3487
    %vm3489 = vcmp.lt.s32.totalorder %v3488, 0
    %v3490 = vsub.s32 0, %v3488
    %v3491 = vsel %vm3489, %v3490, %v3488
    %v3492 = vclz %v3491
    %v3493 = vsub.s32 %v3492, 2
    %vm3494 = vcmp.gt.s32.totalorder 0, %v3493
    %v3495 = vsel %vm3494, 0, %v3493
    %v3496 = vsub.s32 32, %v3495
    %v3497 = vshll.u32 %v3488, %v3495
    %v3498 = vshrl.u32 %v3480, %v3496
    %v3499 = vor.u32 %v3497, %v3498
    %v3500 = vsub.s32 4294967266, %v3495
    %v3501 = vadd.s32 %v3500, 127
    %v3502 = vshll.u32 %v3501, 23
    %v3503 = vor.u32 4788187, %v3502
    %v3504 = vand.u32 2147483647, %v3503
    %v3506 = vcvt.s32.f32 %v3499
    %v3507 = vmul.f32 %v3506, %v3504
    %v3508 = vxor.u32 %v3507, 2147483648
    %v3509 = vsel %vm3388, %v3508, %v3507
    %v3510 = vsub.s32 4, %v3486
    %v3511 = vsel %vm3388, %v3510, %v3486
    %v3512 = vsel %vm3387, %v2883, %v3509
    %v3513 = vsel %vm3387, 0, %v3511
    %v3514 = vmul.f32 %v3512, %v3512
    %v3515 = vmul.f32 %v3514, -0.001358992
    %v3516 = vadd.f32 %v3515, 0.041655596
    %v3517 = vmul.f32 %v3514, %v3516
    %v3518 = vadd.f32 %v3517, -0.4999988
    %v3519 = vmul.f32 %v3514, %v3518
    %v3520 = vadd.f32 1.0, %v3519
    %v3521 = vmul.f32 %v3512, %v3512
    %v3522 = vmul.f32 %v3521, -0.00019511016
    %v3523 = vadd.f32 %v3522, 0.008332121
    %v3524 = vmul.f32 %v3521, %v3523
    %v3525 = vadd.f32 %v3524, -0.16666654
    %v3526 = vmul.f32 %v3521, %v3525
    %v3527 = vadd.f32 %v3526, 1.0
    %v3528 = vmul.f32 %v3527, %v3512
    %vm3529 = vweird.f32 %v2883
    %v3530 = vadd.s32 %v3513, 3
    %v3531 = vand.u32 %v3530, 3
    %vm3532 = vcmp.lt.s32.totalorder %v3531, 2
    %vm3533 = vcmp.eq.s32.totalorder %v3531, 0
    %v3534 = vxor.u32 %v3528, 2147483648
    %v3535 = vsel %vm3533, %v3520, %v3534
    %vm3536 = vcmp.eq.s32.totalorder %v3531, 2
    %v3537 = vxor.u32 %v3520, 2147483648
    %v3538 = vsel %vm3536, %v3537, %v3528
    %v3539 = vsel %vm3532, %v3535, %v3538
    %v3540 = vsel %vm3529, nan, %v3539
    %v3541 = vand.u32 2147483647, %v2886
    %vm3542 = vcmp.le.f32.partialorder %v3541, 0.7853982
    %vm3543 = vcmp.lt.s32.totalorder %v2886, 0
    %v3544 = vand.u32 %v2886, 2139095040
    %v3545 = vshrl.u32 %v3544, 23
    %v3546 = vsub.s32 %v3545, 127
    %v3547 = vand.u32 2147483647, %v2886
    %v3548 = vand.u32 %v3547, 8388607
    %v3549 = vor.u32 %v3548, 8388608
    %v3550 = vsub.s32 0, %v3549
    %v3551 = vadd.s32 %v3546, 1
    %vm3552 = vcmp.gt.s32.totalorder %v3551, 0
    %v3553 = vsel %vm3552, %v3551, 0
    %v3554 = vshrl.u32 %v3553, 5
    %v3555 = vand.u32 %v3553, 31
    %v3556 = vsub.s32 32, %v3555
    %v3557 = vshrl.u32 683565275, %v3556
    %v3558 = vshll.u32 683565275, %v3555
    %v3559 = vshrl.u32 2475754826, %v3556
    %v3560 = vor.u32 %v3558, %v3559
    %v3561 = vshll.u32 2475754826, %v3555
    %v3562 = vshrl.u32 2131351028, %v3556
    %v3563 = vor.u32 %v3561, %v3562
    %v3564 = vshll.u32 2131351028, %v3555
    %v3565 = vshrl.u32 2102212464, %v3556
    %v3566 = vor.u32 %v3564, %v3565
    %v3567 = vshll.u32 2102212464, %v3555
    %v3568 = vshrl.u32 920167782, %v3556
    %v3569 = vor.u32 %v3567, %v3568
    %v3570 = vshll.u32 920167782, %v3555
    %v3571 = vshrl.u32 1326507024, %v3556
    %v3572 = vor.u32 %v3570, %v3571
    %vm3573 = vcmp.lt.s32.totalorder %v3554, 1
    %vm3574 = vcmp.lt.s32.totalorder %v3554, 2
    %vm3575 = vcmp.lt.s32.totalorder %v3554, 3
    %vm3576 = vcmp.lt.s32.totalorder %v3554, 4
    %v3577 = vsel %vm3573, %v3557, %v3560
    %v3578 = vsel %vm3576, %v3566, 2102212464
    %v3579 = vsel %vm3575, %v3563, %v3578
    %v3580 = vsel %vm3574, %v3577, %v3579
    %v3581 = vsel %vm3573, %v3560, %v3563
    %v3582 = vsel %vm3576, %v3569, 920167782
    %v3583 = vsel %vm3575, %v3566, %v3582
    %v3584 = vsel %vm3574, %v3581, %v3583
    %v3585 = vsel %vm3573, %v3563, %v3566
    %v3586 = vsel %vm3576, %v3572, 1326507024
    %v3587 = vsel %vm3575, %v3569, %v3586
    %v3588 = vsel %vm3574, %v3585, %v3587
    %v3589 = vshll.u32 %v3549, 8
    %v3590 = vand.u32 %v3589, 65535
    %v3591 = vshrl.u32 %v3589, 16
    %v3592 = vand.u32 %v3588, 65535
    %v3593 = vshrl.u32 %v3588, 16
    %v3594 = vmul.u32 %v3590, %v3592
    %v3595 = vmul.u32 %v3590, %v3593
    %v3596 = vmul.u32 %v3591, %v3592
    %v3597 = vmul.u32 %v3591, %v3593
    %v3598 = vshll.u32 %v3595, 16
    %v3599 = vshrl.u32 %v3595, 16
    %v3600 = vshll.u32 %v3596, 16
    %v3601 = vshrl.u32 %v3596, 16
    %vm3602 = vc.u32 %v3594, %v3598
    %v3603 = vsel %vm3602, 1, 0
    %v3604 = vadd.s32 %v3594, %v3598
    %v3605 = vadd.s32 %v3597, %v3603
    %vm3606 = vc.u32 %v3604, %v3600
    %v3607 = vsel %vm3606, 1, 0
    %v3608 = vadd.s32 %v3604, %v3600
    %v3609 = vadd.s32 %v3605, %v3607
    %v3610 = vadd.s32 %v3609, %v3599
    %v3611 = vadd.s32 %v3610, %v3601
    %v3612 = vand.u32 %v3589, 65535
    %v3613 = vshrl.u32 %v3589, 16
    %v3614 = vand.u32 %v3584, 65535
    %v3615 = vshrl.u32 %v3584, 16
    %v3616 = vmul.u32 %v3612, %v3614
    %v3617 = vmul.u32 %v3612, %v3615
    %v3618 = vmul.u32 %v3613, %v3614
    %v3619 = vmul.u32 %v3613, %v3615
    %v3620 = vshll.u32 %v3617, 16
    %v3621 = vshrl.u32 %v3617, 16
    %v3622 = vshll.u32 %v3618, 16
    %v3623 = vshrl.u32 %v3618, 16
    %vm3624 = vc.u32 %v3616, %v3620
    %v3625 = vsel %vm3624, 1, 0
    %v3626 = vadd.s32 %v3616, %v3620
    %v3627 = vadd.s32 %v3619, %v3625
    %vm3628 = vc.u32 %v3626, %v3622
    %v3629 = vsel %vm3628, 1, 0
    %v3630 = vadd.s32 %v3626, %v3622
    %v3631 = vadd.s32 %v3627, %v3629
    %v3632 = vadd.s32 %v3631, %v3621
    %v3633 = vadd.s32 %v3632, %v3623
    %v3634 = vmul.u32 %v3589, %v3580
    %v3635 = vadd.s32 %v3611, %v3630
    %vm3636 = vc.u32 %v3611, %v3630
    %v3637 = vadd.s32 %v3633, 1
    %v3638 = vsel %vm3636, %v3637, %v3633
    %v3639 = vadd.s32 %v3634, %v3638
    %v3640 = vadd.s32 %v3639, 536870912
    %v3641 = vshrl.u32 %v3640, 30
    %v3642 = vshll.u32 %v3641, 30
    %v3643 = vsub.s32 %v3639, %v3642
    %vm3644 = vcmp.lt.s32.totalorder %v3643, 0
    %v3645 = vsub.s32 0, %v3643
    %v3646 = vsel %vm3644, %v3645, %v3643
    %v3647 = vclz %v3646
    %v3648 = vsub.s32 %v3647, 2
    %vm3649 = vcmp.gt.s32.totalorder 0, %v3648
    %v3650 = vsel %vm3649, 0, %v3648
    %v3651 = vsub.s32 32, %v3650
    %v3652 = vshll.u32 %v3643, %v3650
    %v3653 = vshrl.u32 %v3635, %v3651
    %v3654 = vor.u32 %v3652, %v3653
    %v3655 = vsub.s32 4294967266, %v3650
    %v3656 = vadd.s32 %v3655, 127
    %v3657 = vshll.u32 %v3656, 23
    %v3658 = vor.u32 4788187, %v3657
    %v3659 = vand.u32 2147483647, %v3658
    %v3661 = vcvt.s32.f32 %v3654
    %v3662 = vmul.f32 %v3661, %v3659
    %v3663 = vxor.u32 %v3662, 2147483648
    %v3664 = vsel %vm3543, %v3663, %v3662
    %v3665 = vsub.s32 4, %v3641
    %v3666 = vsel %vm3543, %v3665, %v3641
    %v3667 = vsel %vm3542, %v2886, %v3664
    %v3668 = vsel %vm3542, 0, %v3666
    %v3669 = vmul.f32 %v3667, %v3667
    %v3670 = vmul.f32 %v3669, -0.001358992
    %v3671 = vadd.f32 %v3670, 0.041655596
    %v3672 = vmul.f32 %v3669, %v3671
    %v3673 = vadd.f32 %v3672, -0.4999988
    %v3674 = vmul.f32 %v3669, %v3673
    %v3675 = vadd.f32 1.0, %v3674
    %v3676 = vmul.f32 %v3667, %v3667
    %v3677 = vmul.f32 %v3676, -0.00019511016
    %v3678 = vadd.f32 %v3677, 0.008332121
    %v3679 = vmul.f32 %v3676, %v3678
    %v3680 = vadd.f32 %v3679, -0.16666654
    %v3681 = vmul.f32 %v3676, %v3680
    %v3682 = vadd.f32 %v3681, 1.0
    %v3683 = vmul.f32 %v3682, %v3667
    %vm3684 = vweird.f32 %v2886
    %v3685 = vadd.s32 %v3668, 3
    %v3686 = vand.u32 %v3685, 3
    %vm3687 = vcmp.lt.s32.totalorder %v3686, 2
    %vm3688 = vcmp.eq.s32.totalorder %v3686, 0
    %v3689 = vxor.u32 %v3683, 2147483648
    %v3690 = vsel %vm3688, %v3675, %v3689
    %vm3691 = vcmp.eq.s32.totalorder %v3686, 2
    %v3692 = vxor.u32 %v3675, 2147483648
    %v3693 = vsel %vm3691, %v3692, %v3683
    %v3694 = vsel %vm3687, %v3690, %v3693
    %v3695 = vsel %vm3684, nan, %v3694
    %v3696 = vand.u32 2147483647, %v2889
    %vm3697 = vcmp.le.f32.partialorder %v3696, 0.7853982
    %vm3698 = vcmp.lt.s32.totalorder %v2889, 0
    %v3699 = vand.u32 %v2889, 2139095040
    %v3700 = vshrl.u32 %v3699, 23
    %v3701 = vsub.s32 %v3700, 127
    %v3702 = vand.u32 2147483647, %v2889
    %v3703 = vand.u32 %v3702, 8388607
    %v3704 = vor.u32 %v3703, 8388608
    %v3705 = vsub.s32 0, %v3704
    %v3706 = vadd.s32 %v3701, 1
    %vm3707 = vcmp.gt.s32.totalorder %v3706, 0
    %v3708 = vsel %vm3707, %v3706, 0
    %v3709 = vshrl.u32 %v3708, 5
    %v3710 = vand.u32 %v3708, 31
    %v3711 = vsub.s32 32, %v3710
    %v3712 = vshrl.u32 683565275, %v3711
    %v3713 = vshll.u32 683565275, %v3710
    %v3714 = vshrl.u32 2475754826, %v3711
    %v3715 = vor.u32 %v3713, %v3714
    %v3716 = vshll.u32 2475754826, %v3710
    %v3717 = vshrl.u32 2131351028, %v3711
    %v3718 = vor.u32 %v3716, %v3717
    %v3719 = vshll.u32 2131351028, %v3710
    %v3720 = vshrl.u32 2102212464, %v3711
    %v3721 = vor.u32 %v3719, %v3720
    %v3722 = vshll.u32 2102212464, %v3710
    %v3723 = vshrl.u32 920167782, %v3711
    %v3724 = vor.u32 %v3722, %v3723
    %v3725 = vshll.u32 920167782, %v3710
    %v3726 = vshrl.u32 1326507024, %v3711
    %v3727 = vor.u32 %v3725, %v3726
    %vm3728 = vcmp.lt.s32.totalorder %v3709, 1
    %vm3729 = vcmp.lt.s32.totalorder %v3709, 2
    %vm3730 = vcmp.lt.s32.totalorder %v3709, 3
    %vm3731 = vcmp.lt.s32.totalorder %v3709, 4
    %v3732 = vsel %vm3728, %v3712, %v3715
    %v3733 = vsel %vm3731, %v3721, 2102212464
    %v3734 = vsel %vm3730, %v3718, %v3733
    %v3735 = vsel %vm3729, %v3732, %v3734
    %v3736 = vsel %vm3728, %v3715, %v3718
    %v3737 = vsel %vm3731, %v3724, 920167782
    %v3738 = vsel %vm3730, %v3721, %v3737
    %v3739 = vsel %vm3729, %v3736, %v3738
    %v3740 = vsel %vm3728, %v3718, %v3721
    %v3741 = vsel %vm3731, %v3727, 1326507024
    %v3742 = vsel %vm3730, %v3724, %v3741
    %v3743 = vsel %vm3729, %v3740, %v3742
    %v3744 = vshll.u32 %v3704, 8
    %v3745 = vand.u32 %v3744, 65535
    %v3746 = vshrl.u32 %v3744, 16
    %v3747 = vand.u32 %v3743, 65535
    %v3748 = vshrl.u32 %v3743, 16
    %v3749 = vmul.u32 %v3745, %v3747
    %v3750 = vmul.u32 %v3745, %v3748
    %v3751 = vmul.u32 %v3746, %v3747
    %v3752 = vmul.u32 %v3746, %v3748
    %v3753 = vshll.u32 %v3750, 16
    %v3754 = vshrl.u32 %v3750, 16
    %v3755 = vshll.u32 %v3751, 16
    %v3756 = vshrl.u32 %v3751, 16
    %vm3757 = vc.u32 %v3749, %v3753
    %v3758 = vsel %vm3757, 1, 0
    %v3759 = vadd.s32 %v3749, %v3753
    %v3760 = vadd.s32 %v3752, %v3758
    %vm3761 = vc.u32 %v3759, %v3755
    %v3762 = vsel %vm3761, 1, 0
    %v3763 = vadd.s32 %v3759, %v3755
    %v3764 = vadd.s32 %v3760, %v3762
    %v3765 = vadd.s32 %v3764, %v3754
    %v3766 = vadd.s32 %v3765, %v3756
    %v3767 = vand.u32 %v3744, 65535
    %v3768 = vshrl.u32 %v3744, 16
    %v3769 = vand.u32 %v3739, 65535
    %v3770 = vshrl.u32 %v3739, 16
    %v3771 = vmul.u32 %v3767, %v3769
    %v3772 = vmul.u32 %v3767, %v3770
    %v3773 = vmul.u32 %v3768, %v3769
    %v3774 = vmul.u32 %v3768, %v3770
    %v3775 = vshll.u32 %v3772, 16
    %v3776 = vshrl.u32 %v3772, 16
    %v3777 = vshll.u32 %v3773, 16
    %v3778 = vshrl.u32 %v3773, 16
    %vm3779 = vc.u32 %v3771, %v3775
    %v3780 = vsel %vm3779, 1, 0
    %v3781 = vadd.s32 %v3771, %v3775
    %v3782 = vadd.s32 %v3774, %v3780
    %vm3783 = vc.u32 %v3781, %v3777
    %v3784 = vsel %vm3783, 1, 0
    %v3785 = vadd.s32 %v3781, %v3777
    %v3786 = vadd.s32 %v3782, %v3784
    %v3787 = vadd.s32 %v3786, %v3776
    %v3788 = vadd.s32 %v3787, %v3778
    %v3789 = vmul.u32 %v3744, %v3735
    %v3790 = vadd.s32 %v3766, %v3785
    %vm3791 = vc.u32 %v3766, %v3785
    %v3792 = vadd.s32 %v3788, 1
    %v3793 = vsel %vm3791, %v3792, %v3788
    %v3794 = vadd.s32 %v3789, %v3793
    %v3795 = vadd.s32 %v3794, 536870912
    %v3796 = vshrl.u32 %v3795, 30
    %v3797 = vshll.u32 %v3796, 30
    %v3798 = vsub.s32 %v3794, %v3797
    %vm3799 = vcmp.lt.s32.totalorder %v3798, 0
    %v3800 = vsub.s32 0, %v3798
    %v3801 = vsel %vm3799, %v3800, %v3798
    %v3802 = vclz %v3801
    %v3803 = vsub.s32 %v3802, 2
    %vm3804 = vcmp.gt.s32.totalorder 0, %v3803
    %v3805 = vsel %vm3804, 0, %v3803
    %v3806 = vsub.s32 32, %v3805
    %v3807 = vshll.u32 %v3798, %v3805
    %v3808 = vshrl.u32 %v3790, %v3806
    %v3809 = vor.u32 %v3807, %v3808
    %v3810 = vsub.s32 4294967266, %v3805
    %v3811 = vadd.s32 %v3810, 127
    %v3812 = vshll.u32 %v3811, 23
    %v3813 = vor.u32 4788187, %v3812
    %v3814 = vand.u32 2147483647, %v3813
    %v3816 = vcvt.s32.f32 %v3809
    %v3817 = vmul.f32 %v3816, %v3814
    %v3818 = vxor.u32 %v3817, 2147483648
    %v3819 = vsel %vm3698, %v3818, %v3817
    %v3820 = vsub.s32 4, %v3796
    %v3821 = vsel %vm3698, %v3820, %v3796
    %v3822 = vsel %vm3697, %v2889, %v3819
    %v3823 = vsel %vm3697, 0, %v3821
    %v3824 = vmul.f32 %v3822, %v3822
    %v3825 = vmul.f32 %v3824, -0.001358992
    %v3826 = vadd.f32 %v3825, 0.041655596
    %v3827 = vmul.f32 %v3824, %v3826
    %v3828 = vadd.f32 %v3827, -0.4999988
    %v3829 = vmul.f32 %v3824, %v3828
    %v3830 = vadd.f32 1.0, %v3829
    %v3831 = vmul.f32 %v3822, %v3822
    %v3832 = vmul.f32 %v3831, -0.00019511016
    %v3833 = vadd.f32 %v3832, 0.008332121
    %v3834 = vmul.f32 %v3831, %v3833
    %v3835 = vadd.f32 %v3834, -0.16666654
    %v3836 = vmul.f32 %v3831, %v3835
    %v3837 = vadd.f32 %v3836, 1.0
    %v3838 = vmul.f32 %v3837, %v3822
    %vm3839 = vweird.f32 %v2889
    %v3840 = vadd.s32 %v3823, 3
    %v3841 = vand.u32 %v3840, 3
    %vm3842 = vcmp.lt.s32.totalorder %v3841, 2
    %vm3843 = vcmp.eq.s32.totalorder %v3841, 0
    %v3844 = vxor.u32 %v3838, 2147483648
    %v3845 = vsel %vm3843, %v3830, %v3844
    %vm3846 = vcmp.eq.s32.totalorder %v3841, 2
    %v3847 = vxor.u32 %v3830, 2147483648
    %v3848 = vsel %vm3846, %v3847, %v3838
    %v3849 = vsel %vm3842, %v3845, %v3848
    %v3850 = vsel %vm3839, nan, %v3849
    %v3851 = vand.u32 2147483647, %v2892
    %vm3852 = vcmp.le.f32.partialorder %v3851, 0.7853982
    %vm3853 = vcmp.lt.s32.totalorder %v2892, 0
    %v3854 = vand.u32 %v2892, 2139095040
    %v3855 = vshrl.u32 %v3854, 23
    %v3856 = vsub.s32 %v3855, 127
    %v3857 = vand.u32 2147483647, %v2892
    %v3858 = vand.u32 %v3857, 8388607
    %v3859 = vor.u32 %v3858, 8388608
    %v3860 = vsub.s32 0, %v3859
    %v3861 = vadd.s32 %v3856, 1
    %vm3862 = vcmp.gt.s32.totalorder %v3861, 0
    %v3863 = vsel %vm3862, %v3861, 0
    %v3864 = vshrl.u32 %v3863, 5
    %v3865 = vand.u32 %v3863, 31
    %v3866 = vsub.s32 32, %v3865
    %v3867 = vshrl.u32 683565275, %v3866
    %v3868 = vshll.u32 683565275, %v3865
    %v3869 = vshrl.u32 2475754826, %v3866
    %v3870 = vor.u32 %v3868, %v3869
    %v3871 = vshll.u32 2475754826, %v3865
    %v3872 = vshrl.u32 2131351028, %v3866
    %v3873 = vor.u32 %v3871, %v3872
    %v3874 = vshll.u32 2131351028, %v3865
    %v3875 = vshrl.u32 2102212464, %v3866
    %v3876 = vor.u32 %v3874, %v3875
    %v3877 = vshll.u32 2102212464, %v3865
    %v3878 = vshrl.u32 920167782, %v3866
    %v3879 = vor.u32 %v3877, %v3878
    %v3880 = vshll.u32 920167782, %v3865
    %v3881 = vshrl.u32 1326507024, %v3866
    %v3882 = vor.u32 %v3880, %v3881
    %vm3883 = vcmp.lt.s32.totalorder %v3864, 1
    %vm3884 = vcmp.lt.s32.totalorder %v3864, 2
    %vm3885 = vcmp.lt.s32.totalorder %v3864, 3
    %vm3886 = vcmp.lt.s32.totalorder %v3864, 4
    %v3887 = vsel %vm3883, %v3867, %v3870
    %v3888 = vsel %vm3886, %v3876, 2102212464
    %v3889 = vsel %vm3885, %v3873, %v3888
    %v3890 = vsel %vm3884, %v3887, %v3889
    %v3891 = vsel %vm3883, %v3870, %v3873
    %v3892 = vsel %vm3886, %v3879, 920167782
    %v3893 = vsel %vm3885, %v3876, %v3892
    %v3894 = vsel %vm3884, %v3891, %v3893
    %v3895 = vsel %vm3883, %v3873, %v3876
    %v3896 = vsel %vm3886, %v3882, 1326507024
    %v3897 = vsel %vm3885, %v3879, %v3896
    %v3898 = vsel %vm3884, %v3895, %v3897
    %v3899 = vshll.u32 %v3859, 8
    %v3900 = vand.u32 %v3899, 65535
    %v3901 = vshrl.u32 %v3899, 16
    %v3902 = vand.u32 %v3898, 65535
    %v3903 = vshrl.u32 %v3898, 16
    %v3904 = vmul.u32 %v3900, %v3902
    %v3905 = vmul.u32 %v3900, %v3903
    %v3906 = vmul.u32 %v3901, %v3902
    %v3907 = vmul.u32 %v3901, %v3903
    %v3908 = vshll.u32 %v3905, 16
    %v3909 = vshrl.u32 %v3905, 16
    %v3910 = vshll.u32 %v3906, 16
    %v3911 = vshrl.u32 %v3906, 16
    %vm3912 = vc.u32 %v3904, %v3908
    %v3913 = vsel %vm3912, 1, 0
    %v3914 = vadd.s32 %v3904, %v3908
    %v3915 = vadd.s32 %v3907, %v3913
    %vm3916 = vc.u32 %v3914, %v3910
    %v3917 = vsel %vm3916, 1, 0
    %v3918 = vadd.s32 %v3914, %v3910
    %v3919 = vadd.s32 %v3915, %v3917
    %v3920 = vadd.s32 %v3919, %v3909
    %v3921 = vadd.s32 %v3920, %v3911
    %v3922 = vand.u32 %v3899, 65535
    %v3923 = vshrl.u32 %v3899, 16
    %v3924 = vand.u32 %v3894, 65535
    %v3925 = vshrl.u32 %v3894, 16
    %v3926 = vmul.u32 %v3922, %v3924
    %v3927 = vmul.u32 %v3922, %v3925
    %v3928 = vmul.u32 %v3923, %v3924
    %v3929 = vmul.u32 %v3923, %v3925
    %v3930 = vshll.u32 %v3927, 16
    %v3931 = vshrl.u32 %v3927, 16
    %v3932 = vshll.u32 %v3928, 16
    %v3933 = vshrl.u32 %v3928, 16
    %vm3934 = vc.u32 %v3926, %v3930
    %v3935 = vsel %vm3934, 1, 0
    %v3936 = vadd.s32 %v3926, %v3930
    %v3937 = vadd.s32 %v3929, %v3935
    %vm3938 = vc.u32 %v3936, %v3932
    %v3939 = vsel %vm3938, 1, 0
    %v3940 = vadd.s32 %v3936, %v3932
    %v3941 = vadd.s32 %v3937, %v3939
    %v3942 = vadd.s32 %v3941, %v3931
    %v3943 = vadd.s32 %v3942, %v3933
    %v3944 = vmul.u32 %v3899, %v3890
    %v3945 = vadd.s32 %v3921, %v3940
    %vm3946 = vc.u32 %v3921, %v3940
    %v3947 = vadd.s32 %v3943, 1
    %v3948 = vsel %vm3946, %v3947, %v3943
    %v3949 = vadd.s32 %v3944, %v3948
    %v3950 = vadd.s32 %v3949, 536870912
    %v3951 = vshrl.u32 %v3950, 30
    %v3952 = vshll.u32 %v3951, 30
    %v3953 = vsub.s32 %v3949, %v3952
    %vm3954 = vcmp.lt.s32.totalorder %v3953, 0
    %v3955 = vsub.s32 0, %v3953
    %v3956 = vsel %vm3954, %v3955, %v3953
    %v3957 = vclz %v3956
    %v3958 = vsub.s32 %v3957, 2
    %vm3959 = vcmp.gt.s32.totalorder 0, %v3958
    %v3960 = vsel %vm3959, 0, %v3958
    %v3961 = vsub.s32 32, %v3960
    %v3962 = vshll.u32 %v3953, %v3960
    %v3963 = vshrl.u32 %v3945, %v3961
    %v3964 = vor.u32 %v3962, %v3963
    %v3965 = vsub.s32 4294967266, %v3960
    %v3966 = vadd.s32 %v3965, 127
    %v3967 = vshll.u32 %v3966, 23
    %v3968 = vor.u32 4788187, %v3967
    %v3969 = vand.u32 2147483647, %v3968
    %v3971 = vcvt.s32.f32 %v3964
    %v3972 = vmul.f32 %v3971, %v3969
    %v3973 = vxor.u32 %v3972, 2147483648
    %v3974 = vsel %vm3853, %v3973, %v3972
    %v3975 = vsub.s32 4, %v3951
    %v3976 = vsel %vm3853, %v3975, %v3951
    %v3977 = vsel %vm3852, %v2892, %v3974
    %v3978 = vsel %vm3852, 0, %v3976
    %v3979 = vmul.f32 %v3977, %v3977
    %v3980 = vmul.f32 %v3979, -0.001358992
    %v3981 = vadd.f32 %v3980, 0.041655596
    %v3982 = vmul.f32 %v3979, %v3981
    %v3983 = vadd.f32 %v3982, -0.4999988
    %v3984 = vmul.f32 %v3979, %v3983
    %v3985 = vadd.f32 1.0, %v3984
    %v3986 = vmul.f32 %v3977, %v3977
    %v3987 = vmul.f32 %v3986, -0.00019511016
    %v3988 = vadd.f32 %v3987, 0.008332121
    %v3989 = vmul.f32 %v3986, %v3988
    %v3990 = vadd.f32 %v3989, -0.16666654
    %v3991 = vmul.f32 %v3986, %v3990
    %v3992 = vadd.f32 %v3991, 1.0
    %v3993 = vmul.f32 %v3992, %v3977
    %vm3994 = vweird.f32 %v2892
    %v3995 = vadd.s32 %v3978, 3
    %v3996 = vand.u32 %v3995, 3
    %vm3997 = vcmp.lt.s32.totalorder %v3996, 2
    %vm3998 = vcmp.eq.s32.totalorder %v3996, 0
    %v3999 = vxor.u32 %v3993, 2147483648
    %v4000 = vsel %vm3998, %v3985, %v3999
    %vm4001 = vcmp.eq.s32.totalorder %v3996, 2
    %v4002 = vxor.u32 %v3985, 2147483648
    %v4003 = vsel %vm4001, %v4002, %v3993
    %v4004 = vsel %vm3997, %v4000, %v4003
    %v4005 = vsel %vm3994, nan, %v4004
    %v4006 = vand.u32 2147483647, %v2895
    %vm4007 = vcmp.le.f32.partialorder %v4006, 0.7853982
    %vm4008 = vcmp.lt.s32.totalorder %v2895, 0
    %v4009 = vand.u32 %v2895, 2139095040
    %v4010 = vshrl.u32 %v4009, 23
    %v4011 = vsub.s32 %v4010, 127
    %v4012 = vand.u32 2147483647, %v2895
    %v4013 = vand.u32 %v4012, 8388607
    %v4014 = vor.u32 %v4013, 8388608
    %v4015 = vsub.s32 0, %v4014
    %v4016 = vadd.s32 %v4011, 1
    %vm4017 = vcmp.gt.s32.totalorder %v4016, 0
    %v4018 = vsel %vm4017, %v4016, 0
    %v4019 = vshrl.u32 %v4018, 5
    %v4020 = vand.u32 %v4018, 31
    %v4021 = vsub.s32 32, %v4020
    %v4022 = vshrl.u32 683565275, %v4021
    %v4023 = vshll.u32 683565275, %v4020
    %v4024 = vshrl.u32 2475754826, %v4021
    %v4025 = vor.u32 %v4023, %v4024
    %v4026 = vshll.u32 2475754826, %v4020
    %v4027 = vshrl.u32 2131351028, %v4021
    %v4028 = vor.u32 %v4026, %v4027
    %v4029 = vshll.u32 2131351028, %v4020
    %v4030 = vshrl.u32 2102212464, %v4021
    %v4031 = vor.u32 %v4029, %v4030
    %v4032 = vshll.u32 2102212464, %v4020
    %v4033 = vshrl.u32 920167782, %v4021
    %v4034 = vor.u32 %v4032, %v4033
    %v4035 = vshll.u32 920167782, %v4020
    %v4036 = vshrl.u32 1326507024, %v4021
    %v4037 = vor.u32 %v4035, %v4036
    %vm4038 = vcmp.lt.s32.totalorder %v4019, 1
    %vm4039 = vcmp.lt.s32.totalorder %v4019, 2
    %vm4040 = vcmp.lt.s32.totalorder %v4019, 3
    %vm4041 = vcmp.lt.s32.totalorder %v4019, 4
    %v4042 = vsel %vm4038, %v4022, %v4025
    %v4043 = vsel %vm4041, %v4031, 2102212464
    %v4044 = vsel %vm4040, %v4028, %v4043
    %v4045 = vsel %vm4039, %v4042, %v4044
    %v4046 = vsel %vm4038, %v4025, %v4028
    %v4047 = vsel %vm4041, %v4034, 920167782
    %v4048 = vsel %vm4040, %v4031, %v4047
    %v4049 = vsel %vm4039, %v4046, %v4048
    %v4050 = vsel %vm4038, %v4028, %v4031
    %v4051 = vsel %vm4041, %v4037, 1326507024
    %v4052 = vsel %vm4040, %v4034, %v4051
    %v4053 = vsel %vm4039, %v4050, %v4052
    %v4054 = vshll.u32 %v4014, 8
    %v4055 = vand.u32 %v4054, 65535
    %v4056 = vshrl.u32 %v4054, 16
    %v4057 = vand.u32 %v4053, 65535
    %v4058 = vshrl.u32 %v4053, 16
    %v4059 = vmul.u32 %v4055, %v4057
    %v4060 = vmul.u32 %v4055, %v4058
    %v4061 = vmul.u32 %v4056, %v4057
    %v4062 = vmul.u32 %v4056, %v4058
    %v4063 = vshll.u32 %v4060, 16
    %v4064 = vshrl.u32 %v4060, 16
    %v4065 = vshll.u32 %v4061, 16
    %v4066 = vshrl.u32 %v4061, 16
    %vm4067 = vc.u32 %v4059, %v4063
    %v4068 = vsel %vm4067, 1, 0
    %v4069 = vadd.s32 %v4059, %v4063
    %v4070 = vadd.s32 %v4062, %v4068
    %vm4071 = vc.u32 %v4069, %v4065
    %v4072 = vsel %vm4071, 1, 0
    %v4073 = vadd.s32 %v4069, %v4065
    %v4074 = vadd.s32 %v4070, %v4072
    %v4075 = vadd.s32 %v4074, %v4064
    %v4076 = vadd.s32 %v4075, %v4066
    %v4077 = vand.u32 %v4054, 65535
    %v4078 = vshrl.u32 %v4054, 16
    %v4079 = vand.u32 %v4049, 65535
    %v4080 = vshrl.u32 %v4049, 16
    %v4081 = vmul.u32 %v4077, %v4079
    %v4082 = vmul.u32 %v4077, %v4080
    %v4083 = vmul.u32 %v4078, %v4079
    %v4084 = vmul.u32 %v4078, %v4080
    %v4085 = vshll.u32 %v4082, 16
    %v4086 = vshrl.u32 %v4082, 16
    %v4087 = vshll.u32 %v4083, 16
    %v4088 = vshrl.u32 %v4083, 16
    %vm4089 = vc.u32 %v4081, %v4085
    %v4090 = vsel %vm4089, 1, 0
    %v4091 = vadd.s32 %v4081, %v4085
    %v4092 = vadd.s32 %v4084, %v4090
    %vm4093 = vc.u32 %v4091, %v4087
    %v4094 = vsel %vm4093, 1, 0
    %v4095 = vadd.s32 %v4091, %v4087
    %v4096 = vadd.s32 %v4092, %v4094
    %v4097 = vadd.s32 %v4096, %v4086
    %v4098 = vadd.s32 %v4097, %v4088
    %v4099 = vmul.u32 %v4054, %v4045
    %v4100 = vadd.s32 %v4076, %v4095
    %vm4101 = vc.u32 %v4076, %v4095
    %v4102 = vadd.s32 %v4098, 1
    %v4103 = vsel %vm4101, %v4102, %v4098
    %v4104 = vadd.s32 %v4099, %v4103
    %v4105 = vadd.s32 %v4104, 536870912
    %v4106 = vshrl.u32 %v4105, 30
    %v4107 = vshll.u32 %v4106, 30
    %v4108 = vsub.s32 %v4104, %v4107
    %vm4109 = vcmp.lt.s32.totalorder %v4108, 0
    %v4110 = vsub.s32 0, %v4108
    %v4111 = vsel %vm4109, %v4110, %v4108
    %v4112 = vclz %v4111
    %v4113 = vsub.s32 %v4112, 2
    %vm4114 = vcmp.gt.s32.totalorder 0, %v4113
    %v4115 = vsel %vm4114, 0, %v4113
    %v4116 = vsub.s32 32, %v4115
    %v4117 = vshll.u32 %v4108, %v4115
    %v4118 = vshrl.u32 %v4100, %v4116
    %v4119 = vor.u32 %v4117, %v4118
    %v4120 = vsub.s32 4294967266, %v4115
    %v4121 = vadd.s32 %v4120, 127
    %v4122 = vshll.u32 %v4121, 23
    %v4123 = vor.u32 4788187, %v4122
    %v4124 = vand.u32 2147483647, %v4123
    %v4126 = vcvt.s32.f32 %v4119
    %v4127 = vmul.f32 %v4126, %v4124
    %v4128 = vxor.u32 %v4127, 2147483648
    %v4129 = vsel %vm4008, %v4128, %v4127
    %v4130 = vsub.s32 4, %v4106
    %v4131 = vsel %vm4008, %v4130, %v4106
    %v4132 = vsel %vm4007, %v2895, %v4129
    %v4133 = vsel %vm4007, 0, %v4131
    %v4134 = vmul.f32 %v4132, %v4132
    %v4135 = vmul.f32 %v4134, -0.001358992
    %v4136 = vadd.f32 %v4135, 0.041655596
    %v4137 = vmul.f32 %v4134, %v4136
    %v4138 = vadd.f32 %v4137, -0.4999988
    %v4139 = vmul.f32 %v4134, %v4138
    %v4140 = vadd.f32 1.0, %v4139
    %v4141 = vmul.f32 %v4132, %v4132
    %v4142 = vmul.f32 %v4141, -0.00019511016
    %v4143 = vadd.f32 %v4142, 0.008332121
    %v4144 = vmul.f32 %v4141, %v4143
    %v4145 = vadd.f32 %v4144, -0.16666654
    %v4146 = vmul.f32 %v4141, %v4145
    %v4147 = vadd.f32 %v4146, 1.0
    %v4148 = vmul.f32 %v4147, %v4132
    %vm4149 = vweird.f32 %v2895
    %v4150 = vadd.s32 %v4133, 3
    %v4151 = vand.u32 %v4150, 3
    %vm4152 = vcmp.lt.s32.totalorder %v4151, 2
    %vm4153 = vcmp.eq.s32.totalorder %v4151, 0
    %v4154 = vxor.u32 %v4148, 2147483648
    %v4155 = vsel %vm4153, %v4140, %v4154
    %vm4156 = vcmp.eq.s32.totalorder %v4151, 2
    %v4157 = vxor.u32 %v4140, 2147483648
    %v4158 = vsel %vm4156, %v4157, %v4148
    %v4159 = vsel %vm4152, %v4155, %v4158
    %v4160 = vsel %vm4149, nan, %v4159
    %v4161 = vand.u32 2147483647, %v2898
    %vm4162 = vcmp.le.f32.partialorder %v4161, 0.7853982
    %vm4163 = vcmp.lt.s32.totalorder %v2898, 0
    %v4164 = vand.u32 %v2898, 2139095040
    %v4165 = vshrl.u32 %v4164, 23
    %v4166 = vsub.s32 %v4165, 127
    %v4167 = vand.u32 2147483647, %v2898
    %v4168 = vand.u32 %v4167, 8388607
    %v4169 = vor.u32 %v4168, 8388608
    %v4170 = vsub.s32 0, %v4169
    %v4171 = vadd.s32 %v4166, 1
    %vm4172 = vcmp.gt.s32.totalorder %v4171, 0
    %v4173 = vsel %vm4172, %v4171, 0
    %v4174 = vshrl.u32 %v4173, 5
    %v4175 = vand.u32 %v4173, 31
    %v4176 = vsub.s32 32, %v4175
    %v4177 = vshrl.u32 683565275, %v4176
    %v4178 = vshll.u32 683565275, %v4175
    %v4179 = vshrl.u32 2475754826, %v4176
    %v4180 = vor.u32 %v4178, %v4179
    %v4181 = vshll.u32 2475754826, %v4175
    %v4182 = vshrl.u32 2131351028, %v4176
    %v4183 = vor.u32 %v4181, %v4182
    %v4184 = vshll.u32 2131351028, %v4175
    %v4185 = vshrl.u32 2102212464, %v4176
    %v4186 = vor.u32 %v4184, %v4185
    %v4187 = vshll.u32 2102212464, %v4175
    %v4188 = vshrl.u32 920167782, %v4176
    %v4189 = vor.u32 %v4187, %v4188
    %v4190 = vshll.u32 920167782, %v4175
    %v4191 = vshrl.u32 1326507024, %v4176
    %v4192 = vor.u32 %v4190, %v4191
    %vm4193 = vcmp.lt.s32.totalorder %v4174, 1
    %vm4194 = vcmp.lt.s32.totalorder %v4174, 2
    %vm4195 = vcmp.lt.s32.totalorder %v4174, 3
    %vm4196 = vcmp.lt.s32.totalorder %v4174, 4
    %v4197 = vsel %vm4193, %v4177, %v4180
    %v4198 = vsel %vm4196, %v4186, 2102212464
    %v4199 = vsel %vm4195, %v4183, %v4198
    %v4200 = vsel %vm4194, %v4197, %v4199
    %v4201 = vsel %vm4193, %v4180, %v4183
    %v4202 = vsel %vm4196, %v4189, 920167782
    %v4203 = vsel %vm4195, %v4186, %v4202
    %v4204 = vsel %vm4194, %v4201, %v4203
    %v4205 = vsel %vm4193, %v4183, %v4186
    %v4206 = vsel %vm4196, %v4192, 1326507024
    %v4207 = vsel %vm4195, %v4189, %v4206
    %v4208 = vsel %vm4194, %v4205, %v4207
    %v4209 = vshll.u32 %v4169, 8
    %v4210 = vand.u32 %v4209, 65535
    %v4211 = vshrl.u32 %v4209, 16
    %v4212 = vand.u32 %v4208, 65535
    %v4213 = vshrl.u32 %v4208, 16
    %v4214 = vmul.u32 %v4210, %v4212
    %v4215 = vmul.u32 %v4210, %v4213
    %v4216 = vmul.u32 %v4211, %v4212
    %v4217 = vmul.u32 %v4211, %v4213
    %v4218 = vshll.u32 %v4215, 16
    %v4219 = vshrl.u32 %v4215, 16
    %v4220 = vshll.u32 %v4216, 16
    %v4221 = vshrl.u32 %v4216, 16
    %vm4222 = vc.u32 %v4214, %v4218
    %v4223 = vsel %vm4222, 1, 0
    %v4224 = vadd.s32 %v4214, %v4218
    %v4225 = vadd.s32 %v4217, %v4223
    %vm4226 = vc.u32 %v4224, %v4220
    %v4227 = vsel %vm4226, 1, 0
    %v4228 = vadd.s32 %v4224, %v4220
    %v4229 = vadd.s32 %v4225, %v4227
    %v4230 = vadd.s32 %v4229, %v4219
    %v4231 = vadd.s32 %v4230, %v4221
    %v4232 = vand.u32 %v4209, 65535
    %v4233 = vshrl.u32 %v4209, 16
    %v4234 = vand.u32 %v4204, 65535
    %v4235 = vshrl.u32 %v4204, 16
    %v4236 = vmul.u32 %v4232, %v4234
    %v4237 = vmul.u32 %v4232, %v4235
    %v4238 = vmul.u32 %v4233, %v4234
    %v4239 = vmul.u32 %v4233, %v4235
    %v4240 = vshll.u32 %v4237, 16
    %v4241 = vshrl.u32 %v4237, 16
    %v4242 = vshll.u32 %v4238, 16
    %v4243 = vshrl.u32 %v4238, 16
    %vm4244 = vc.u32 %v4236, %v4240
    %v4245 = vsel %vm4244, 1, 0
    %v4246 = vadd.s32 %v4236, %v4240
    %v4247 = vadd.s32 %v4239, %v4245
    %vm4248 = vc.u32 %v4246, %v4242
    %v4249 = vsel %vm4248, 1, 0
    %v4250 = vadd.s32 %v4246, %v4242
    %v4251 = vadd.s32 %v4247, %v4249
    %v4252 = vadd.s32 %v4251, %v4241
    %v4253 = vadd.s32 %v4252, %v4243
    %v4254 = vmul.u32 %v4209, %v4200
    %v4255 = vadd.s32 %v4231, %v4250
    %vm4256 = vc.u32 %v4231, %v4250
    %v4257 = vadd.s32 %v4253, 1
    %v4258 = vsel %vm4256, %v4257, %v4253
    %v4259 = vadd.s32 %v4254, %v4258
    %v4260 = vadd.s32 %v4259, 536870912
    %v4261 = vshrl.u32 %v4260, 30
    %v4262 = vshll.u32 %v4261, 30
    %v4263 = vsub.s32 %v4259, %v4262
    %vm4264 = vcmp.lt.s32.totalorder %v4263, 0
    %v4265 = vsub.s32 0, %v4263
    %v4266 = vsel %vm4264, %v4265, %v4263
    %v4267 = vclz %v4266
    %v4268 = vsub.s32 %v4267, 2
    %vm4269 = vcmp.gt.s32.totalorder 0, %v4268
    %v4270 = vsel %vm4269, 0, %v4268
    %v4271 = vsub.s32 32, %v4270
    %v4272 = vshll.u32 %v4263, %v4270
    %v4273 = vshrl.u32 %v4255, %v4271
    %v4274 = vor.u32 %v4272, %v4273
    %v4275 = vsub.s32 4294967266, %v4270
    %v4276 = vadd.s32 %v4275, 127
    %v4277 = vshll.u32 %v4276, 23
    %v4278 = vor.u32 4788187, %v4277
    %v4279 = vand.u32 2147483647, %v4278
    %v4281 = vcvt.s32.f32 %v4274
    %v4282 = vmul.f32 %v4281, %v4279
    %v4283 = vxor.u32 %v4282, 2147483648
    %v4284 = vsel %vm4163, %v4283, %v4282
    %v4285 = vsub.s32 4, %v4261
    %v4286 = vsel %vm4163, %v4285, %v4261
    %v4287 = vsel %vm4162, %v2898, %v4284
    %v4288 = vsel %vm4162, 0, %v4286
    %v4289 = vmul.f32 %v4287, %v4287
    %v4290 = vmul.f32 %v4289, -0.001358992
    %v4291 = vadd.f32 %v4290, 0.041655596
    %v4292 = vmul.f32 %v4289, %v4291
    %v4293 = vadd.f32 %v4292, -0.4999988
    %v4294 = vmul.f32 %v4289, %v4293
    %v4295 = vadd.f32 1.0, %v4294
    %v4296 = vmul.f32 %v4287, %v4287
    %v4297 = vmul.f32 %v4296, -0.00019511016
    %v4298 = vadd.f32 %v4297, 0.008332121
    %v4299 = vmul.f32 %v4296, %v4298
    %v4300 = vadd.f32 %v4299, -0.16666654
    %v4301 = vmul.f32 %v4296, %v4300
    %v4302 = vadd.f32 %v4301, 1.0
    %v4303 = vmul.f32 %v4302, %v4287
    %vm4304 = vweird.f32 %v2898
    %v4305 = vadd.s32 %v4288, 3
    %v4306 = vand.u32 %v4305, 3
    %vm4307 = vcmp.lt.s32.totalorder %v4306, 2
    %vm4308 = vcmp.eq.s32.totalorder %v4306, 0
    %v4309 = vxor.u32 %v4303, 2147483648
    %v4310 = vsel %vm4308, %v4295, %v4309
    %vm4311 = vcmp.eq.s32.totalorder %v4306, 2
    %v4312 = vxor.u32 %v4295, 2147483648
    %v4313 = vsel %vm4311, %v4312, %v4303
    %v4314 = vsel %vm4307, %v4310, %v4313
    %v4315 = vsel %vm4304, nan, %v4314
    %v4316 = vand.u32 2147483647, %v2901
    %vm4317 = vcmp.le.f32.partialorder %v4316, 0.7853982
    %vm4318 = vcmp.lt.s32.totalorder %v2901, 0
    %v4319 = vand.u32 %v2901, 2139095040
    %v4320 = vshrl.u32 %v4319, 23
    %v4321 = vsub.s32 %v4320, 127
    %v4322 = vand.u32 2147483647, %v2901
    %v4323 = vand.u32 %v4322, 8388607
    %v4324 = vor.u32 %v4323, 8388608
    %v4325 = vsub.s32 0, %v4324
    %v4326 = vadd.s32 %v4321, 1
    %vm4327 = vcmp.gt.s32.totalorder %v4326, 0
    %v4328 = vsel %vm4327, %v4326, 0
    %v4329 = vshrl.u32 %v4328, 5
    %v4330 = vand.u32 %v4328, 31
    %v4331 = vsub.s32 32, %v4330
    %v4332 = vshrl.u32 683565275, %v4331
    %v4333 = vshll.u32 683565275, %v4330
    %v4334 = vshrl.u32 2475754826, %v4331
    %v4335 = vor.u32 %v4333, %v4334
    %v4336 = vshll.u32 2475754826, %v4330
    %v4337 = vshrl.u32 2131351028, %v4331
    %v4338 = vor.u32 %v4336, %v4337
    %v4339 = vshll.u32 2131351028, %v4330
    %v4340 = vshrl.u32 2102212464, %v4331
    %v4341 = vor.u32 %v4339, %v4340
    %v4342 = vshll.u32 2102212464, %v4330
    %v4343 = vshrl.u32 920167782, %v4331
    %v4344 = vor.u32 %v4342, %v4343
    %v4345 = vshll.u32 920167782, %v4330
    %v4346 = vshrl.u32 1326507024, %v4331
    %v4347 = vor.u32 %v4345, %v4346
    %vm4348 = vcmp.lt.s32.totalorder %v4329, 1
    %vm4349 = vcmp.lt.s32.totalorder %v4329, 2
    %vm4350 = vcmp.lt.s32.totalorder %v4329, 3
    %vm4351 = vcmp.lt.s32.totalorder %v4329, 4
    %v4352 = vsel %vm4348, %v4332, %v4335
    %v4353 = vsel %vm4351, %v4341, 2102212464
    %v4354 = vsel %vm4350, %v4338, %v4353
    %v4355 = vsel %vm4349, %v4352, %v4354
    %v4356 = vsel %vm4348, %v4335, %v4338
    %v4357 = vsel %vm4351, %v4344, 920167782
    %v4358 = vsel %vm4350, %v4341, %v4357
    %v4359 = vsel %vm4349, %v4356, %v4358
    %v4360 = vsel %vm4348, %v4338, %v4341
    %v4361 = vsel %vm4351, %v4347, 1326507024
    %v4362 = vsel %vm4350, %v4344, %v4361
    %v4363 = vsel %vm4349, %v4360, %v4362
    %v4364 = vshll.u32 %v4324, 8
    %v4365 = vand.u32 %v4364, 65535
    %v4366 = vshrl.u32 %v4364, 16
    %v4367 = vand.u32 %v4363, 65535
    %v4368 = vshrl.u32 %v4363, 16
    %v4369 = vmul.u32 %v4365, %v4367
    %v4370 = vmul.u32 %v4365, %v4368
    %v4371 = vmul.u32 %v4366, %v4367
    %v4372 = vmul.u32 %v4366, %v4368
    %v4373 = vshll.u32 %v4370, 16
    %v4374 = vshrl.u32 %v4370, 16
    %v4375 = vshll.u32 %v4371, 16
    %v4376 = vshrl.u32 %v4371, 16
    %vm4377 = vc.u32 %v4369, %v4373
    %v4378 = vsel %vm4377, 1, 0
    %v4379 = vadd.s32 %v4369, %v4373
    %v4380 = vadd.s32 %v4372, %v4378
    %vm4381 = vc.u32 %v4379, %v4375
    %v4382 = vsel %vm4381, 1, 0
    %v4383 = vadd.s32 %v4379, %v4375
    %v4384 = vadd.s32 %v4380, %v4382
    %v4385 = vadd.s32 %v4384, %v4374
    %v4386 = vadd.s32 %v4385, %v4376
    %v4387 = vand.u32 %v4364, 65535
    %v4388 = vshrl.u32 %v4364, 16
    %v4389 = vand.u32 %v4359, 65535
    %v4390 = vshrl.u32 %v4359, 16
    %v4391 = vmul.u32 %v4387, %v4389
    %v4392 = vmul.u32 %v4387, %v4390
    %v4393 = vmul.u32 %v4388, %v4389
    %v4394 = vmul.u32 %v4388, %v4390
    %v4395 = vshll.u32 %v4392, 16
    %v4396 = vshrl.u32 %v4392, 16
    %v4397 = vshll.u32 %v4393, 16
    %v4398 = vshrl.u32 %v4393, 16
    %vm4399 = vc.u32 %v4391, %v4395
    %v4400 = vsel %vm4399, 1, 0
    %v4401 = vadd.s32 %v4391, %v4395
    %v4402 = vadd.s32 %v4394, %v4400
    %vm4403 = vc.u32 %v4401, %v4397
    %v4404 = vsel %vm4403, 1, 0
    %v4405 = vadd.s32 %v4401, %v4397
    %v4406 = vadd.s32 %v4402, %v4404
    %v4407 = vadd.s32 %v4406, %v4396
    %v4408 = vadd.s32 %v4407, %v4398
    %v4409 = vmul.u32 %v4364, %v4355
    %v4410 = vadd.s32 %v4386, %v4405
    %vm4411 = vc.u32 %v4386, %v4405
    %v4412 = vadd.s32 %v4408, 1
    %v4413 = vsel %vm4411, %v4412, %v4408
    %v4414 = vadd.s32 %v4409, %v4413
    %v4415 = vadd.s32 %v4414, 536870912
    %v4416 = vshrl.u32 %v4415, 30
    %v4417 = vshll.u32 %v4416, 30
    %v4418 = vsub.s32 %v4414, %v4417
    %vm4419 = vcmp.lt.s32.totalorder %v4418, 0
    %v4420 = vsub.s32 0, %v4418
    %v4421 = vsel %vm4419, %v4420, %v4418
    %v4422 = vclz %v4421
    %v4423 = vsub.s32 %v4422, 2
    %vm4424 = vcmp.gt.s32.totalorder 0, %v4423
    %v4425 = vsel %vm4424, 0, %v4423
    %v4426 = vsub.s32 32, %v4425
    %v4427 = vshll.u32 %v4418, %v4425
    %v4428 = vshrl.u32 %v4410, %v4426
    %v4429 = vor.u32 %v4427, %v4428
    %v4430 = vsub.s32 4294967266, %v4425
    %v4431 = vadd.s32 %v4430, 127
    %v4432 = vshll.u32 %v4431, 23
    %v4433 = vor.u32 4788187, %v4432
    %v4434 = vand.u32 2147483647, %v4433
    %v4436 = vcvt.s32.f32 %v4429
    %v4437 = vmul.f32 %v4436, %v4434
    %v4438 = vxor.u32 %v4437, 2147483648
    %v4439 = vsel %vm4318, %v4438, %v4437
    %v4440 = vsub.s32 4, %v4416
    %v4441 = vsel %vm4318, %v4440, %v4416
    %v4442 = vsel %vm4317, %v2901, %v4439
    %v4443 = vsel %vm4317, 0, %v4441
    %v4444 = vmul.f32 %v4442, %v4442
    %v4445 = vmul.f32 %v4444, -0.001358992
    %v4446 = vadd.f32 %v4445, 0.041655596
    %v4447 = vmul.f32 %v4444, %v4446
    %v4448 = vadd.f32 %v4447, -0.4999988
    %v4449 = vmul.f32 %v4444, %v4448
    %v4450 = vadd.f32 1.0, %v4449
    %v4451 = vmul.f32 %v4442, %v4442
    %v4452 = vmul.f32 %v4451, -0.00019511016
    %v4453 = vadd.f32 %v4452, 0.008332121
    %v4454 = vmul.f32 %v4451, %v4453
    %v4455 = vadd.f32 %v4454, -0.16666654
    %v4456 = vmul.f32 %v4451, %v4455
    %v4457 = vadd.f32 %v4456, 1.0
    %v4458 = vmul.f32 %v4457, %v4442
    %vm4459 = vweird.f32 %v2901
    %v4460 = vadd.s32 %v4443, 3
    %v4461 = vand.u32 %v4460, 3
    %vm4462 = vcmp.lt.s32.totalorder %v4461, 2
    %vm4463 = vcmp.eq.s32.totalorder %v4461, 0
    %v4464 = vxor.u32 %v4458, 2147483648
    %v4465 = vsel %vm4463, %v4450, %v4464
    %vm4466 = vcmp.eq.s32.totalorder %v4461, 2
    %v4467 = vxor.u32 %v4450, 2147483648
    %v4468 = vsel %vm4466, %v4467, %v4458
    %v4469 = vsel %vm4462, %v4465, %v4468
    %v4470 = vsel %vm4459, nan, %v4469
    %v4471 = vand.u32 2147483647, %v2904
    %vm4472 = vcmp.le.f32.partialorder %v4471, 0.7853982
    %vm4473 = vcmp.lt.s32.totalorder %v2904, 0
    %v4474 = vand.u32 %v2904, 2139095040
    %v4475 = vshrl.u32 %v4474, 23
    %v4476 = vsub.s32 %v4475, 127
    %v4477 = vand.u32 2147483647, %v2904
    %v4478 = vand.u32 %v4477, 8388607
    %v4479 = vor.u32 %v4478, 8388608
    %v4480 = vsub.s32 0, %v4479
    %v4481 = vadd.s32 %v4476, 1
    %vm4482 = vcmp.gt.s32.totalorder %v4481, 0
    %v4483 = vsel %vm4482, %v4481, 0
    %v4484 = vshrl.u32 %v4483, 5
    %v4485 = vand.u32 %v4483, 31
    %v4486 = vsub.s32 32, %v4485
    %v4487 = vshrl.u32 683565275, %v4486
    %v4488 = vshll.u32 683565275, %v4485
    %v4489 = vshrl.u32 2475754826, %v4486
    %v4490 = vor.u32 %v4488, %v4489
    %v4491 = vshll.u32 2475754826, %v4485
    %v4492 = vshrl.u32 2131351028, %v4486
    %v4493 = vor.u32 %v4491, %v4492
    %v4494 = vshll.u32 2131351028, %v4485
    %v4495 = vshrl.u32 2102212464, %v4486
    %v4496 = vor.u32 %v4494, %v4495
    %v4497 = vshll.u32 2102212464, %v4485
    %v4498 = vshrl.u32 920167782, %v4486
    %v4499 = vor.u32 %v4497, %v4498
    %v4500 = vshll.u32 920167782, %v4485
    %v4501 = vshrl.u32 1326507024, %v4486
    %v4502 = vor.u32 %v4500, %v4501
    %vm4503 = vcmp.lt.s32.totalorder %v4484, 1
    %vm4504 = vcmp.lt.s32.totalorder %v4484, 2
    %vm4505 = vcmp.lt.s32.totalorder %v4484, 3
    %vm4506 = vcmp.lt.s32.totalorder %v4484, 4
    %v4507 = vsel %vm4503, %v4487, %v4490
    %v4508 = vsel %vm4506, %v4496, 2102212464
    %v4509 = vsel %vm4505, %v4493, %v4508
    %v4510 = vsel %vm4504, %v4507, %v4509
    %v4511 = vsel %vm4503, %v4490, %v4493
    %v4512 = vsel %vm4506, %v4499, 920167782
    %v4513 = vsel %vm4505, %v4496, %v4512
    %v4514 = vsel %vm4504, %v4511, %v4513
    %v4515 = vsel %vm4503, %v4493, %v4496
    %v4516 = vsel %vm4506, %v4502, 1326507024
    %v4517 = vsel %vm4505, %v4499, %v4516
    %v4518 = vsel %vm4504, %v4515, %v4517
    %v4519 = vshll.u32 %v4479, 8
    %v4520 = vand.u32 %v4519, 65535
    %v4521 = vshrl.u32 %v4519, 16
    %v4522 = vand.u32 %v4518, 65535
    %v4523 = vshrl.u32 %v4518, 16
    %v4524 = vmul.u32 %v4520, %v4522
    %v4525 = vmul.u32 %v4520, %v4523
    %v4526 = vmul.u32 %v4521, %v4522
    %v4527 = vmul.u32 %v4521, %v4523
    %v4528 = vshll.u32 %v4525, 16
    %v4529 = vshrl.u32 %v4525, 16
    %v4530 = vshll.u32 %v4526, 16
    %v4531 = vshrl.u32 %v4526, 16
    %vm4532 = vc.u32 %v4524, %v4528
    %v4533 = vsel %vm4532, 1, 0
    %v4534 = vadd.s32 %v4524, %v4528
    %v4535 = vadd.s32 %v4527, %v4533
    %vm4536 = vc.u32 %v4534, %v4530
    %v4537 = vsel %vm4536, 1, 0
    %v4538 = vadd.s32 %v4534, %v4530
    %v4539 = vadd.s32 %v4535, %v4537
    %v4540 = vadd.s32 %v4539, %v4529
    %v4541 = vadd.s32 %v4540, %v4531
    %v4542 = vand.u32 %v4519, 65535
    %v4543 = vshrl.u32 %v4519, 16
    %v4544 = vand.u32 %v4514, 65535
    %v4545 = vshrl.u32 %v4514, 16
    %v4546 = vmul.u32 %v4542, %v4544
    %v4547 = vmul.u32 %v4542, %v4545
    %v4548 = vmul.u32 %v4543, %v4544
    %v4549 = vmul.u32 %v4543, %v4545
    %v4550 = vshll.u32 %v4547, 16
    %v4551 = vshrl.u32 %v4547, 16
    %v4552 = vshll.u32 %v4548, 16
    %v4553 = vshrl.u32 %v4548, 16
    %vm4554 = vc.u32 %v4546, %v4550
    %v4555 = vsel %vm4554, 1, 0
    %v4556 = vadd.s32 %v4546, %v4550
    %v4557 = vadd.s32 %v4549, %v4555
    %vm4558 = vc.u32 %v4556, %v4552
    %v4559 = vsel %vm4558, 1, 0
    %v4560 = vadd.s32 %v4556, %v4552
    %v4561 = vadd.s32 %v4557, %v4559
    %v4562 = vadd.s32 %v4561, %v4551
    %v4563 = vadd.s32 %v4562, %v4553
    %v4564 = vmul.u32 %v4519, %v4510
    %v4565 = vadd.s32 %v4541, %v4560
    %vm4566 = vc.u32 %v4541, %v4560
    %v4567 = vadd.s32 %v4563, 1
    %v4568 = vsel %vm4566, %v4567, %v4563
    %v4569 = vadd.s32 %v4564, %v4568
    %v4570 = vadd.s32 %v4569, 536870912
    %v4571 = vshrl.u32 %v4570, 30
    %v4572 = vshll.u32 %v4571, 30
    %v4573 = vsub.s32 %v4569, %v4572
    %vm4574 = vcmp.lt.s32.totalorder %v4573, 0
    %v4575 = vsub.s32 0, %v4573
    %v4576 = vsel %vm4574, %v4575, %v4573
    %v4577 = vclz %v4576
    %v4578 = vsub.s32 %v4577, 2
    %vm4579 = vcmp.gt.s32.totalorder 0, %v4578
    %v4580 = vsel %vm4579, 0, %v4578
    %v4581 = vsub.s32 32, %v4580
    %v4582 = vshll.u32 %v4573, %v4580
    %v4583 = vshrl.u32 %v4565, %v4581
    %v4584 = vor.u32 %v4582, %v4583
    %v4585 = vsub.s32 4294967266, %v4580
    %v4586 = vadd.s32 %v4585, 127
    %v4587 = vshll.u32 %v4586, 23
    %v4588 = vor.u32 4788187, %v4587
    %v4589 = vand.u32 2147483647, %v4588
    %v4591 = vcvt.s32.f32 %v4584
    %v4592 = vmul.f32 %v4591, %v4589
    %v4593 = vxor.u32 %v4592, 2147483648
    %v4594 = vsel %vm4473, %v4593, %v4592
    %v4595 = vsub.s32 4, %v4571
    %v4596 = vsel %vm4473, %v4595, %v4571
    %v4597 = vsel %vm4472, %v2904, %v4594
    %v4598 = vsel %vm4472, 0, %v4596
    %v4599 = vmul.f32 %v4597, %v4597
    %v4600 = vmul.f32 %v4599, -0.001358992
    %v4601 = vadd.f32 %v4600, 0.041655596
    %v4602 = vmul.f32 %v4599, %v4601
    %v4603 = vadd.f32 %v4602, -0.4999988
    %v4604 = vmul.f32 %v4599, %v4603
    %v4605 = vadd.f32 1.0, %v4604
    %v4606 = vmul.f32 %v4597, %v4597
    %v4607 = vmul.f32 %v4606, -0.00019511016
    %v4608 = vadd.f32 %v4607, 0.008332121
    %v4609 = vmul.f32 %v4606, %v4608
    %v4610 = vadd.f32 %v4609, -0.16666654
    %v4611 = vmul.f32 %v4606, %v4610
    %v4612 = vadd.f32 %v4611, 1.0
    %v4613 = vmul.f32 %v4612, %v4597
    %vm4614 = vweird.f32 %v2904
    %v4615 = vadd.s32 %v4598, 3
    %v4616 = vand.u32 %v4615, 3
    %vm4617 = vcmp.lt.s32.totalorder %v4616, 2
    %vm4618 = vcmp.eq.s32.totalorder %v4616, 0
    %v4619 = vxor.u32 %v4613, 2147483648
    %v4620 = vsel %vm4618, %v4605, %v4619
    %vm4621 = vcmp.eq.s32.totalorder %v4616, 2
    %v4622 = vxor.u32 %v4605, 2147483648
    %v4623 = vsel %vm4621, %v4622, %v4613
    %v4624 = vsel %vm4617, %v4620, %v4623
    %v4625 = vsel %vm4614, nan, %v4624
    %v4626 = vand.u32 2147483647, %v2907
    %vm4627 = vcmp.le.f32.partialorder %v4626, 0.7853982
    %vm4628 = vcmp.lt.s32.totalorder %v2907, 0
    %v4629 = vand.u32 %v2907, 2139095040
    %v4630 = vshrl.u32 %v4629, 23
    %v4631 = vsub.s32 %v4630, 127
    %v4632 = vand.u32 2147483647, %v2907
    %v4633 = vand.u32 %v4632, 8388607
    %v4634 = vor.u32 %v4633, 8388608
    %v4635 = vsub.s32 0, %v4634
    %v4636 = vadd.s32 %v4631, 1
    %vm4637 = vcmp.gt.s32.totalorder %v4636, 0
    %v4638 = vsel %vm4637, %v4636, 0
    %v4639 = vshrl.u32 %v4638, 5
    %v4640 = vand.u32 %v4638, 31
    %v4641 = vsub.s32 32, %v4640
    %v4642 = vshrl.u32 683565275, %v4641
    %v4643 = vshll.u32 683565275, %v4640
    %v4644 = vshrl.u32 2475754826, %v4641
    %v4645 = vor.u32 %v4643, %v4644
    %v4646 = vshll.u32 2475754826, %v4640
    %v4647 = vshrl.u32 2131351028, %v4641
    %v4648 = vor.u32 %v4646, %v4647
    %v4649 = vshll.u32 2131351028, %v4640
    %v4650 = vshrl.u32 2102212464, %v4641
    %v4651 = vor.u32 %v4649, %v4650
    %v4652 = vshll.u32 2102212464, %v4640
    %v4653 = vshrl.u32 920167782, %v4641
    %v4654 = vor.u32 %v4652, %v4653
    %v4655 = vshll.u32 920167782, %v4640
    %v4656 = vshrl.u32 1326507024, %v4641
    %v4657 = vor.u32 %v4655, %v4656
    %vm4658 = vcmp.lt.s32.totalorder %v4639, 1
    %vm4659 = vcmp.lt.s32.totalorder %v4639, 2
    %vm4660 = vcmp.lt.s32.totalorder %v4639, 3
    %vm4661 = vcmp.lt.s32.totalorder %v4639, 4
    %v4662 = vsel %vm4658, %v4642, %v4645
    %v4663 = vsel %vm4661, %v4651, 2102212464
    %v4664 = vsel %vm4660, %v4648, %v4663
    %v4665 = vsel %vm4659, %v4662, %v4664
    %v4666 = vsel %vm4658, %v4645, %v4648
    %v4667 = vsel %vm4661, %v4654, 920167782
    %v4668 = vsel %vm4660, %v4651, %v4667
    %v4669 = vsel %vm4659, %v4666, %v4668
    %v4670 = vsel %vm4658, %v4648, %v4651
    %v4671 = vsel %vm4661, %v4657, 1326507024
    %v4672 = vsel %vm4660, %v4654, %v4671
    %v4673 = vsel %vm4659, %v4670, %v4672
    %v4674 = vshll.u32 %v4634, 8
    %v4675 = vand.u32 %v4674, 65535
    %v4676 = vshrl.u32 %v4674, 16
    %v4677 = vand.u32 %v4673, 65535
    %v4678 = vshrl.u32 %v4673, 16
    %v4679 = vmul.u32 %v4675, %v4677
    %v4680 = vmul.u32 %v4675, %v4678
    %v4681 = vmul.u32 %v4676, %v4677
    %v4682 = vmul.u32 %v4676, %v4678
    %v4683 = vshll.u32 %v4680, 16
    %v4684 = vshrl.u32 %v4680, 16
    %v4685 = vshll.u32 %v4681, 16
    %v4686 = vshrl.u32 %v4681, 16
    %vm4687 = vc.u32 %v4679, %v4683
    %v4688 = vsel %vm4687, 1, 0
    %v4689 = vadd.s32 %v4679, %v4683
    %v4690 = vadd.s32 %v4682, %v4688
    %vm4691 = vc.u32 %v4689, %v4685
    %v4692 = vsel %vm4691, 1, 0
    %v4693 = vadd.s32 %v4689, %v4685
    %v4694 = vadd.s32 %v4690, %v4692
    %v4695 = vadd.s32 %v4694, %v4684
    %v4696 = vadd.s32 %v4695, %v4686
    %v4697 = vand.u32 %v4674, 65535
    %v4698 = vshrl.u32 %v4674, 16
    %v4699 = vand.u32 %v4669, 65535
    %v4700 = vshrl.u32 %v4669, 16
    %v4701 = vmul.u32 %v4697, %v4699
    %v4702 = vmul.u32 %v4697, %v4700
    %v4703 = vmul.u32 %v4698, %v4699
    %v4704 = vmul.u32 %v4698, %v4700
    %v4705 = vshll.u32 %v4702, 16
    %v4706 = vshrl.u32 %v4702, 16
    %v4707 = vshll.u32 %v4703, 16
    %v4708 = vshrl.u32 %v4703, 16
    %vm4709 = vc.u32 %v4701, %v4705
    %v4710 = vsel %vm4709, 1, 0
    %v4711 = vadd.s32 %v4701, %v4705
    %v4712 = vadd.s32 %v4704, %v4710
    %vm4713 = vc.u32 %v4711, %v4707
    %v4714 = vsel %vm4713, 1, 0
    %v4715 = vadd.s32 %v4711, %v4707
    %v4716 = vadd.s32 %v4712, %v4714
    %v4717 = vadd.s32 %v4716, %v4706
    %v4718 = vadd.s32 %v4717, %v4708
    %v4719 = vmul.u32 %v4674, %v4665
    %v4720 = vadd.s32 %v4696, %v4715
    %vm4721 = vc.u32 %v4696, %v4715
    %v4722 = vadd.s32 %v4718, 1
    %v4723 = vsel %vm4721, %v4722, %v4718
    %v4724 = vadd.s32 %v4719, %v4723
    %v4725 = vadd.s32 %v4724, 536870912
    %v4726 = vshrl.u32 %v4725, 30
    %v4727 = vshll.u32 %v4726, 30
    %v4728 = vsub.s32 %v4724, %v4727
    %vm4729 = vcmp.lt.s32.totalorder %v4728, 0
    %v4730 = vsub.s32 0, %v4728
    %v4731 = vsel %vm4729, %v4730, %v4728
    %v4732 = vclz %v4731
    %v4733 = vsub.s32 %v4732, 2
    %vm4734 = vcmp.gt.s32.totalorder 0, %v4733
    %v4735 = vsel %vm4734, 0, %v4733
    %v4736 = vsub.s32 32, %v4735
    %v4737 = vshll.u32 %v4728, %v4735
    %v4738 = vshrl.u32 %v4720, %v4736
    %v4739 = vor.u32 %v4737, %v4738
    %v4740 = vsub.s32 4294967266, %v4735
    %v4741 = vadd.s32 %v4740, 127
    %v4742 = vshll.u32 %v4741, 23
    %v4743 = vor.u32 4788187, %v4742
    %v4744 = vand.u32 2147483647, %v4743
    %v4746 = vcvt.s32.f32 %v4739
    %v4747 = vmul.f32 %v4746, %v4744
    %v4748 = vxor.u32 %v4747, 2147483648
    %v4749 = vsel %vm4628, %v4748, %v4747
    %v4750 = vsub.s32 4, %v4726
    %v4751 = vsel %vm4628, %v4750, %v4726
    %v4752 = vsel %vm4627, %v2907, %v4749
    %v4753 = vsel %vm4627, 0, %v4751
    %v4754 = vmul.f32 %v4752, %v4752
    %v4755 = vmul.f32 %v4754, -0.001358992
    %v4756 = vadd.f32 %v4755, 0.041655596
    %v4757 = vmul.f32 %v4754, %v4756
    %v4758 = vadd.f32 %v4757, -0.4999988
    %v4759 = vmul.f32 %v4754, %v4758
    %v4760 = vadd.f32 1.0, %v4759
    %v4761 = vmul.f32 %v4752, %v4752
    %v4762 = vmul.f32 %v4761, -0.00019511016
    %v4763 = vadd.f32 %v4762, 0.008332121
    %v4764 = vmul.f32 %v4761, %v4763
    %v4765 = vadd.f32 %v4764, -0.16666654
    %v4766 = vmul.f32 %v4761, %v4765
    %v4767 = vadd.f32 %v4766, 1.0
    %v4768 = vmul.f32 %v4767, %v4752
    %vm4769 = vweird.f32 %v2907
    %v4770 = vadd.s32 %v4753, 3
    %v4771 = vand.u32 %v4770, 3
    %vm4772 = vcmp.lt.s32.totalorder %v4771, 2
    %vm4773 = vcmp.eq.s32.totalorder %v4771, 0
    %v4774 = vxor.u32 %v4768, 2147483648
    %v4775 = vsel %vm4773, %v4760, %v4774
    %vm4776 = vcmp.eq.s32.totalorder %v4771, 2
    %v4777 = vxor.u32 %v4760, 2147483648
    %v4778 = vsel %vm4776, %v4777, %v4768
    %v4779 = vsel %vm4772, %v4775, %v4778
    %v4780 = vsel %vm4769, nan, %v4779
    %v4781 = vand.u32 2147483647, %v2910
    %vm4782 = vcmp.le.f32.partialorder %v4781, 0.7853982
    %vm4783 = vcmp.lt.s32.totalorder %v2910, 0
    %v4784 = vand.u32 %v2910, 2139095040
    %v4785 = vshrl.u32 %v4784, 23
    %v4786 = vsub.s32 %v4785, 127
    %v4787 = vand.u32 2147483647, %v2910
    %v4788 = vand.u32 %v4787, 8388607
    %v4789 = vor.u32 %v4788, 8388608
    %v4790 = vsub.s32 0, %v4789
    %v4791 = vadd.s32 %v4786, 1
    %vm4792 = vcmp.gt.s32.totalorder %v4791, 0
    %v4793 = vsel %vm4792, %v4791, 0
    %v4794 = vshrl.u32 %v4793, 5
    %v4795 = vand.u32 %v4793, 31
    %v4796 = vsub.s32 32, %v4795
    %v4797 = vshrl.u32 683565275, %v4796
    %v4798 = vshll.u32 683565275, %v4795
    %v4799 = vshrl.u32 2475754826, %v4796
    %v4800 = vor.u32 %v4798, %v4799
    %v4801 = vshll.u32 2475754826, %v4795
    %v4802 = vshrl.u32 2131351028, %v4796
    %v4803 = vor.u32 %v4801, %v4802
    %v4804 = vshll.u32 2131351028, %v4795
    %v4805 = vshrl.u32 2102212464, %v4796
    %v4806 = vor.u32 %v4804, %v4805
    %v4807 = vshll.u32 2102212464, %v4795
    %v4808 = vshrl.u32 920167782, %v4796
    %v4809 = vor.u32 %v4807, %v4808
    %v4810 = vshll.u32 920167782, %v4795
    %v4811 = vshrl.u32 1326507024, %v4796
    %v4812 = vor.u32 %v4810, %v4811
    %vm4813 = vcmp.lt.s32.totalorder %v4794, 1
    %vm4814 = vcmp.lt.s32.totalorder %v4794, 2
    %vm4815 = vcmp.lt.s32.totalorder %v4794, 3
    %vm4816 = vcmp.lt.s32.totalorder %v4794, 4
    %v4817 = vsel %vm4813, %v4797, %v4800
    %v4818 = vsel %vm4816, %v4806, 2102212464
    %v4819 = vsel %vm4815, %v4803, %v4818
    %v4820 = vsel %vm4814, %v4817, %v4819
    %v4821 = vsel %vm4813, %v4800, %v4803
    %v4822 = vsel %vm4816, %v4809, 920167782
    %v4823 = vsel %vm4815, %v4806, %v4822
    %v4824 = vsel %vm4814, %v4821, %v4823
    %v4825 = vsel %vm4813, %v4803, %v4806
    %v4826 = vsel %vm4816, %v4812, 1326507024
    %v4827 = vsel %vm4815, %v4809, %v4826
    %v4828 = vsel %vm4814, %v4825, %v4827
    %v4829 = vshll.u32 %v4789, 8
    %v4830 = vand.u32 %v4829, 65535
    %v4831 = vshrl.u32 %v4829, 16
    %v4832 = vand.u32 %v4828, 65535
    %v4833 = vshrl.u32 %v4828, 16
    %v4834 = vmul.u32 %v4830, %v4832
    %v4835 = vmul.u32 %v4830, %v4833
    %v4836 = vmul.u32 %v4831, %v4832
    %v4837 = vmul.u32 %v4831, %v4833
    %v4838 = vshll.u32 %v4835, 16
    %v4839 = vshrl.u32 %v4835, 16
    %v4840 = vshll.u32 %v4836, 16
    %v4841 = vshrl.u32 %v4836, 16
    %vm4842 = vc.u32 %v4834, %v4838
    %v4843 = vsel %vm4842, 1, 0
    %v4844 = vadd.s32 %v4834, %v4838
    %v4845 = vadd.s32 %v4837, %v4843
    %vm4846 = vc.u32 %v4844, %v4840
    %v4847 = vsel %vm4846, 1, 0
    %v4848 = vadd.s32 %v4844, %v4840
    %v4849 = vadd.s32 %v4845, %v4847
    %v4850 = vadd.s32 %v4849, %v4839
    %v4851 = vadd.s32 %v4850, %v4841
    %v4852 = vand.u32 %v4829, 65535
    %v4853 = vshrl.u32 %v4829, 16
    %v4854 = vand.u32 %v4824, 65535
    %v4855 = vshrl.u32 %v4824, 16
    %v4856 = vmul.u32 %v4852, %v4854
    %v4857 = vmul.u32 %v4852, %v4855
    %v4858 = vmul.u32 %v4853, %v4854
    %v4859 = vmul.u32 %v4853, %v4855
    %v4860 = vshll.u32 %v4857, 16
    %v4861 = vshrl.u32 %v4857, 16
    %v4862 = vshll.u32 %v4858, 16
    %v4863 = vshrl.u32 %v4858, 16
    %vm4864 = vc.u32 %v4856, %v4860
    %v4865 = vsel %vm4864, 1, 0
    %v4866 = vadd.s32 %v4856, %v4860
    %v4867 = vadd.s32 %v4859, %v4865
    %vm4868 = vc.u32 %v4866, %v4862
    %v4869 = vsel %vm4868, 1, 0
    %v4870 = vadd.s32 %v4866, %v4862
    %v4871 = vadd.s32 %v4867, %v4869
    %v4872 = vadd.s32 %v4871, %v4861
    %v4873 = vadd.s32 %v4872, %v4863
    %v4874 = vmul.u32 %v4829, %v4820
    %v4875 = vadd.s32 %v4851, %v4870
    %vm4876 = vc.u32 %v4851, %v4870
    %v4877 = vadd.s32 %v4873, 1
    %v4878 = vsel %vm4876, %v4877, %v4873
    %v4879 = vadd.s32 %v4874, %v4878
    %v4880 = vadd.s32 %v4879, 536870912
    %v4881 = vshrl.u32 %v4880, 30
    %v4882 = vshll.u32 %v4881, 30
    %v4883 = vsub.s32 %v4879, %v4882
    %vm4884 = vcmp.lt.s32.totalorder %v4883, 0
    %v4885 = vsub.s32 0, %v4883
    %v4886 = vsel %vm4884, %v4885, %v4883
    %v4887 = vclz %v4886
    %v4888 = vsub.s32 %v4887, 2
    %vm4889 = vcmp.gt.s32.totalorder 0, %v4888
    %v4890 = vsel %vm4889, 0, %v4888
    %v4891 = vsub.s32 32, %v4890
    %v4892 = vshll.u32 %v4883, %v4890
    %v4893 = vshrl.u32 %v4875, %v4891
    %v4894 = vor.u32 %v4892, %v4893
    %v4895 = vsub.s32 4294967266, %v4890
    %v4896 = vadd.s32 %v4895, 127
    %v4897 = vshll.u32 %v4896, 23
    %v4898 = vor.u32 4788187, %v4897
    %v4899 = vand.u32 2147483647, %v4898
    %v4901 = vcvt.s32.f32 %v4894
    %v4902 = vmul.f32 %v4901, %v4899
    %v4903 = vxor.u32 %v4902, 2147483648
    %v4904 = vsel %vm4783, %v4903, %v4902
    %v4905 = vsub.s32 4, %v4881
    %v4906 = vsel %vm4783, %v4905, %v4881
    %v4907 = vsel %vm4782, %v2910, %v4904
    %v4908 = vsel %vm4782, 0, %v4906
    %v4909 = vmul.f32 %v4907, %v4907
    %v4910 = vmul.f32 %v4909, -0.001358992
    %v4911 = vadd.f32 %v4910, 0.041655596
    %v4912 = vmul.f32 %v4909, %v4911
    %v4913 = vadd.f32 %v4912, -0.4999988
    %v4914 = vmul.f32 %v4909, %v4913
    %v4915 = vadd.f32 1.0, %v4914
    %v4916 = vmul.f32 %v4907, %v4907
    %v4917 = vmul.f32 %v4916, -0.00019511016
    %v4918 = vadd.f32 %v4917, 0.008332121
    %v4919 = vmul.f32 %v4916, %v4918
    %v4920 = vadd.f32 %v4919, -0.16666654
    %v4921 = vmul.f32 %v4916, %v4920
    %v4922 = vadd.f32 %v4921, 1.0
    %v4923 = vmul.f32 %v4922, %v4907
    %vm4924 = vweird.f32 %v2910
    %v4925 = vadd.s32 %v4908, 3
    %v4926 = vand.u32 %v4925, 3
    %vm4927 = vcmp.lt.s32.totalorder %v4926, 2
    %vm4928 = vcmp.eq.s32.totalorder %v4926, 0
    %v4929 = vxor.u32 %v4923, 2147483648
    %v4930 = vsel %vm4928, %v4915, %v4929
    %vm4931 = vcmp.eq.s32.totalorder %v4926, 2
    %v4932 = vxor.u32 %v4915, 2147483648
    %v4933 = vsel %vm4931, %v4932, %v4923
    %v4934 = vsel %vm4927, %v4930, %v4933
    %v4935 = vsel %vm4924, nan, %v4934
    %v4936 = vand.u32 2147483647, %v2913
    %vm4937 = vcmp.le.f32.partialorder %v4936, 0.7853982
    %vm4938 = vcmp.lt.s32.totalorder %v2913, 0
    %v4939 = vand.u32 %v2913, 2139095040
    %v4940 = vshrl.u32 %v4939, 23
    %v4941 = vsub.s32 %v4940, 127
    %v4942 = vand.u32 2147483647, %v2913
    %v4943 = vand.u32 %v4942, 8388607
    %v4944 = vor.u32 %v4943, 8388608
    %v4945 = vsub.s32 0, %v4944
    %v4946 = vadd.s32 %v4941, 1
    %vm4947 = vcmp.gt.s32.totalorder %v4946, 0
    %v4948 = vsel %vm4947, %v4946, 0
    %v4949 = vshrl.u32 %v4948, 5
    %v4950 = vand.u32 %v4948, 31
    %v4951 = vsub.s32 32, %v4950
    %v4952 = vshrl.u32 683565275, %v4951
    %v4953 = vshll.u32 683565275, %v4950
    %v4954 = vshrl.u32 2475754826, %v4951
    %v4955 = vor.u32 %v4953, %v4954
    %v4956 = vshll.u32 2475754826, %v4950
    %v4957 = vshrl.u32 2131351028, %v4951
    %v4958 = vor.u32 %v4956, %v4957
    %v4959 = vshll.u32 2131351028, %v4950
    %v4960 = vshrl.u32 2102212464, %v4951
    %v4961 = vor.u32 %v4959, %v4960
    %v4962 = vshll.u32 2102212464, %v4950
    %v4963 = vshrl.u32 920167782, %v4951
    %v4964 = vor.u32 %v4962, %v4963
    %v4965 = vshll.u32 920167782, %v4950
    %v4966 = vshrl.u32 1326507024, %v4951
    %v4967 = vor.u32 %v4965, %v4966
    %vm4968 = vcmp.lt.s32.totalorder %v4949, 1
    %vm4969 = vcmp.lt.s32.totalorder %v4949, 2
    %vm4970 = vcmp.lt.s32.totalorder %v4949, 3
    %vm4971 = vcmp.lt.s32.totalorder %v4949, 4
    %v4972 = vsel %vm4968, %v4952, %v4955
    %v4973 = vsel %vm4971, %v4961, 2102212464
    %v4974 = vsel %vm4970, %v4958, %v4973
    %v4975 = vsel %vm4969, %v4972, %v4974
    %v4976 = vsel %vm4968, %v4955, %v4958
    %v4977 = vsel %vm4971, %v4964, 920167782
    %v4978 = vsel %vm4970, %v4961, %v4977
    %v4979 = vsel %vm4969, %v4976, %v4978
    %v4980 = vsel %vm4968, %v4958, %v4961
    %v4981 = vsel %vm4971, %v4967, 1326507024
    %v4982 = vsel %vm4970, %v4964, %v4981
    %v4983 = vsel %vm4969, %v4980, %v4982
    %v4984 = vshll.u32 %v4944, 8
    %v4985 = vand.u32 %v4984, 65535
    %v4986 = vshrl.u32 %v4984, 16
    %v4987 = vand.u32 %v4983, 65535
    %v4988 = vshrl.u32 %v4983, 16
    %v4989 = vmul.u32 %v4985, %v4987
    %v4990 = vmul.u32 %v4985, %v4988
    %v4991 = vmul.u32 %v4986, %v4987
    %v4992 = vmul.u32 %v4986, %v4988
    %v4993 = vshll.u32 %v4990, 16
    %v4994 = vshrl.u32 %v4990, 16
    %v4995 = vshll.u32 %v4991, 16
    %v4996 = vshrl.u32 %v4991, 16
    %vm4997 = vc.u32 %v4989, %v4993
    %v4998 = vsel %vm4997, 1, 0
    %v4999 = vadd.s32 %v4989, %v4993
    %v5000 = vadd.s32 %v4992, %v4998
    %vm5001 = vc.u32 %v4999, %v4995
    %v5002 = vsel %vm5001, 1, 0
    %v5003 = vadd.s32 %v4999, %v4995
    %v5004 = vadd.s32 %v5000, %v5002
    %v5005 = vadd.s32 %v5004, %v4994
    %v5006 = vadd.s32 %v5005, %v4996
    %v5007 = vand.u32 %v4984, 65535
    %v5008 = vshrl.u32 %v4984, 16
    %v5009 = vand.u32 %v4979, 65535
    %v5010 = vshrl.u32 %v4979, 16
    %v5011 = vmul.u32 %v5007, %v5009
    %v5012 = vmul.u32 %v5007, %v5010
    %v5013 = vmul.u32 %v5008, %v5009
    %v5014 = vmul.u32 %v5008, %v5010
    %v5015 = vshll.u32 %v5012, 16
    %v5016 = vshrl.u32 %v5012, 16
    %v5017 = vshll.u32 %v5013, 16
    %v5018 = vshrl.u32 %v5013, 16
    %vm5019 = vc.u32 %v5011, %v5015
    %v5020 = vsel %vm5019, 1, 0
    %v5021 = vadd.s32 %v5011, %v5015
    %v5022 = vadd.s32 %v5014, %v5020
    %vm5023 = vc.u32 %v5021, %v5017
    %v5024 = vsel %vm5023, 1, 0
    %v5025 = vadd.s32 %v5021, %v5017
    %v5026 = vadd.s32 %v5022, %v5024
    %v5027 = vadd.s32 %v5026, %v5016
    %v5028 = vadd.s32 %v5027, %v5018
    %v5029 = vmul.u32 %v4984, %v4975
    %v5030 = vadd.s32 %v5006, %v5025
    %vm5031 = vc.u32 %v5006, %v5025
    %v5032 = vadd.s32 %v5028, 1
    %v5033 = vsel %vm5031, %v5032, %v5028
    %v5034 = vadd.s32 %v5029, %v5033
    %v5035 = vadd.s32 %v5034, 536870912
    %v5036 = vshrl.u32 %v5035, 30
    %v5037 = vshll.u32 %v5036, 30
    %v5038 = vsub.s32 %v5034, %v5037
    %vm5039 = vcmp.lt.s32.totalorder %v5038, 0
    %v5040 = vsub.s32 0, %v5038
    %v5041 = vsel %vm5039, %v5040, %v5038
    %v5042 = vclz %v5041
    %v5043 = vsub.s32 %v5042, 2
    %vm5044 = vcmp.gt.s32.totalorder 0, %v5043
    %v5045 = vsel %vm5044, 0, %v5043
    %v5046 = vsub.s32 32, %v5045
    %v5047 = vshll.u32 %v5038, %v5045
    %v5048 = vshrl.u32 %v5030, %v5046
    %v5049 = vor.u32 %v5047, %v5048
    %v5050 = vsub.s32 4294967266, %v5045
    %v5051 = vadd.s32 %v5050, 127
    %v5052 = vshll.u32 %v5051, 23
    %v5053 = vor.u32 4788187, %v5052
    %v5054 = vand.u32 2147483647, %v5053
    %v5056 = vcvt.s32.f32 %v5049
    %v5057 = vmul.f32 %v5056, %v5054
    %v5058 = vxor.u32 %v5057, 2147483648
    %v5059 = vsel %vm4938, %v5058, %v5057
    %v5060 = vsub.s32 4, %v5036
    %v5061 = vsel %vm4938, %v5060, %v5036
    %v5062 = vsel %vm4937, %v2913, %v5059
    %v5063 = vsel %vm4937, 0, %v5061
    %v5064 = vmul.f32 %v5062, %v5062
    %v5065 = vmul.f32 %v5064, -0.001358992
    %v5066 = vadd.f32 %v5065, 0.041655596
    %v5067 = vmul.f32 %v5064, %v5066
    %v5068 = vadd.f32 %v5067, -0.4999988
    %v5069 = vmul.f32 %v5064, %v5068
    %v5070 = vadd.f32 1.0, %v5069
    %v5071 = vmul.f32 %v5062, %v5062
    %v5072 = vmul.f32 %v5071, -0.00019511016
    %v5073 = vadd.f32 %v5072, 0.008332121
    %v5074 = vmul.f32 %v5071, %v5073
    %v5075 = vadd.f32 %v5074, -0.16666654
    %v5076 = vmul.f32 %v5071, %v5075
    %v5077 = vadd.f32 %v5076, 1.0
    %v5078 = vmul.f32 %v5077, %v5062
    %vm5079 = vweird.f32 %v2913
    %v5080 = vadd.s32 %v5063, 3
    %v5081 = vand.u32 %v5080, 3
    %vm5082 = vcmp.lt.s32.totalorder %v5081, 2
    %vm5083 = vcmp.eq.s32.totalorder %v5081, 0
    %v5084 = vxor.u32 %v5078, 2147483648
    %v5085 = vsel %vm5083, %v5070, %v5084
    %vm5086 = vcmp.eq.s32.totalorder %v5081, 2
    %v5087 = vxor.u32 %v5070, 2147483648
    %v5088 = vsel %vm5086, %v5087, %v5078
    %v5089 = vsel %vm5082, %v5085, %v5088
    %v5090 = vsel %vm5079, nan, %v5089
    %v5091 = vand.u32 2147483647, %v2916
    %vm5092 = vcmp.le.f32.partialorder %v5091, 0.7853982
    %vm5093 = vcmp.lt.s32.totalorder %v2916, 0
    %v5094 = vand.u32 %v2916, 2139095040
    %v5095 = vshrl.u32 %v5094, 23
    %v5096 = vsub.s32 %v5095, 127
    %v5097 = vand.u32 2147483647, %v2916
    %v5098 = vand.u32 %v5097, 8388607
    %v5099 = vor.u32 %v5098, 8388608
    %v5100 = vsub.s32 0, %v5099
    %v5101 = vadd.s32 %v5096, 1
    %vm5102 = vcmp.gt.s32.totalorder %v5101, 0
    %v5103 = vsel %vm5102, %v5101, 0
    %v5104 = vshrl.u32 %v5103, 5
    %v5105 = vand.u32 %v5103, 31
    %v5106 = vsub.s32 32, %v5105
    %v5107 = vshrl.u32 683565275, %v5106
    %v5108 = vshll.u32 683565275, %v5105
    %v5109 = vshrl.u32 2475754826, %v5106
    %v5110 = vor.u32 %v5108, %v5109
    %v5111 = vshll.u32 2475754826, %v5105
    %v5112 = vshrl.u32 2131351028, %v5106
    %v5113 = vor.u32 %v5111, %v5112
    %v5114 = vshll.u32 2131351028, %v5105
    %v5115 = vshrl.u32 2102212464, %v5106
    %v5116 = vor.u32 %v5114, %v5115
    %v5117 = vshll.u32 2102212464, %v5105
    %v5118 = vshrl.u32 920167782, %v5106
    %v5119 = vor.u32 %v5117, %v5118
    %v5120 = vshll.u32 920167782, %v5105
    %v5121 = vshrl.u32 1326507024, %v5106
    %v5122 = vor.u32 %v5120, %v5121
    %vm5123 = vcmp.lt.s32.totalorder %v5104, 1
    %vm5124 = vcmp.lt.s32.totalorder %v5104, 2
    %vm5125 = vcmp.lt.s32.totalorder %v5104, 3
    %vm5126 = vcmp.lt.s32.totalorder %v5104, 4
    %v5127 = vsel %vm5123, %v5107, %v5110
    %v5128 = vsel %vm5126, %v5116, 2102212464
    %v5129 = vsel %vm5125, %v5113, %v5128
    %v5130 = vsel %vm5124, %v5127, %v5129
    %v5131 = vsel %vm5123, %v5110, %v5113
    %v5132 = vsel %vm5126, %v5119, 920167782
    %v5133 = vsel %vm5125, %v5116, %v5132
    %v5134 = vsel %vm5124, %v5131, %v5133
    %v5135 = vsel %vm5123, %v5113, %v5116
    %v5136 = vsel %vm5126, %v5122, 1326507024
    %v5137 = vsel %vm5125, %v5119, %v5136
    %v5138 = vsel %vm5124, %v5135, %v5137
    %v5139 = vshll.u32 %v5099, 8
    %v5140 = vand.u32 %v5139, 65535
    %v5141 = vshrl.u32 %v5139, 16
    %v5142 = vand.u32 %v5138, 65535
    %v5143 = vshrl.u32 %v5138, 16
    %v5144 = vmul.u32 %v5140, %v5142
    %v5145 = vmul.u32 %v5140, %v5143
    %v5146 = vmul.u32 %v5141, %v5142
    %v5147 = vmul.u32 %v5141, %v5143
    %v5148 = vshll.u32 %v5145, 16
    %v5149 = vshrl.u32 %v5145, 16
    %v5150 = vshll.u32 %v5146, 16
    %v5151 = vshrl.u32 %v5146, 16
    %vm5152 = vc.u32 %v5144, %v5148
    %v5153 = vsel %vm5152, 1, 0
    %v5154 = vadd.s32 %v5144, %v5148
    %v5155 = vadd.s32 %v5147, %v5153
    %vm5156 = vc.u32 %v5154, %v5150
    %v5157 = vsel %vm5156, 1, 0
    %v5158 = vadd.s32 %v5154, %v5150
    %v5159 = vadd.s32 %v5155, %v5157
    %v5160 = vadd.s32 %v5159, %v5149
    %v5161 = vadd.s32 %v5160, %v5151
    %v5162 = vand.u32 %v5139, 65535
    %v5163 = vshrl.u32 %v5139, 16
    %v5164 = vand.u32 %v5134, 65535
    %v5165 = vshrl.u32 %v5134, 16
    %v5166 = vmul.u32 %v5162, %v5164
    %v5167 = vmul.u32 %v5162, %v5165
    %v5168 = vmul.u32 %v5163, %v5164
    %v5169 = vmul.u32 %v5163, %v5165
    %v5170 = vshll.u32 %v5167, 16
    %v5171 = vshrl.u32 %v5167, 16
    %v5172 = vshll.u32 %v5168, 16
    %v5173 = vshrl.u32 %v5168, 16
    %vm5174 = vc.u32 %v5166, %v5170
    %v5175 = vsel %vm5174, 1, 0
    %v5176 = vadd.s32 %v5166, %v5170
    %v5177 = vadd.s32 %v5169, %v5175
    %vm5178 = vc.u32 %v5176, %v5172
    %v5179 = vsel %vm5178, 1, 0
    %v5180 = vadd.s32 %v5176, %v5172
    %v5181 = vadd.s32 %v5177, %v5179
    %v5182 = vadd.s32 %v5181, %v5171
    %v5183 = vadd.s32 %v5182, %v5173
    %v5184 = vmul.u32 %v5139, %v5130
    %v5185 = vadd.s32 %v5161, %v5180
    %vm5186 = vc.u32 %v5161, %v5180
    %v5187 = vadd.s32 %v5183, 1
    %v5188 = vsel %vm5186, %v5187, %v5183
    %v5189 = vadd.s32 %v5184, %v5188
    %v5190 = vadd.s32 %v5189, 536870912
    %v5191 = vshrl.u32 %v5190, 30
    %v5192 = vshll.u32 %v5191, 30
    %v5193 = vsub.s32 %v5189, %v5192
    %vm5194 = vcmp.lt.s32.totalorder %v5193, 0
    %v5195 = vsub.s32 0, %v5193
    %v5196 = vsel %vm5194, %v5195, %v5193
    %v5197 = vclz %v5196
    %v5198 = vsub.s32 %v5197, 2
    %vm5199 = vcmp.gt.s32.totalorder 0, %v5198
    %v5200 = vsel %vm5199, 0, %v5198
    %v5201 = vsub.s32 32, %v5200
    %v5202 = vshll.u32 %v5193, %v5200
    %v5203 = vshrl.u32 %v5185, %v5201
    %v5204 = vor.u32 %v5202, %v5203
    %v5205 = vsub.s32 4294967266, %v5200
    %v5206 = vadd.s32 %v5205, 127
    %v5207 = vshll.u32 %v5206, 23
    %v5208 = vor.u32 4788187, %v5207
    %v5209 = vand.u32 2147483647, %v5208
    %v5211 = vcvt.s32.f32 %v5204
    %v5212 = vmul.f32 %v5211, %v5209
    %v5213 = vxor.u32 %v5212, 2147483648
    %v5214 = vsel %vm5093, %v5213, %v5212
    %v5215 = vsub.s32 4, %v5191
    %v5216 = vsel %vm5093, %v5215, %v5191
    %v5217 = vsel %vm5092, %v2916, %v5214
    %v5218 = vsel %vm5092, 0, %v5216
    %v5219 = vmul.f32 %v5217, %v5217
    %v5220 = vmul.f32 %v5219, -0.001358992
    %v5221 = vadd.f32 %v5220, 0.041655596
    %v5222 = vmul.f32 %v5219, %v5221
    %v5223 = vadd.f32 %v5222, -0.4999988
    %v5224 = vmul.f32 %v5219, %v5223
    %v5225 = vadd.f32 1.0, %v5224
    %v5226 = vmul.f32 %v5217, %v5217
    %v5227 = vmul.f32 %v5226, -0.00019511016
    %v5228 = vadd.f32 %v5227, 0.008332121
    %v5229 = vmul.f32 %v5226, %v5228
    %v5230 = vadd.f32 %v5229, -0.16666654
    %v5231 = vmul.f32 %v5226, %v5230
    %v5232 = vadd.f32 %v5231, 1.0
    %v5233 = vmul.f32 %v5232, %v5217
    %vm5234 = vweird.f32 %v2916
    %v5235 = vadd.s32 %v5218, 3
    %v5236 = vand.u32 %v5235, 3
    %vm5237 = vcmp.lt.s32.totalorder %v5236, 2
    %vm5238 = vcmp.eq.s32.totalorder %v5236, 0
    %v5239 = vxor.u32 %v5233, 2147483648
    %v5240 = vsel %vm5238, %v5225, %v5239
    %vm5241 = vcmp.eq.s32.totalorder %v5236, 2
    %v5242 = vxor.u32 %v5225, 2147483648
    %v5243 = vsel %vm5241, %v5242, %v5233
    %v5244 = vsel %vm5237, %v5240, %v5243
    %v5245 = vsel %vm5234, nan, %v5244
    %v5246 = vand.u32 2147483647, %v2919
    %vm5247 = vcmp.le.f32.partialorder %v5246, 0.7853982
    %vm5248 = vcmp.lt.s32.totalorder %v2919, 0
    %v5249 = vand.u32 %v2919, 2139095040
    %v5250 = vshrl.u32 %v5249, 23
    %v5251 = vsub.s32 %v5250, 127
    %v5252 = vand.u32 2147483647, %v2919
    %v5253 = vand.u32 %v5252, 8388607
    %v5254 = vor.u32 %v5253, 8388608
    %v5255 = vsub.s32 0, %v5254
    %v5256 = vadd.s32 %v5251, 1
    %vm5257 = vcmp.gt.s32.totalorder %v5256, 0
    %v5258 = vsel %vm5257, %v5256, 0
    %v5259 = vshrl.u32 %v5258, 5
    %v5260 = vand.u32 %v5258, 31
    %v5261 = vsub.s32 32, %v5260
    %v5262 = vshrl.u32 683565275, %v5261
    %v5263 = vshll.u32 683565275, %v5260
    %v5264 = vshrl.u32 2475754826, %v5261
    %v5265 = vor.u32 %v5263, %v5264
    %v5266 = vshll.u32 2475754826, %v5260
    %v5267 = vshrl.u32 2131351028, %v5261
    %v5268 = vor.u32 %v5266, %v5267
    %v5269 = vshll.u32 2131351028, %v5260
    %v5270 = vshrl.u32 2102212464, %v5261
    %v5271 = vor.u32 %v5269, %v5270
    %v5272 = vshll.u32 2102212464, %v5260
    %v5273 = vshrl.u32 920167782, %v5261
    %v5274 = vor.u32 %v5272, %v5273
    %v5275 = vshll.u32 920167782, %v5260
    %v5276 = vshrl.u32 1326507024, %v5261
    %v5277 = vor.u32 %v5275, %v5276
    %vm5278 = vcmp.lt.s32.totalorder %v5259, 1
    %vm5279 = vcmp.lt.s32.totalorder %v5259, 2
    %vm5280 = vcmp.lt.s32.totalorder %v5259, 3
    %vm5281 = vcmp.lt.s32.totalorder %v5259, 4
    %v5282 = vsel %vm5278, %v5262, %v5265
    %v5283 = vsel %vm5281, %v5271, 2102212464
    %v5284 = vsel %vm5280, %v5268, %v5283
    %v5285 = vsel %vm5279, %v5282, %v5284
    %v5286 = vsel %vm5278, %v5265, %v5268
    %v5287 = vsel %vm5281, %v5274, 920167782
    %v5288 = vsel %vm5280, %v5271, %v5287
    %v5289 = vsel %vm5279, %v5286, %v5288
    %v5290 = vsel %vm5278, %v5268, %v5271
    %v5291 = vsel %vm5281, %v5277, 1326507024
    %v5292 = vsel %vm5280, %v5274, %v5291
    %v5293 = vsel %vm5279, %v5290, %v5292
    %v5294 = vshll.u32 %v5254, 8
    %v5295 = vand.u32 %v5294, 65535
    %v5296 = vshrl.u32 %v5294, 16
    %v5297 = vand.u32 %v5293, 65535
    %v5298 = vshrl.u32 %v5293, 16
    %v5299 = vmul.u32 %v5295, %v5297
    %v5300 = vmul.u32 %v5295, %v5298
    %v5301 = vmul.u32 %v5296, %v5297
    %v5302 = vmul.u32 %v5296, %v5298
    %v5303 = vshll.u32 %v5300, 16
    %v5304 = vshrl.u32 %v5300, 16
    %v5305 = vshll.u32 %v5301, 16
    %v5306 = vshrl.u32 %v5301, 16
    %vm5307 = vc.u32 %v5299, %v5303
    %v5308 = vsel %vm5307, 1, 0
    %v5309 = vadd.s32 %v5299, %v5303
    %v5310 = vadd.s32 %v5302, %v5308
    %vm5311 = vc.u32 %v5309, %v5305
    %v5312 = vsel %vm5311, 1, 0
    %v5313 = vadd.s32 %v5309, %v5305
    %v5314 = vadd.s32 %v5310, %v5312
    %v5315 = vadd.s32 %v5314, %v5304
    %v5316 = vadd.s32 %v5315, %v5306
    %v5317 = vand.u32 %v5294, 65535
    %v5318 = vshrl.u32 %v5294, 16
    %v5319 = vand.u32 %v5289, 65535
    %v5320 = vshrl.u32 %v5289, 16
    %v5321 = vmul.u32 %v5317, %v5319
    %v5322 = vmul.u32 %v5317, %v5320
    %v5323 = vmul.u32 %v5318, %v5319
    %v5324 = vmul.u32 %v5318, %v5320
    %v5325 = vshll.u32 %v5322, 16
    %v5326 = vshrl.u32 %v5322, 16
    %v5327 = vshll.u32 %v5323, 16
    %v5328 = vshrl.u32 %v5323, 16
    %vm5329 = vc.u32 %v5321, %v5325
    %v5330 = vsel %vm5329, 1, 0
    %v5331 = vadd.s32 %v5321, %v5325
    %v5332 = vadd.s32 %v5324, %v5330
    %vm5333 = vc.u32 %v5331, %v5327
    %v5334 = vsel %vm5333, 1, 0
    %v5335 = vadd.s32 %v5331, %v5327
    %v5336 = vadd.s32 %v5332, %v5334
    %v5337 = vadd.s32 %v5336, %v5326
    %v5338 = vadd.s32 %v5337, %v5328
    %v5339 = vmul.u32 %v5294, %v5285
    %v5340 = vadd.s32 %v5316, %v5335
    %vm5341 = vc.u32 %v5316, %v5335
    %v5342 = vadd.s32 %v5338, 1
    %v5343 = vsel %vm5341, %v5342, %v5338
    %v5344 = vadd.s32 %v5339, %v5343
    %v5345 = vadd.s32 %v5344, 536870912
    %v5346 = vshrl.u32 %v5345, 30
    %v5347 = vshll.u32 %v5346, 30
    %v5348 = vsub.s32 %v5344, %v5347
    %vm5349 = vcmp.lt.s32.totalorder %v5348, 0
    %v5350 = vsub.s32 0, %v5348
    %v5351 = vsel %vm5349, %v5350, %v5348
    %v5352 = vclz %v5351
    %v5353 = vsub.s32 %v5352, 2
    %vm5354 = vcmp.gt.s32.totalorder 0, %v5353
    %v5355 = vsel %vm5354, 0, %v5353
    %v5356 = vsub.s32 32, %v5355
    %v5357 = vshll.u32 %v5348, %v5355
    %v5358 = vshrl.u32 %v5340, %v5356
    %v5359 = vor.u32 %v5357, %v5358
    %v5360 = vsub.s32 4294967266, %v5355
    %v5361 = vadd.s32 %v5360, 127
    %v5362 = vshll.u32 %v5361, 23
    %v5363 = vor.u32 4788187, %v5362
    %v5364 = vand.u32 2147483647, %v5363
    %v5366 = vcvt.s32.f32 %v5359
    %v5367 = vmul.f32 %v5366, %v5364
    %v5368 = vxor.u32 %v5367, 2147483648
    %v5369 = vsel %vm5248, %v5368, %v5367
    %v5370 = vsub.s32 4, %v5346
    %v5371 = vsel %vm5248, %v5370, %v5346
    %v5372 = vsel %vm5247, %v2919, %v5369
    %v5373 = vsel %vm5247, 0, %v5371
    %v5374 = vmul.f32 %v5372, %v5372
    %v5375 = vmul.f32 %v5374, -0.001358992
    %v5376 = vadd.f32 %v5375, 0.041655596
    %v5377 = vmul.f32 %v5374, %v5376
    %v5378 = vadd.f32 %v5377, -0.4999988
    %v5379 = vmul.f32 %v5374, %v5378
    %v5380 = vadd.f32 1.0, %v5379
    %v5381 = vmul.f32 %v5372, %v5372
    %v5382 = vmul.f32 %v5381, -0.00019511016
    %v5383 = vadd.f32 %v5382, 0.008332121
    %v5384 = vmul.f32 %v5381, %v5383
    %v5385 = vadd.f32 %v5384, -0.16666654
    %v5386 = vmul.f32 %v5381, %v5385
    %v5387 = vadd.f32 %v5386, 1.0
    %v5388 = vmul.f32 %v5387, %v5372
    %vm5389 = vweird.f32 %v2919
    %v5390 = vadd.s32 %v5373, 3
    %v5391 = vand.u32 %v5390, 3
    %vm5392 = vcmp.lt.s32.totalorder %v5391, 2
    %vm5393 = vcmp.eq.s32.totalorder %v5391, 0
    %v5394 = vxor.u32 %v5388, 2147483648
    %v5395 = vsel %vm5393, %v5380, %v5394
    %vm5396 = vcmp.eq.s32.totalorder %v5391, 2
    %v5397 = vxor.u32 %v5380, 2147483648
    %v5398 = vsel %vm5396, %v5397, %v5388
    %v5399 = vsel %vm5392, %v5395, %v5398
    %v5400 = vsel %vm5389, nan, %v5399
    %5402 = vset.pattern.permute.xlu0 0
    %5403 = vperm.xlu0 %5402, %v49
    %v5404 = vpop.permute.xlu0 %5403
    %5407 = vset.pattern.permute.xlu0 0
    %5408 = vperm.xlu0 %5407, %v51
    %v5409 = vpop.permute.xlu0 %5408
    %5412 = vset.pattern.permute.xlu0 0
    %5413 = vperm.xlu0 %5412, %v53
    %v5414 = vpop.permute.xlu0 %5413
    %5417 = vset.pattern.permute.xlu0 0
    %5418 = vperm.xlu0 %5417, %v55
    %v5419 = vpop.permute.xlu0 %5418
    %5421 = vmatpush.msra.mxu0 %v5400
    %5422 = vmatpush.msra.mxu0 %v5245
    %5423 = vmatpush.msra.mxu0 %v5090
    %5424 = vmatpush.msra.mxu0 %v4935
    %5425 = vmatpush.msra.mxu0 %v4780
    %5426 = vmatpush.msra.mxu0 %v4625
    %5427 = vmatpush.msra.mxu0 %v4470
    %5428 = vmatpush.msra.mxu0 %v4315
    %5429 = vmatpush.msra.mxu0 %v4160
    %5430 = vmatpush.msra.mxu0 %v4005
    %5431 = vmatpush.msra.mxu0 %v3850
    %5432 = vmatpush.msra.mxu0 %v3695
    %5433 = vmatpush.msra.mxu0 %v3540
    %5434 = vmatpush.msra.mxu0 %v3385
    %5435 = vmatpush.msra.mxu0 %v3230
    %5436 = vmatpush.msra.mxu0 %v3075
    %5437 = vmatmul.f32.gmra.mxu0 %v48
    %v5438 = vpop.f32.mrf.mxu0
    %v5439 = vadd.f32 %v5404, %v5438
    %5440 = vmatmul.f32.gmra.mxu0 %v50
    %v5441 = vpop.f32.mrf.mxu0
    %v5442 = vadd.f32 %v5409, %v5441
    %5443 = vmatmul.f32.gmra.mxu0 %v52
    %v5444 = vpop.f32.mrf.mxu0
    %v5445 = vadd.f32 %v5414, %v5444
    %5446 = vmatmul.f32.gmra.mxu0 %v54
    %v5447 = vpop.f32.mrf.mxu0
    %v5448 = vadd.f32 %v5419, %v5447
    %5449 = vdwg.mxu0
    %5451 = vset.pattern.permute.xlu0 32
    %5452 = vperm.xlu0 %5451, %v64
    %v5453 = vpop.permute.xlu0 %5452
    %5456 = vset.pattern.permute.xlu0 32
    %5457 = vperm.xlu0 %5456, %v65
    %v5458 = vpop.permute.xlu0 %5457
    %5461 = vset.pattern.permute.xlu0 32
    %5462 = vperm.xlu0 %5461, %v66
    %v5463 = vpop.permute.xlu0 %5462
    %5466 = vset.pattern.permute.xlu0 32
    %5467 = vperm.xlu0 %5466, %v67
    %v5468 = vpop.permute.xlu0 %5467
    %5471 = vset.pattern.permute.xlu0 32
    %5472 = vperm.xlu0 %5471, %v68
    %v5473 = vpop.permute.xlu0 %5472
    %5476 = vset.pattern.permute.xlu0 32
    %5477 = vperm.xlu0 %5476, %v69
    %v5478 = vpop.permute.xlu0 %5477
    %5481 = vset.pattern.permute.xlu0 32
    %5482 = vperm.xlu0 %5481, %v70
    %v5483 = vpop.permute.xlu0 %5482
    %5486 = vset.pattern.permute.xlu0 32
    %5487 = vperm.xlu0 %5486, %v71
    %v5488 = vpop.permute.xlu0 %5487
    %5491 = vset.pattern.permute.xlu0 32
    %5492 = vperm.xlu0 %5491, %v72
    %v5493 = vpop.permute.xlu0 %5492
    %5496 = vset.pattern.permute.xlu0 32
    %5497 = vperm.xlu0 %5496, %v73
    %v5498 = vpop.permute.xlu0 %5497
    %5501 = vset.pattern.permute.xlu0 32
    %5502 = vperm.xlu0 %5501, %v74
    %v5503 = vpop.permute.xlu0 %5502
    %5506 = vset.pattern.permute.xlu0 32
    %5507 = vperm.xlu0 %5506, %v75
    %v5508 = vpop.permute.xlu0 %5507
    %5511 = vset.pattern.permute.xlu0 32
    %5512 = vperm.xlu0 %5511, %v76
    %v5513 = vpop.permute.xlu0 %5512
    %5516 = vset.pattern.permute.xlu0 32
    %5517 = vperm.xlu0 %5516, %v77
    %v5518 = vpop.permute.xlu0 %5517
    %5521 = vset.pattern.permute.xlu0 32
    %5522 = vperm.xlu0 %5521, %v78
    %v5523 = vpop.permute.xlu0 %5522
    %5526 = vset.pattern.permute.xlu0 32
    %5527 = vperm.xlu0 %5526, %v79
    %v5528 = vpop.permute.xlu0 %5527
    %5531 = vset.pattern.permute.xlu0 32
    %5532 = vperm.xlu0 %5531, %v80
    %v5533 = vpop.permute.xlu0 %5532
    %5536 = vset.pattern.permute.xlu0 32
    %5537 = vperm.xlu0 %5536, %v81
    %v5538 = vpop.permute.xlu0 %5537
    %5541 = vset.pattern.permute.xlu0 32
    %5542 = vperm.xlu0 %5541, %v82
    %v5543 = vpop.permute.xlu0 %5542
    %5546 = vset.pattern.permute.xlu0 32
    %5547 = vperm.xlu0 %5546, %v83
    %v5548 = vpop.permute.xlu0 %5547
    %5551 = vset.pattern.permute.xlu0 32
    %5552 = vperm.xlu0 %5551, %v84
    %v5553 = vpop.permute.xlu0 %5552
    %5556 = vset.pattern.permute.xlu0 32
    %5557 = vperm.xlu0 %5556, %v85
    %v5558 = vpop.permute.xlu0 %5557
    %5561 = vset.pattern.permute.xlu0 32
    %5562 = vperm.xlu0 %5561, %v86
    %v5563 = vpop.permute.xlu0 %5562
    %5566 = vset.pattern.permute.xlu0 32
    %5567 = vperm.xlu0 %5566, %v87
    %v5568 = vpop.permute.xlu0 %5567
    %5571 = vset.pattern.permute.xlu0 32
    %5572 = vperm.xlu0 %5571, %v88
    %v5573 = vpop.permute.xlu0 %5572
    %5576 = vset.pattern.permute.xlu0 32
    %5577 = vperm.xlu0 %5576, %v89
    %v5578 = vpop.permute.xlu0 %5577
    %5581 = vset.pattern.permute.xlu0 32
    %5582 = vperm.xlu0 %5581, %v90
    %v5583 = vpop.permute.xlu0 %5582
    %5586 = vset.pattern.permute.xlu0 32
    %5587 = vperm.xlu0 %5586, %v91
    %v5588 = vpop.permute.xlu0 %5587
    %5591 = vset.pattern.permute.xlu0 32
    %5592 = vperm.xlu0 %5591, %v92
    %v5593 = vpop.permute.xlu0 %5592
    %5596 = vset.pattern.permute.xlu0 32
    %5597 = vperm.xlu0 %5596, %v93
    %v5598 = vpop.permute.xlu0 %5597
    %5601 = vset.pattern.permute.xlu0 32
    %5602 = vperm.xlu0 %5601, %v94
    %v5603 = vpop.permute.xlu0 %5602
    %5606 = vset.pattern.permute.xlu0 32
    %5607 = vperm.xlu0 %5606, %v95
    %v5608 = vpop.permute.xlu0 %5607
    %5611 = vset.pattern.permute.xlu0 32
    %5612 = vperm.xlu0 %5611, %v96
    %v5613 = vpop.permute.xlu0 %5612
    %5616 = vset.pattern.permute.xlu0 32
    %5617 = vperm.xlu0 %5616, %v97
    %v5618 = vpop.permute.xlu0 %5617
    %5621 = vset.pattern.permute.xlu0 32
    %5622 = vperm.xlu0 %5621, %v98
    %v5623 = vpop.permute.xlu0 %5622
    %5626 = vset.pattern.permute.xlu0 32
    %5627 = vperm.xlu0 %5626, %v99
    %v5628 = vpop.permute.xlu0 %5627
    %5631 = vset.pattern.permute.xlu0 32
    %5632 = vperm.xlu0 %5631, %v100
    %v5633 = vpop.permute.xlu0 %5632
    %5636 = vset.pattern.permute.xlu0 32
    %5637 = vperm.xlu0 %5636, %v101
    %v5638 = vpop.permute.xlu0 %5637
    %5641 = vset.pattern.permute.xlu0 32
    %5642 = vperm.xlu0 %5641, %v102
    %v5643 = vpop.permute.xlu0 %5642
    %5646 = vset.pattern.permute.xlu0 32
    %5647 = vperm.xlu0 %5646, %v103
    %v5648 = vpop.permute.xlu0 %5647
    %5651 = vset.pattern.permute.xlu0 32
    %5652 = vperm.xlu0 %5651, %v104
    %v5653 = vpop.permute.xlu0 %5652
    %5656 = vset.pattern.permute.xlu0 32
    %5657 = vperm.xlu0 %5656, %v105
    %v5658 = vpop.permute.xlu0 %5657
    %5661 = vset.pattern.permute.xlu0 32
    %5662 = vperm.xlu0 %5661, %v106
    %v5663 = vpop.permute.xlu0 %5662
    %5666 = vset.pattern.permute.xlu0 32
    %5667 = vperm.xlu0 %5666, %v107
    %v5668 = vpop.permute.xlu0 %5667
    %5671 = vset.pattern.permute.xlu0 32
    %5672 = vperm.xlu0 %5671, %v108
    %v5673 = vpop.permute.xlu0 %5672
    %5676 = vset.pattern.permute.xlu0 32
    %5677 = vperm.xlu0 %5676, %v109
    %v5678 = vpop.permute.xlu0 %5677
    %5681 = vset.pattern.permute.xlu0 32
    %5682 = vperm.xlu0 %5681, %v110
    %v5683 = vpop.permute.xlu0 %5682
    %5686 = vset.pattern.permute.xlu0 32
    %5687 = vperm.xlu0 %5686, %v111
    %v5688 = vpop.permute.xlu0 %5687
    %5691 = vset.pattern.permute.xlu0 32
    %5692 = vperm.xlu0 %5691, %v112
    %v5693 = vpop.permute.xlu0 %5692
    %5696 = vset.pattern.permute.xlu0 32
    %5697 = vperm.xlu0 %5696, %v113
    %v5698 = vpop.permute.xlu0 %5697
    %5701 = vset.pattern.permute.xlu0 32
    %5702 = vperm.xlu0 %5701, %v114
    %v5703 = vpop.permute.xlu0 %5702
    %5706 = vset.pattern.permute.xlu0 32
    %5707 = vperm.xlu0 %5706, %v115
    %v5708 = vpop.permute.xlu0 %5707
    %5711 = vset.pattern.permute.xlu0 32
    %5712 = vperm.xlu0 %5711, %v116
    %v5713 = vpop.permute.xlu0 %5712
    %5716 = vset.pattern.permute.xlu0 32
    %5717 = vperm.xlu0 %5716, %v117
    %v5718 = vpop.permute.xlu0 %5717
    %5721 = vset.pattern.permute.xlu0 32
    %5722 = vperm.xlu0 %5721, %v118
    %v5723 = vpop.permute.xlu0 %5722
    %5726 = vset.pattern.permute.xlu0 32
    %5727 = vperm.xlu0 %5726, %v119
    %v5728 = vpop.permute.xlu0 %5727
    %5731 = vset.pattern.permute.xlu0 32
    %5732 = vperm.xlu0 %5731, %v120
    %v5733 = vpop.permute.xlu0 %5732
    %5736 = vset.pattern.permute.xlu0 32
    %5737 = vperm.xlu0 %5736, %v121
    %v5738 = vpop.permute.xlu0 %5737
    %5741 = vset.pattern.permute.xlu0 32
    %5742 = vperm.xlu0 %5741, %v122
    %v5743 = vpop.permute.xlu0 %5742
    %5746 = vset.pattern.permute.xlu0 32
    %5747 = vperm.xlu0 %5746, %v123
    %v5748 = vpop.permute.xlu0 %5747
    %5751 = vset.pattern.permute.xlu0 32
    %5752 = vperm.xlu0 %5751, %v124
    %v5753 = vpop.permute.xlu0 %5752
    %5756 = vset.pattern.permute.xlu0 32
    %5757 = vperm.xlu0 %5756, %v125
    %v5758 = vpop.permute.xlu0 %5757
    %5761 = vset.pattern.permute.xlu0 32
    %5762 = vperm.xlu0 %5761, %v126
    %v5763 = vpop.permute.xlu0 %5762
    %5766 = vset.pattern.permute.xlu0 32
    %5767 = vperm.xlu0 %5766, %v127
    %v5768 = vpop.permute.xlu0 %5767
    %5771 = vset.pattern.permute.xlu0 32
    %5772 = vperm.xlu0 %5771, %v128
    %v5773 = vpop.permute.xlu0 %5772
    %5776 = vset.pattern.permute.xlu0 32
    %5777 = vperm.xlu0 %5776, %v129
    %v5778 = vpop.permute.xlu0 %5777
    %vm5780 = vcmask 261120
    %v5781 = vsel %vm5780, %v64, 0
    %v5783 = vsel %vm5780, %v65, 0
    %v5785 = vsel %vm5780, %v66, 0
    %v5787 = vsel %vm5780, %v67, 0
    %v5789 = vsel %vm5780, %v68, 0
    %v5791 = vsel %vm5780, %v69, 0
    %v5793 = vsel %vm5780, %v70, 0
    %v5795 = vsel %vm5780, %v71, 0
    %v5797 = vsel %vm5780, %v72, 0
    %v5799 = vsel %vm5780, %v73, 0
    %v5801 = vsel %vm5780, %v74, 0
    %v5803 = vsel %vm5780, %v75, 0
    %v5805 = vsel %vm5780, %v76, 0
    %v5807 = vsel %vm5780, %v77, 0
    %v5809 = vsel %vm5780, %v78, 0
    %v5811 = vsel %vm5780, %v79, 0
    %v5813 = vsel %vm5780, %v80, 0
    %v5815 = vsel %vm5780, %v81, 0
    %v5817 = vsel %vm5780, %v82, 0
    %v5819 = vsel %vm5780, %v83, 0
    %v5821 = vsel %vm5780, %v84, 0
    %v5823 = vsel %vm5780, %v85, 0
    %v5825 = vsel %vm5780, %v86, 0
    %v5827 = vsel %vm5780, %v87, 0
    %v5829 = vsel %vm5780, %v88, 0
    %v5831 = vsel %vm5780, %v89, 0
    %v5833 = vsel %vm5780, %v90, 0
    %v5835 = vsel %vm5780, %v91, 0
    %v5837 = vsel %vm5780, %v92, 0
    %v5839 = vsel %vm5780, %v93, 0
    %v5841 = vsel %vm5780, %v94, 0
    %v5843 = vsel %vm5780, %v95, 0
    %v5845 = vsel %vm5780, %v96, 0
    %v5847 = vsel %vm5780, %v97, 0
    %v5849 = vsel %vm5780, %v98, 0
    %v5851 = vsel %vm5780, %v99, 0
    %v5853 = vsel %vm5780, %v100, 0
    %v5855 = vsel %vm5780, %v101, 0
    %v5857 = vsel %vm5780, %v102, 0
    %v5859 = vsel %vm5780, %v103, 0
    %v5861 = vsel %vm5780, %v104, 0
    %v5863 = vsel %vm5780, %v105, 0
    %v5865 = vsel %vm5780, %v106, 0
    %v5867 = vsel %vm5780, %v107, 0
    %v5869 = vsel %vm5780, %v108, 0
    %v5871 = vsel %vm5780, %v109, 0
    %v5873 = vsel %vm5780, %v110, 0
    %v5875 = vsel %vm5780, %v111, 0
    %v5877 = vsel %vm5780, %v112, 0
    %v5879 = vsel %vm5780, %v113, 0
    %v5881 = vsel %vm5780, %v114, 0
    %v5883 = vsel %vm5780, %v115, 0
    %v5885 = vsel %vm5780, %v116, 0
    %v5887 = vsel %vm5780, %v117, 0
    %v5889 = vsel %vm5780, %v118, 0
    %v5891 = vsel %vm5780, %v119, 0
    %v5893 = vsel %vm5780, %v120, 0
    %v5895 = vsel %vm5780, %v121, 0
    %v5897 = vsel %vm5780, %v122, 0
    %v5899 = vsel %vm5780, %v123, 0
    %v5901 = vsel %vm5780, %v124, 0
    %v5903 = vsel %vm5780, %v125, 0
    %v5905 = vsel %vm5780, %v126, 0
    %v5907 = vsel %vm5780, %v127, 0
    %v5909 = vsel %vm5780, %v128, 0
    %v5911 = vsel %vm5780, %v129, 0
    %5913 = vmatpush.msra.mxu0 0.0
    %5914 = vmatpush.msra.mxu0 0.0
    %5915 = vmatpush.msra.mxu0 0.0
    %5916 = vmatpush.msra.mxu0 0.0
    %5917 = vmatpush.msra.mxu0 0.0
    %5918 = vmatpush.msra.mxu0 0.0
    %5919 = vmatpush.msra.mxu0 0.0
    %5920 = vmatpush.msra.mxu0 0.0
    %5921 = vmatpush.msra.mxu0 0.0
    %5922 = vmatpush.msra.mxu0 0.0
    %5923 = vmatpush.msra.mxu0 0.0
    %5924 = vmatpush.msra.mxu0 0.0
    %5925 = vmatpush.msra.mxu0 %v5448
    %5926 = vmatpush.msra.mxu0 %v5445
    %5927 = vmatpush.msra.mxu0 %v5442
    %5928 = vmatpush.msra.mxu0 %v5439
    %5929 = vmatmul.f32.gmra.mxu0 %v5781
    %v5930 = vpop.f32.mrf.mxu0
    %v5931 = vadd.f32 %v5453, %v5930
    %5932 = vmatmul.f32.gmra.mxu0 %v5783
    %v5933 = vpop.f32.mrf.mxu0
    %v5934 = vadd.f32 %v5458, %v5933
    %5935 = vmatmul.f32.gmra.mxu0 %v5785
    %v5936 = vpop.f32.mrf.mxu0
    %v5937 = vadd.f32 %v5463, %v5936
    %5938 = vmatmul.f32.gmra.mxu0 %v5787
    %v5939 = vpop.f32.mrf.mxu0
    %v5940 = vadd.f32 %v5468, %v5939
    %5941 = vmatmul.f32.gmra.mxu0 %v5789
    %v5942 = vpop.f32.mrf.mxu0
    %v5943 = vadd.f32 %v5473, %v5942
    %5944 = vmatmul.f32.gmra.mxu0 %v5791
    %v5945 = vpop.f32.mrf.mxu0
    %v5946 = vadd.f32 %v5478, %v5945
    %5947 = vmatmul.f32.gmra.mxu0 %v5793
    %v5948 = vpop.f32.mrf.mxu0
    %v5949 = vadd.f32 %v5483, %v5948
    %5950 = vmatmul.f32.gmra.mxu0 %v5795
    %v5951 = vpop.f32.mrf.mxu0
    %v5952 = vadd.f32 %v5488, %v5951
    %5953 = vmatmul.f32.gmra.mxu0 %v5797
    %v5954 = vpop.f32.mrf.mxu0
    %v5955 = vadd.f32 %v5493, %v5954
    %5956 = vmatmul.f32.gmra.mxu0 %v5799
    %v5957 = vpop.f32.mrf.mxu0
    %v5958 = vadd.f32 %v5498, %v5957
    %5959 = vmatmul.f32.gmra.mxu0 %v5801
    %v5960 = vpop.f32.mrf.mxu0
    %v5961 = vadd.f32 %v5503, %v5960
    %5962 = vmatmul.f32.gmra.mxu0 %v5803
    %v5963 = vpop.f32.mrf.mxu0
    %v5964 = vadd.f32 %v5508, %v5963
    %5965 = vmatmul.f32.gmra.mxu0 %v5805
    %v5966 = vpop.f32.mrf.mxu0
    %v5967 = vadd.f32 %v5513, %v5966
    %5968 = vmatmul.f32.gmra.mxu0 %v5807
    %v5969 = vpop.f32.mrf.mxu0
    %v5970 = vadd.f32 %v5518, %v5969
    %5971 = vmatmul.f32.gmra.mxu0 %v5809
    %v5972 = vpop.f32.mrf.mxu0
    %v5973 = vadd.f32 %v5523, %v5972
    %5974 = vmatmul.f32.gmra.mxu0 %v5811
    %v5975 = vpop.f32.mrf.mxu0
    %v5976 = vadd.f32 %v5528, %v5975
    %5977 = vmatmul.f32.gmra.mxu0 %v5813
    %v5978 = vpop.f32.mrf.mxu0
    %v5979 = vadd.f32 %v5533, %v5978
    %5980 = vmatmul.f32.gmra.mxu0 %v5815
    %v5981 = vpop.f32.mrf.mxu0
    %v5982 = vadd.f32 %v5538, %v5981
    %5983 = vmatmul.f32.gmra.mxu0 %v5817
    %v5984 = vpop.f32.mrf.mxu0
    %v5985 = vadd.f32 %v5543, %v5984
    %5986 = vmatmul.f32.gmra.mxu0 %v5819
    %v5987 = vpop.f32.mrf.mxu0
    %v5988 = vadd.f32 %v5548, %v5987
    %5989 = vmatmul.f32.gmra.mxu0 %v5821
    %v5990 = vpop.f32.mrf.mxu0
    %v5991 = vadd.f32 %v5553, %v5990
    %5992 = vmatmul.f32.gmra.mxu0 %v5823
    %v5993 = vpop.f32.mrf.mxu0
    %v5994 = vadd.f32 %v5558, %v5993
    %5995 = vmatmul.f32.gmra.mxu0 %v5825
    %v5996 = vpop.f32.mrf.mxu0
    %v5997 = vadd.f32 %v5563, %v5996
    %5998 = vmatmul.f32.gmra.mxu0 %v5827
    %v5999 = vpop.f32.mrf.mxu0
    %v6000 = vadd.f32 %v5568, %v5999
    %6001 = vmatmul.f32.gmra.mxu0 %v5829
    %v6002 = vpop.f32.mrf.mxu0
    %v6003 = vadd.f32 %v5573, %v6002
    %6004 = vmatmul.f32.gmra.mxu0 %v5831
    %v6005 = vpop.f32.mrf.mxu0
    %v6006 = vadd.f32 %v5578, %v6005
    %6007 = vmatmul.f32.gmra.mxu0 %v5833
    %v6008 = vpop.f32.mrf.mxu0
    %v6009 = vadd.f32 %v5583, %v6008
    %6010 = vmatmul.f32.gmra.mxu0 %v5835
    %v6011 = vpop.f32.mrf.mxu0
    %v6012 = vadd.f32 %v5588, %v6011
    %6013 = vmatmul.f32.gmra.mxu0 %v5837
    %v6014 = vpop.f32.mrf.mxu0
    %v6015 = vadd.f32 %v5593, %v6014
    %6016 = vmatmul.f32.gmra.mxu0 %v5839
    %v6017 = vpop.f32.mrf.mxu0
    %v6018 = vadd.f32 %v5598, %v6017
    %6019 = vmatmul.f32.gmra.mxu0 %v5841
    %v6020 = vpop.f32.mrf.mxu0
    %v6021 = vadd.f32 %v5603, %v6020
    %6022 = vmatmul.f32.gmra.mxu0 %v5843
    %v6023 = vpop.f32.mrf.mxu0
    %v6024 = vadd.f32 %v5608, %v6023
    %6025 = vmatmul.f32.gmra.mxu0 %v5845
    %v6026 = vpop.f32.mrf.mxu0
    %v6027 = vadd.f32 %v5613, %v6026
    %6028 = vmatmul.f32.gmra.mxu0 %v5847
    %v6029 = vpop.f32.mrf.mxu0
    %v6030 = vadd.f32 %v5618, %v6029
    %6031 = vmatmul.f32.gmra.mxu0 %v5849
    %v6032 = vpop.f32.mrf.mxu0
    %v6033 = vadd.f32 %v5623, %v6032
    %6034 = vmatmul.f32.gmra.mxu0 %v5851
    %v6035 = vpop.f32.mrf.mxu0
    %v6036 = vadd.f32 %v5628, %v6035
    %6037 = vmatmul.f32.gmra.mxu0 %v5853
    %v6038 = vpop.f32.mrf.mxu0
    %v6039 = vadd.f32 %v5633, %v6038
    %6040 = vmatmul.f32.gmra.mxu0 %v5855
    %v6041 = vpop.f32.mrf.mxu0
    %v6042 = vadd.f32 %v5638, %v6041
    %6043 = vmatmul.f32.gmra.mxu0 %v5857
    %v6044 = vpop.f32.mrf.mxu0
    %v6045 = vadd.f32 %v5643, %v6044
    %6046 = vmatmul.f32.gmra.mxu0 %v5859
    %v6047 = vpop.f32.mrf.mxu0
    %v6048 = vadd.f32 %v5648, %v6047
    %6049 = vmatmul.f32.gmra.mxu0 %v5861
    %v6050 = vpop.f32.mrf.mxu0
    %v6051 = vadd.f32 %v5653, %v6050
    %6052 = vmatmul.f32.gmra.mxu0 %v5863
    %v6053 = vpop.f32.mrf.mxu0
    %v6054 = vadd.f32 %v5658, %v6053
    %6055 = vmatmul.f32.gmra.mxu0 %v5865
    %v6056 = vpop.f32.mrf.mxu0
    %v6057 = vadd.f32 %v5663, %v6056
    %6058 = vmatmul.f32.gmra.mxu0 %v5867
    %v6059 = vpop.f32.mrf.mxu0
    %v6060 = vadd.f32 %v5668, %v6059
    %6061 = vmatmul.f32.gmra.mxu0 %v5869
    %v6062 = vpop.f32.mrf.mxu0
    %v6063 = vadd.f32 %v5673, %v6062
    %6064 = vmatmul.f32.gmra.mxu0 %v5871
    %v6065 = vpop.f32.mrf.mxu0
    %v6066 = vadd.f32 %v5678, %v6065
    %6067 = vmatmul.f32.gmra.mxu0 %v5873
    %v6068 = vpop.f32.mrf.mxu0
    %v6069 = vadd.f32 %v5683, %v6068
    %6070 = vmatmul.f32.gmra.mxu0 %v5875
    %v6071 = vpop.f32.mrf.mxu0
    %v6072 = vadd.f32 %v5688, %v6071
    %6073 = vmatmul.f32.gmra.mxu0 %v5877
    %v6074 = vpop.f32.mrf.mxu0
    %v6075 = vadd.f32 %v5693, %v6074
    %6076 = vmatmul.f32.gmra.mxu0 %v5879
    %v6077 = vpop.f32.mrf.mxu0
    %v6078 = vadd.f32 %v5698, %v6077
    %6079 = vmatmul.f32.gmra.mxu0 %v5881
    %v6080 = vpop.f32.mrf.mxu0
    %v6081 = vadd.f32 %v5703, %v6080
    %6082 = vmatmul.f32.gmra.mxu0 %v5883
    %v6083 = vpop.f32.mrf.mxu0
    %v6084 = vadd.f32 %v5708, %v6083
    %6085 = vmatmul.f32.gmra.mxu0 %v5885
    %v6086 = vpop.f32.mrf.mxu0
    %v6087 = vadd.f32 %v5713, %v6086
    %6088 = vmatmul.f32.gmra.mxu0 %v5887
    %v6089 = vpop.f32.mrf.mxu0
    %v6090 = vadd.f32 %v5718, %v6089
    %6091 = vmatmul.f32.gmra.mxu0 %v5889
    %v6092 = vpop.f32.mrf.mxu0
    %v6093 = vadd.f32 %v5723, %v6092
    %6094 = vmatmul.f32.gmra.mxu0 %v5891
    %v6095 = vpop.f32.mrf.mxu0
    %v6096 = vadd.f32 %v5728, %v6095
    %6097 = vmatmul.f32.gmra.mxu0 %v5893
    %v6098 = vpop.f32.mrf.mxu0
    %v6099 = vadd.f32 %v5733, %v6098
    %6100 = vmatmul.f32.gmra.mxu0 %v5895
    %v6101 = vpop.f32.mrf.mxu0
    %v6102 = vadd.f32 %v5738, %v6101
    %6103 = vmatmul.f32.gmra.mxu0 %v5897
    %v6104 = vpop.f32.mrf.mxu0
    %v6105 = vadd.f32 %v5743, %v6104
    %6106 = vmatmul.f32.gmra.mxu0 %v5899
    %v6107 = vpop.f32.mrf.mxu0
    %v6108 = vadd.f32 %v5748, %v6107
    %6109 = vmatmul.f32.gmra.mxu0 %v5901
    %v6110 = vpop.f32.mrf.mxu0
    %v6111 = vadd.f32 %v5753, %v6110
    %6112 = vmatmul.f32.gmra.mxu0 %v5903
    %v6113 = vpop.f32.mrf.mxu0
    %v6114 = vadd.f32 %v5758, %v6113
    %6115 = vmatmul.f32.gmra.mxu0 %v5905
    %v6116 = vpop.f32.mrf.mxu0
    %v6117 = vadd.f32 %v5763, %v6116
    %6118 = vmatmul.f32.gmra.mxu0 %v5907
    %v6119 = vpop.f32.mrf.mxu0
    %v6120 = vadd.f32 %v5768, %v6119
    %6121 = vmatmul.f32.gmra.mxu0 %v5909
    %v6122 = vpop.f32.mrf.mxu0
    %v6123 = vadd.f32 %v5773, %v6122
    %6124 = vmatmul.f32.gmra.mxu0 %v5911
    %v6125 = vpop.f32.mrf.mxu0
    %v6126 = vadd.f32 %v5778, %v6125
    %6127 = vdwg.mxu0
    %v6128 = vmul.f32 %v5931, %v6027
    %v6129 = vmul.f32 %v5934, %v6030
    %v6130 = vmul.f32 %v5937, %v6033
    %v6131 = vmul.f32 %v5940, %v6036
    %v6132 = vmul.f32 %v5943, %v6039
    %v6133 = vmul.f32 %v5946, %v6042
    %v6134 = vmul.f32 %v5949, %v6045
    %v6135 = vmul.f32 %v5952, %v6048
    %v6136 = vmul.f32 %v5955, %v6051
    %v6137 = vmul.f32 %v5958, %v6054
    %v6138 = vmul.f32 %v5961, %v6057
    %v6139 = vmul.f32 %v5964, %v6060
    %v6140 = vmul.f32 %v5967, %v6063
    %v6141 = vmul.f32 %v5970, %v6066
    %v6142 = vmul.f32 %v5973, %v6069
    %v6143 = vmul.f32 %v5976, %v6072
    %v6144 = vmul.f32 %v5979, %v6075
    %v6145 = vmul.f32 %v5982, %v6078
    %v6146 = vmul.f32 %v5985, %v6081
    %v6147 = vmul.f32 %v5988, %v6084
    %v6148 = vmul.f32 %v5991, %v6087
    %v6149 = vmul.f32 %v5994, %v6090
    %v6150 = vmul.f32 %v5997, %v6093
    %v6151 = vmul.f32 %v6000, %v6096
    %v6152 = vmul.f32 %v6003, %v6099
    %v6153 = vmul.f32 %v6006, %v6102
    %v6154 = vmul.f32 %v6009, %v6105
    %v6155 = vmul.f32 %v6012, %v6108
    %v6156 = vmul.f32 %v6015, %v6111
    %v6157 = vmul.f32 %v6018, %v6114
    %v6158 = vmul.f32 %v6021, %v6117
    %v6159 = vmul.f32 %v6024, %v6120
    %6160 = vmatpush.msra.mxu0 %v6143
    %6161 = vmatpush.msra.mxu0 %v6142
    %6162 = vmatpush.msra.mxu0 %v6141
    %6163 = vmatpush.msra.mxu0 %v6140
    %6164 = vmatpush.msra.mxu0 %v6139
    %6165 = vmatpush.msra.mxu0 %v6138
    %6166 = vmatpush.msra.mxu0 %v6137
    %6167 = vmatpush.msra.mxu0 %v6136
    %6168 = vmatpush.msra.mxu0 %v6135
    %6169 = vmatpush.msra.mxu0 %v6134
    %6170 = vmatpush.msra.mxu0 %v6133
    %6171 = vmatpush.msra.mxu0 %v6132
    %6172 = vmatpush.msra.mxu0 %v6131
    %6173 = vmatpush.msra.mxu0 %v6130
    %6174 = vmatpush.msra.mxu0 %v6129
    %6175 = vmatpush.msra.mxu0 %v6128
    %6176 = vmatmul.f32.gmra.mxu0 %v56
    %v6177 = vpop.f32.mrf.mxu0
    %v6178 = vadd.f32 0.0, %v6177
    %6179 = vmatmul.f32.gmra.mxu0 %v58
    %v6180 = vpop.f32.mrf.mxu0
    %v6181 = vadd.f32 0.0, %v6180
    %6182 = vmatmul.f32.gmra.mxu0 %v60
    %v6183 = vpop.f32.mrf.mxu0
    %v6184 = vadd.f32 0.0, %v6183
    %6185 = vmatmul.f32.gmra.mxu0 %v62
    %v6186 = vpop.f32.mrf.mxu0
    %v6187 = vadd.f32 0.0, %v6186
    %6188 = vdwg.mxu0
    %6189 = vmatpush.msra.mxu0 %v6159
    %6190 = vmatpush.msra.mxu0 %v6158
    %6191 = vmatpush.msra.mxu0 %v6157
    %6192 = vmatpush.msra.mxu0 %v6156
    %6193 = vmatpush.msra.mxu0 %v6155
    %6194 = vmatpush.msra.mxu0 %v6154
    %6195 = vmatpush.msra.mxu0 %v6153
    %6196 = vmatpush.msra.mxu0 %v6152
    %6197 = vmatpush.msra.mxu0 %v6151
    %6198 = vmatpush.msra.mxu0 %v6150
    %6199 = vmatpush.msra.mxu0 %v6149
    %6200 = vmatpush.msra.mxu0 %v6148
    %6201 = vmatpush.msra.mxu0 %v6147
    %6202 = vmatpush.msra.mxu0 %v6146
    %6203 = vmatpush.msra.mxu0 %v6145
    %6204 = vmatpush.msra.mxu0 %v6144
    %6205 = vmatmul.f32.gmra.mxu0 %v57
    %v6206 = vpop.f32.mrf.mxu0
    %v6207 = vadd.f32 %v6178, %v6206
    %6208 = vmatmul.f32.gmra.mxu0 %v59
    %v6209 = vpop.f32.mrf.mxu0
    %v6210 = vadd.f32 %v6181, %v6209
    %6211 = vmatmul.f32.gmra.mxu0 %v61
    %v6212 = vpop.f32.mrf.mxu0
    %v6213 = vadd.f32 %v6184, %v6212
    %6214 = vmatmul.f32.gmra.mxu0 %v63
    %v6215 = vpop.f32.mrf.mxu0
    %v6216 = vadd.f32 %v6187, %v6215
    %6217 = vdwg.mxu0
    %v6218 = vsel %vm243, %v6207, -inf
    %v6219 = vrot.slane %v6218, 4
    %v6220 = vmax.f32 %v6218, %v6219
    %v6221 = vrot.slane %v6220, 2
    %v6222 = vmax.f32 %v6220, %v6221
    %v6223 = vrot.slane %v6222, 1
    %v6224 = vmax.f32 %v6222, %v6223
    %v6225 = vsub.f32 %v6207, %v6224
    %v6226 = vmul.f32 %v6225, 1.442695
    %v6227 = vpow.pop %v6226
    %v6228 = vsel %vm243, %v6227, 0.0
    %v6229 = vrot.slane %v6228, 4
    %v6230 = vadd.f32 %v6228, %v6229
    %v6231 = vrot.slane %v6230, 2
    %v6232 = vadd.f32 %v6230, %v6231
    %v6233 = vrot.slane %v6232, 1
    %v6234 = vadd.f32 %v6232, %v6233
    %v6235 = vmul.f32 %v6227, %v6123
    %v6236 = vsel %vm243, %v6235, 0.0
    %v6237 = vrot.slane %v6236, 4
    %v6238 = vadd.f32 %v6236, %v6237
    %v6239 = vrot.slane %v6238, 2
    %v6240 = vadd.f32 %v6238, %v6239
    %v6241 = vrot.slane %v6240, 1
    %v6242 = vadd.f32 %v6240, %v6241
    %v6243 = vrcp.pop %v6234
    %v6244 = vmul.f32 %v6234, %v6243
    %v6245 = vsub.f32 1.0, %v6244
    %v6246 = vmul.f32 %v6243, %v6245
    %v6247 = vadd.f32 %v6243, %v6246
    %vm6248 = vweird.f32 %v6234
    %vm6249 = vweird.f32 %v6243
    %vm6250 = vmor %vm6248, %vm6249
    %v6251 = vsel %vm6250, %v6243, %v6247
    %v6252 = vand.u32 2147483647, %v6234
    %vm6253 = vcmp.eq.f32.partialorder %v6252, 8.507059e+37
    %v6254 = vand.u32 %v6234, 2147483648
    %v6255 = vor.u32 1.1754944e-38, %v6254
    %v6256 = vsel %vm6253, %v6255, %v6251
    %v6257 = vmul.f32 %v6242, %v6256
    %v6258 = vadd.f32 %v6257, 0.0
    %v6259 = vsel %vm243, %v6210, -inf
    %v6260 = vrot.slane %v6259, 4
    %v6261 = vmax.f32 %v6259, %v6260
    %v6262 = vrot.slane %v6261, 2
    %v6263 = vmax.f32 %v6261, %v6262
    %v6264 = vrot.slane %v6263, 1
    %v6265 = vmax.f32 %v6263, %v6264
    %v6266 = vsub.f32 %v6210, %v6265
    %v6267 = vmul.f32 %v6266, 1.442695
    %v6268 = vpow.pop %v6267
    %v6269 = vsel %vm243, %v6268, 0.0
    %v6270 = vrot.slane %v6269, 4
    %v6271 = vadd.f32 %v6269, %v6270
    %v6272 = vrot.slane %v6271, 2
    %v6273 = vadd.f32 %v6271, %v6272
    %v6274 = vrot.slane %v6273, 1
    %v6275 = vadd.f32 %v6273, %v6274
    %v6276 = vmul.f32 %v6268, %v6123
    %v6277 = vsel %vm243, %v6276, 0.0
    %v6278 = vrot.slane %v6277, 4
    %v6279 = vadd.f32 %v6277, %v6278
    %v6280 = vrot.slane %v6279, 2
    %v6281 = vadd.f32 %v6279, %v6280
    %v6282 = vrot.slane %v6281, 1
    %v6283 = vadd.f32 %v6281, %v6282
    %v6284 = vrcp.pop %v6275
    %v6285 = vmul.f32 %v6275, %v6284
    %v6286 = vsub.f32 1.0, %v6285
    %v6287 = vmul.f32 %v6284, %v6286
    %v6288 = vadd.f32 %v6284, %v6287
    %vm6289 = vweird.f32 %v6275
    %vm6290 = vweird.f32 %v6284
    %vm6291 = vmor %vm6289, %vm6290
    %v6292 = vsel %vm6291, %v6284, %v6288
    %v6293 = vand.u32 2147483647, %v6275
    %vm6294 = vcmp.eq.f32.partialorder %v6293, 8.507059e+37
    %v6295 = vand.u32 %v6275, 2147483648
    %v6296 = vor.u32 1.1754944e-38, %v6295
    %v6297 = vsel %vm6294, %v6296, %v6292
    %v6298 = vmul.f32 %v6283, %v6297
    %v6299 = vadd.f32 %v6258, %v6298
    %v6300 = vsel %vm243, %v6213, -inf
    %v6301 = vrot.slane %v6300, 4
    %v6302 = vmax.f32 %v6300, %v6301
    %v6303 = vrot.slane %v6302, 2
    %v6304 = vmax.f32 %v6302, %v6303
    %v6305 = vrot.slane %v6304, 1
    %v6306 = vmax.f32 %v6304, %v6305
    %v6307 = vsub.f32 %v6213, %v6306
    %v6308 = vmul.f32 %v6307, 1.442695
    %v6309 = vpow.pop %v6308
    %v6310 = vsel %vm243, %v6309, 0.0
    %v6311 = vrot.slane %v6310, 4
    %v6312 = vadd.f32 %v6310, %v6311
    %v6313 = vrot.slane %v6312, 2
    %v6314 = vadd.f32 %v6312, %v6313
    %v6315 = vrot.slane %v6314, 1
    %v6316 = vadd.f32 %v6314, %v6315
    %v6317 = vmul.f32 %v6309, %v6123
    %v6318 = vsel %vm243, %v6317, 0.0
    %v6319 = vrot.slane %v6318, 4
    %v6320 = vadd.f32 %v6318, %v6319
    %v6321 = vrot.slane %v6320, 2
    %v6322 = vadd.f32 %v6320, %v6321
    %v6323 = vrot.slane %v6322, 1
    %v6324 = vadd.f32 %v6322, %v6323
    %v6325 = vrcp.pop %v6316
    %v6326 = vmul.f32 %v6316, %v6325
    %v6327 = vsub.f32 1.0, %v6326
    %v6328 = vmul.f32 %v6325, %v6327
    %v6329 = vadd.f32 %v6325, %v6328
    %vm6330 = vweird.f32 %v6316
    %vm6331 = vweird.f32 %v6325
    %vm6332 = vmor %vm6330, %vm6331
    %v6333 = vsel %vm6332, %v6325, %v6329
    %v6334 = vand.u32 2147483647, %v6316
    %vm6335 = vcmp.eq.f32.partialorder %v6334, 8.507059e+37
    %v6336 = vand.u32 %v6316, 2147483648
    %v6337 = vor.u32 1.1754944e-38, %v6336
    %v6338 = vsel %vm6335, %v6337, %v6333
    %v6339 = vmul.f32 %v6324, %v6338
    %v6340 = vadd.f32 %v6299, %v6339
    %v6341 = vsel %vm243, %v6216, -inf
    %v6342 = vrot.slane %v6341, 4
    %v6343 = vmax.f32 %v6341, %v6342
    %v6344 = vrot.slane %v6343, 2
    %v6345 = vmax.f32 %v6343, %v6344
    %v6346 = vrot.slane %v6345, 1
    %v6347 = vmax.f32 %v6345, %v6346
    %v6348 = vsub.f32 %v6216, %v6347
    %v6349 = vmul.f32 %v6348, 1.442695
    %v6350 = vpow.pop %v6349
    %v6351 = vsel %vm243, %v6350, 0.0
    %v6352 = vrot.slane %v6351, 4
    %v6353 = vadd.f32 %v6351, %v6352
    %v6354 = vrot.slane %v6353, 2
    %v6355 = vadd.f32 %v6353, %v6354
    %v6356 = vrot.slane %v6355, 1
    %v6357 = vadd.f32 %v6355, %v6356
    %v6358 = vmul.f32 %v6350, %v6123
    %v6359 = vsel %vm243, %v6358, 0.0
    %v6360 = vrot.slane %v6359, 4
    %v6361 = vadd.f32 %v6359, %v6360
    %v6362 = vrot.slane %v6361, 2
    %v6363 = vadd.f32 %v6361, %v6362
    %v6364 = vrot.slane %v6363, 1
    %v6365 = vadd.f32 %v6363, %v6364
    %v6366 = vrcp.pop %v6357
    %v6367 = vmul.f32 %v6357, %v6366
    %v6368 = vsub.f32 1.0, %v6367
    %v6369 = vmul.f32 %v6366, %v6368
    %v6370 = vadd.f32 %v6366, %v6369
    %vm6371 = vweird.f32 %v6357
    %vm6372 = vweird.f32 %v6366
    %vm6373 = vmor %vm6371, %vm6372
    %v6374 = vsel %vm6373, %v6366, %v6370
    %v6375 = vand.u32 2147483647, %v6357
    %vm6376 = vcmp.eq.f32.partialorder %v6375, 8.507059e+37
    %v6377 = vand.u32 %v6357, 2147483648
    %v6378 = vor.u32 1.1754944e-38, %v6377
    %v6379 = vsel %vm6376, %v6378, %v6374
    %v6380 = vmul.f32 %v6365, %v6379
    %v6381 = vadd.f32 %v6340, %v6380
    %v6382 = vmul.f32 %v6381, 0.25
    %v6383 = vadd.f32 %v6382, %v6126
    %vm6384 = vcmp.ge.f32.partialorder %v6383, 0.0
    %v6385 = vmul.f32 %v6383, 0.01
    %v6386 = vsel %vm6384, %v6383, %v6385
    %6387 = vst [vmem:[#allocation2] sm:$0x1] %v6386
    // Predicated region
    $region14: #{tpu_custom_call.1} parent=1 // pred_check
      _
    $region15: #{tpu_custom_call.1} parent=1 // pred_check_branch
      %6389 = sbr.rel (0) target = $region17
    $region16: #{tpu_custom_call.1} parent=1 // pred_region
      %6391 = vsyncadd [#allocation3], 0
      %s6393 = sshll.u32 [#allocation2], 4
      %s6394 = int_to_ptr.vmem [resolvable:$true] %s6393
      %s6395 = sshll.u32 %s3, 4
      %s6396 = int_to_ptr.hbm [resolvable:$true] %s6395
      %6398 = dma.vmem_to_hbm [thread:$0]  %s6394, 16, %s6396, [#allocation3]
    $region17: #{tpu_custom_call.1} parent=1 // pred_fallthru
      _
    // Predicated region
    $region18: #{tpu_custom_call.1} parent=1 // pred_check
      _
    $region19: #{tpu_custom_call.1} parent=1 // pred_check_branch
      %6400 = sbr.rel (0) target = $region21
    $region20: #{tpu_custom_call.1} parent=1 // pred_region
      %6402 = dma.done [#allocation3], 16
    $region21: #{tpu_custom_call.1} parent=1 // pred_fallthru
      _
    %6403 = vsyncpa [#allocation3], 1

</llo_original>
